<compile_context>
chip_gen: v7x
topology: tpu7x:2x2x1
jax: 0.10.0
libtpu: 0.0.40
codegen_flags: <defaults>
</compile_context>

<pallas_src>
import functools

import jax
import jax.numpy as jnp
from jax import lax
from jax.experimental import pallas as pl
from jax.experimental.pallas import tpu as pltpu


# Geometry forced by the module (fc1 takes 320 = 20*4*4 inputs -> 28x28x1 in).
_H = 28           # input spatial size, rows per sample in the 2-D layout
_K = 5            # conv kernel size
_C1, _C2 = 10, 20
_L1 = _C1 * 24    # 240 lanes after conv1 (lane = oc*24 + ow)
_L2 = _C2 * 8     # 160 lanes after conv2 (lane = oc*8  + ow)


# ----------------------------- in-kernel helpers -----------------------------

def _dot(a, b):
    return jnp.dot(a, b, preferred_element_type=jnp.float32)


def _row_shift(m, k):
    """(m, m) 0/1 matrix R with (R @ v)[r, :] = v[r + k, :] (0 past the end)."""
    r = lax.broadcasted_iota(jnp.int32, (m, m), 0)
    c = lax.broadcasted_iota(jnp.int32, (m, m), 1)
    return (c == r + k).astype(jnp.float32)


def _lane_shift(n):
    """(n, n) 0/1 matrix L with (v @ L)[:, l] = v[:, l + 1] (0 past the end)."""
    r = lax.broadcasted_iota(jnp.int32, (n, n), 0)
    c = lax.broadcasted_iota(jnp.int32, (n, n), 1)
    return (r == c + 1).astype(jnp.float32)


# --------------------------------- the kernel --------------------------------

def _vanilla_kernel(x_ref, t1_ref, b1_ref, t2_ref, b2_ref,
                    wf1_ref, bf1_ref, wf2_ref, bf2_ref, o_ref, *, b):
    m = b * _H                                   # 28 rows per sample
    x = x_ref[...]                               # (m, 28)

    # ---- conv1 + bias: 5 Toeplitz matmuls (one per kernel-row offset) ----
    # valid rows: s*28 + oh (oh < 24); lanes: oc*24 + ow (ow < 24)
    c1 = _dot(x, t1_ref[0])
    for kh in range(1, _K):
        c1 = c1 + _dot(_dot(_row_shift(m, kh), x), t1_ref[kh])
    c1 = c1 + b1_ref[...]

    # ---- 2x2 max-pool + ReLU (valid at even rows / even lanes) ----
    p1 = jnp.maximum(c1, _dot(_row_shift(m, 1), c1))
    p1 = jnp.maximum(p1, _dot(p1, _lane_shift(_L1)))
    p1 = jnp.maximum(p1, 0.0)

    # ---- conv2 + bias ----
    # TODO(synk): Dropout2d(conv2) / F.dropout(fc1) are identity in eval mode;
    #             training-mode RNG dropout is not implemented.
    # valid rows: s*28 + 2*oh2 (oh2 < 8); lanes: oc*8 + ow2 (ow2 < 8)
    c2 = _dot(p1, t2_ref[0])
    for kh in range(1, _K):
        c2 = c2 + _dot(_dot(_row_shift(m, 2 * kh), p1), t2_ref[kh])
    c2 = c2 + b2_ref[...]

    # ---- 2x2 max-pool + ReLU (valid rows s*28 + 4*h, lanes oc*8 + 2*w) ----
    p2 = jnp.maximum(c2, _dot(_row_shift(m, 2), c2))
    p2 = jnp.maximum(p2, _dot(p2, _lane_shift(_L2)))
    p2 = jnp.maximum(p2, 0.0)

    # ---- fc1 + ReLU: gather each sample's 4 valid rows via selection matmuls
    si = lax.broadcasted_iota(jnp.int32, (b, m), 0)
    sj = lax.broadcasted_iota(jnp.int32, (b, m), 1)
    h1 = jnp.zeros((b, 50), jnp.float32)
    for h in range(4):
        sel = (sj == si * _H + 4 * h).astype(jnp.float32)   # picks row s*28+4h
        h1 = h1 + _dot(_dot(sel, p2), wf1_ref[h])
    h1 = jnp.maximum(h1 + bf1_ref[...], 0.0)

    # ---- fc2 + ReLU (the reference module applies ReLU to fc2 as well) ----
    z = jnp.maximum(_dot(h1, wf2_ref[...]) + bf2_ref[...], 0.0)

    # ---- log_softmax (stable) ----
    zmax = jnp.max(z, axis=-1, keepdims=True)
    lse = jnp.log(jnp.sum(jnp.exp(z - zmax), axis=-1, keepdims=True))
    o_ref[...] = (z - zmax - lse).astype(o_ref.dtype)


# ------------------------- weight layout preprocessing ------------------------

def prepare_params(params):
    """Re-lay the PyTorch-convention weights into the kernel's MXU layouts."""
    w1 = params["conv1_w"].astype(jnp.float32)      # (10, 1, 5, 5)
    b1 = params["conv1_b"].astype(jnp.float32)
    w2 = params["conv2_w"].astype(jnp.float32)      # (20, 10, 5, 5)
    b2 = params["conv2_b"].astype(jnp.float32)
    f1 = params["fc1_w"].astype(jnp.float32)        # (50, 320)
    g1 = params["fc1_b"].astype(jnp.float32)
    f2 = params["fc2_w"].astype(jnp.float32)        # (10, 50)
    g2 = params["fc2_b"].astype(jnp.float32)

    # conv1 Toeplitz: t1[kh, iw, oc*24+ow] = w1[oc, 0, kh, iw-ow] (0 <= iw-ow < 5)
    iw = jnp.arange(28)[:, None]
    ow = jnp.arange(24)[None, :]
    kw = iw - ow
    v1 = (kw >= 0) & (kw < _K)
    w1k = jnp.transpose(w1[:, 0], (1, 0, 2))        # (kh, oc, kw)
    t1 = w1k[:, :, jnp.clip(kw, 0, _K - 1)]         # (5, 10, 28, 24)
    t1 = jnp.where(v1[None, None], t1, 0.0)
    t1 = jnp.transpose(t1, (0, 2, 1, 3)).reshape(_K, 28, _L1)
    b1t = jnp.repeat(b1, 24).reshape(1, _L1)

    # conv2 Toeplitz: t2[kh, ic*24+2*iw1, oc*8+ow2] = w2[oc, ic, kh, iw1-ow2]
    # (rows at odd lane offsets are zero -> the pool-1 "garbage" lanes never count)
    iw1 = jnp.arange(12)[:, None]
    ow2 = jnp.arange(8)[None, :]
    kw2 = iw1 - ow2
    v2 = (kw2 >= 0) & (kw2 < _K)
    w2k = jnp.transpose(w2, (2, 1, 0, 3))           # (kh, ic, oc, kw)
    t2s = w2k[:, :, :, jnp.clip(kw2, 0, _K - 1)]    # (5, 10, 20, 12, 8)
    t2s = jnp.where(v2[None, None, None], t2s, 0.0)
    t2s = jnp.transpose(t2s, (0, 1, 3, 2, 4))       # (5, 10, 12, 20, 8)
    t2 = jnp.zeros((_K, _C1, 24, _C2, 8), jnp.float32).at[:, :, 0::2].set(t2s)
    t2 = t2.reshape(_K, _L1, _L2)
    b2t = jnp.repeat(b2, 8).reshape(1, _L2)

    # fc1 in the kernel's layout: wf1[h, oc*8 + 2*w, j] = fc1_w[j, oc*16 + h*4 + w]
    f1r = jnp.transpose(f1.reshape(50, _C2, 4, 4), (2, 1, 3, 0))   # (h, c, w, j)
    wf1 = jnp.zeros((4, _C2, 8, 50), jnp.float32).at[:, :, 0::2].set(f1r)
    wf1 = wf1.reshape(4, _L2, 50)
    bf1 = g1.reshape(1, 50)

    wf2 = f2.T                                      # (50, 10)
    bf2 = g2.reshape(1, 10)
    return t1, b1t, t2, b2t, wf1, bf1, wf2, bf2


# ----------------------------------- forward ---------------------------------

def vanilla_forward(params, x, *, batch_tile=8):
    """x: (N, 1, 28, 28) float32 -> (N, 10) log-probabilities."""
    n = x.shape[0]
    x = x.reshape(n, _H, _H).astype(jnp.float32)

    b = int(min(batch_tile, n))
    if b % 2:
        b += 1                                     # keep b*28 a multiple of 8
    pad = (-n) % b
    if pad:
        x = jnp.concatenate([x, jnp.zeros((pad, _H, _H), jnp.float32)], axis=0)
    n_pad = n + pad
    x2d = x.reshape(n_pad * _H, _H)                # row = sample*28 + image_row

    t1, b1t, t2, b2t, wf1, bf1, wf2, bf2 = prepare_params(params)

    out = pl.pallas_call(
        functools.partial(_vanilla_kernel, b=b),
        grid=(n_pad // b,),
        in_specs=[
            pl.BlockSpec((b * _H, _H), lambda i: (i, 0)),        # image batch tile
            pl.BlockSpec((_K, _H, _L1), lambda i: (0, 0, 0)),    # conv1 Toeplitz
            pl.BlockSpec((1, _L1), lambda i: (0, 0)),
            pl.BlockSpec((_K, _L1, _L2), lambda i: (0, 0, 0)),   # conv2 Toeplitz
            pl.BlockSpec((1, _L2), lambda i: (0, 0)),
            pl.BlockSpec((4, _L2, 50), lambda i: (0, 0, 0)),     # fc1 per pooled row
            pl.BlockSpec((1, 50), lambda i: (0, 0)),
            pl.BlockSpec((50, 10), lambda i: (0, 0)),            # fc2
            pl.BlockSpec((1, 10), lambda i: (0, 0)),
        ],
        out_specs=pl.BlockSpec((b, 10), lambda i: (i, 0)),
        out_shape=jax.ShapeDtypeStruct((n_pad, 10), jnp.float32),
        compiler_params=pltpu.CompilerParams(
            dimension_semantics=("parallel",)),
    )(x2d, t1, b1t, t2, b2t, wf1, bf1, wf2, bf2)
    return out[:n]


# ------------------------------ params / reference ----------------------------

def init_params(key):
    ks = jax.random.split(key, 8)

    def u(k, shape, fan_in):
        bound = 1.0 / jnp.sqrt(jnp.float32(fan_in))
        return jax.random.uniform(k, shape, jnp.float32, -bound, bound)

    return {
        "conv1_w": u(ks[0], (10, 1, 5, 5), 1 * 5 * 5),
        "conv1_b": u(ks[1], (10,), 1 * 5 * 5),
        "conv2_w": u(ks[2], (20, 10, 5, 5), 10 * 5 * 5),
        "conv2_b": u(ks[3], (20,), 10 * 5 * 5),
        "fc1_w": u(ks[4], (50, 320), 320),
        "fc1_b": u(ks[5], (50,), 320),
        "fc2_w": u(ks[6], (10, 50), 50),
        "fc2_b": u(ks[7], (10,), 50),
    }


def _reference_forward(params, x):
    """Pure-JAX (XLA) reference with the exact PyTorch-module semantics."""
    def conv(x, w, b):
        y = lax.conv_general_dilated(
            x, w, (1, 1), "VALID", dimension_numbers=("NCHW", "OIHW", "NCHW"))
        return y + b[None, :, None, None]

    def pool(x):
        n, c, h, w = x.shape
        return jnp.max(x.reshape(n, c, h // 2, 2, w // 2, 2), axis=(3, 5))

    y = jax.nn.relu(pool(conv(x, params["conv1_w"], params["conv1_b"])))
    y = jax.nn.relu(pool(conv(y, params["conv2_w"], params["conv2_b"])))
    y = y.reshape(y.shape[0], -1)                        # == x.view(-1, 320)
    y = jax.nn.relu(y @ params["fc1_w"].T + params["fc1_b"])
    y = jax.nn.relu(y @ params["fc2_w"].T + params["fc2_b"])
    return jax.nn.log_softmax(y, axis=-1)


if __name__ == "__main__":
    key = jax.random.PRNGKey(0)
    pkey, xkey = jax.random.split(key)
    params = init_params(pkey)
    x = jax.random.normal(xkey, (2, 1, 28, 28), jnp.float32)

    out = jax.block_until_ready(jax.jit(vanilla_forward)(params, x))

    assert out.shape == (2, 10)
    assert bool(jnp.all(jnp.isfinite(out)))
    # log-softmax rows sum to 1 in probability space
    assert bool(jnp.all(jnp.abs(jnp.sum(jnp.exp(out), axis=-1) - 1.0) < 1e-4))

    ref = jax.block_until_ready(jax.jit(_reference_forward)(params, x))
    max_err = float(jnp.max(jnp.abs(out - ref)))
    assert bool(jnp.allclose(out, ref, atol=1e-2, rtol=1e-2)), max_err

    print("KERNEL_OK")
</pallas_src>

<mosaic_0001>
module attributes {stable_mosaic.version = 11 : i64} {
  func.func @_vanilla_kernel(%arg0: i32, %arg1: memref<56x28xf32, #tpu.memory_space<vmem>>, %arg2: memref<5x28x240xf32, #tpu.memory_space<vmem>>, %arg3: memref<1x240xf32, #tpu.memory_space<vmem>>, %arg4: memref<5x240x160xf32, #tpu.memory_space<vmem>>, %arg5: memref<1x160xf32, #tpu.memory_space<vmem>>, %arg6: memref<4x160x50xf32, #tpu.memory_space<vmem>>, %arg7: memref<1x50xf32, #tpu.memory_space<vmem>>, %arg8: memref<50x10xf32, #tpu.memory_space<vmem>>, %arg9: memref<1x10xf32, #tpu.memory_space<vmem>>, %arg10: memref<2x10xf32, #tpu.memory_space<vmem>>) attributes {dimension_semantics = [#tpu.dimension_semantics<parallel>], iteration_bounds = array<i64: 1>, scalar_prefetch = 0 : i64, scratch_operands = 0 : i64, tpu.core_type = #tpu.core_type<tc>, window_params = [{transform_indices = @transform_0, window_bounds = array<i64: 56, 28>}, {pipeline_mode = #tpu.pipeline_mode<synchronous>, transform_indices = @transform_1, window_bounds = array<i64: 5, 28, 240>}, {pipeline_mode = #tpu.pipeline_mode<synchronous>, transform_indices = @transform_2, window_bounds = array<i64: 1, 240>}, {pipeline_mode = #tpu.pipeline_mode<synchronous>, transform_indices = @transform_3, window_bounds = array<i64: 5, 240, 160>}, {pipeline_mode = #tpu.pipeline_mode<synchronous>, transform_indices = @transform_4, window_bounds = array<i64: 1, 160>}, {pipeline_mode = #tpu.pipeline_mode<synchronous>, transform_indices = @transform_5, window_bounds = array<i64: 4, 160, 50>}, {pipeline_mode = #tpu.pipeline_mode<synchronous>, transform_indices = @transform_6, window_bounds = array<i64: 1, 50>}, {pipeline_mode = #tpu.pipeline_mode<synchronous>, transform_indices = @transform_7, window_bounds = array<i64: 50, 10>}, {pipeline_mode = #tpu.pipeline_mode<synchronous>, transform_indices = @transform_8, window_bounds = array<i64: 1, 10>}, {transform_indices = @transform_9, window_bounds = array<i64: 2, 10>}]} {
    %c0 = arith.constant 0 : index
    %c0_0 = arith.constant 0 : index
    %0 = vector.load %arg1[%c0, %c0_0] : memref<56x28xf32, #tpu.memory_space<vmem>>, vector<56x28xf32>
    %c0_1 = arith.constant 0 : index
    %c0_2 = arith.constant 0 : index
    %c0_3 = arith.constant 0 : index
    %1 = vector.load %arg2[%c0_1, %c0_2, %c0_3] : memref<5x28x240xf32, #tpu.memory_space<vmem>>, vector<1x28x240xf32>
    %2 = vector.shape_cast %1 : vector<1x28x240xf32> to vector<28x240xf32>
    %cst = arith.constant dense<0.000000e+00> : vector<56x240xf32>
    %3 = tpu.matmul %0, %2, %cst {dimension_numbers = #tpu.dot_dimension_numbers<[1], [0], [0], [1], [0, 0, 1, 1], [], []>} : vector<56x28xf32>, vector<28x240xf32>, vector<56x240xf32> -> vector<56x240xf32>
    %4 = tpu.iota {dimensions = array<i32: 0>} : vector<56x56xi32>
    %5 = tpu.iota {dimensions = array<i32: 1>} : vector<56x56xi32>
    %c1_i32 = arith.constant 1 : i32
    %6 = vector.broadcast %c1_i32 : i32 to vector<56x56xi32>
    %7 = arith.addi %4, %6 : vector<56x56xi32>
    %8 = arith.cmpi eq, %5, %7 : vector<56x56xi32>
    %9 = arith.extui %8 : vector<56x56xi1> to vector<56x56xi32>
    %10 = arith.sitofp %9 : vector<56x56xi32> to vector<56x56xf32>
    %cst_4 = arith.constant dense<0.000000e+00> : vector<56x28xf32>
    %11 = tpu.matmul %10, %0, %cst_4 {dimension_numbers = #tpu.dot_dimension_numbers<[1], [0], [0], [1], [0, 0, 1, 1], [], []>} : vector<56x56xf32>, vector<56x28xf32>, vector<56x28xf32> -> vector<56x28xf32>
    %c1 = arith.constant 1 : index
    %c0_5 = arith.constant 0 : index
    %c0_6 = arith.constant 0 : index
    %12 = vector.load %arg2[%c1, %c0_5, %c0_6] : memref<5x28x240xf32, #tpu.memory_space<vmem>>, vector<1x28x240xf32>
    %13 = vector.shape_cast %12 : vector<1x28x240xf32> to vector<28x240xf32>
    %cst_7 = arith.constant dense<0.000000e+00> : vector<56x240xf32>
    %14 = tpu.matmul %11, %13, %cst_7 {dimension_numbers = #tpu.dot_dimension_numbers<[1], [0], [0], [1], [0, 0, 1, 1], [], []>} : vector<56x28xf32>, vector<28x240xf32>, vector<56x240xf32> -> vector<56x240xf32>
    %15 = arith.addf %3, %14 : vector<56x240xf32>
    %16 = tpu.iota {dimensions = array<i32: 0>} : vector<56x56xi32>
    %17 = tpu.iota {dimensions = array<i32: 1>} : vector<56x56xi32>
    %c2_i32 = arith.constant 2 : i32
    %18 = vector.broadcast %c2_i32 : i32 to vector<56x56xi32>
    %19 = arith.addi %16, %18 : vector<56x56xi32>
    %20 = arith.cmpi eq, %17, %19 : vector<56x56xi32>
    %21 = arith.extui %20 : vector<56x56xi1> to vector<56x56xi32>
    %22 = arith.sitofp %21 : vector<56x56xi32> to vector<56x56xf32>
    %cst_8 = arith.constant dense<0.000000e+00> : vector<56x28xf32>
    %23 = tpu.matmul %22, %0, %cst_8 {dimension_numbers = #tpu.dot_dimension_numbers<[1], [0], [0], [1], [0, 0, 1, 1], [], []>} : vector<56x56xf32>, vector<56x28xf32>, vector<56x28xf32> -> vector<56x28xf32>
    %c2 = arith.constant 2 : index
    %c0_9 = arith.constant 0 : index
    %c0_10 = arith.constant 0 : index
    %24 = vector.load %arg2[%c2, %c0_9, %c0_10] : memref<5x28x240xf32, #tpu.memory_space<vmem>>, vector<1x28x240xf32>
    %25 = vector.shape_cast %24 : vector<1x28x240xf32> to vector<28x240xf32>
    %cst_11 = arith.constant dense<0.000000e+00> : vector<56x240xf32>
    %26 = tpu.matmul %23, %25, %cst_11 {dimension_numbers = #tpu.dot_dimension_numbers<[1], [0], [0], [1], [0, 0, 1, 1], [], []>} : vector<56x28xf32>, vector<28x240xf32>, vector<56x240xf32> -> vector<56x240xf32>
    %27 = arith.addf %15, %26 : vector<56x240xf32>
    %28 = tpu.iota {dimensions = array<i32: 0>} : vector<56x56xi32>
    %29 = tpu.iota {dimensions = array<i32: 1>} : vector<56x56xi32>
    %c3_i32 = arith.constant 3 : i32
    %30 = vector.broadcast %c3_i32 : i32 to vector<56x56xi32>
    %31 = arith.addi %28, %30 : vector<56x56xi32>
    %32 = arith.cmpi eq, %29, %31 : vector<56x56xi32>
    %33 = arith.extui %32 : vector<56x56xi1> to vector<56x56xi32>
    %34 = arith.sitofp %33 : vector<56x56xi32> to vector<56x56xf32>
    %cst_12 = arith.constant dense<0.000000e+00> : vector<56x28xf32>
    %35 = tpu.matmul %34, %0, %cst_12 {dimension_numbers = #tpu.dot_dimension_numbers<[1], [0], [0], [1], [0, 0, 1, 1], [], []>} : vector<56x56xf32>, vector<56x28xf32>, vector<56x28xf32> -> vector<56x28xf32>
    %c3 = arith.constant 3 : index
    %c0_13 = arith.constant 0 : index
    %c0_14 = arith.constant 0 : index
    %36 = vector.load %arg2[%c3, %c0_13, %c0_14] : memref<5x28x240xf32, #tpu.memory_space<vmem>>, vector<1x28x240xf32>
    %37 = vector.shape_cast %36 : vector<1x28x240xf32> to vector<28x240xf32>
    %cst_15 = arith.constant dense<0.000000e+00> : vector<56x240xf32>
    %38 = tpu.matmul %35, %37, %cst_15 {dimension_numbers = #tpu.dot_dimension_numbers<[1], [0], [0], [1], [0, 0, 1, 1], [], []>} : vector<56x28xf32>, vector<28x240xf32>, vector<56x240xf32> -> vector<56x240xf32>
    %39 = arith.addf %27, %38 : vector<56x240xf32>
    %40 = tpu.iota {dimensions = array<i32: 0>} : vector<56x56xi32>
    %41 = tpu.iota {dimensions = array<i32: 1>} : vector<56x56xi32>
    %c4_i32 = arith.constant 4 : i32
    %42 = vector.broadcast %c4_i32 : i32 to vector<56x56xi32>
    %43 = arith.addi %40, %42 : vector<56x56xi32>
    %44 = arith.cmpi eq, %41, %43 : vector<56x56xi32>
    %45 = arith.extui %44 : vector<56x56xi1> to vector<56x56xi32>
    %46 = arith.sitofp %45 : vector<56x56xi32> to vector<56x56xf32>
    %cst_16 = arith.constant dense<0.000000e+00> : vector<56x28xf32>
    %47 = tpu.matmul %46, %0, %cst_16 {dimension_numbers = #tpu.dot_dimension_numbers<[1], [0], [0], [1], [0, 0, 1, 1], [], []>} : vector<56x56xf32>, vector<56x28xf32>, vector<56x28xf32> -> vector<56x28xf32>
    %c4 = arith.constant 4 : index
    %c0_17 = arith.constant 0 : index
    %c0_18 = arith.constant 0 : index
    %48 = vector.load %arg2[%c4, %c0_17, %c0_18] : memref<5x28x240xf32, #tpu.memory_space<vmem>>, vector<1x28x240xf32>
    %49 = vector.shape_cast %48 : vector<1x28x240xf32> to vector<28x240xf32>
    %cst_19 = arith.constant dense<0.000000e+00> : vector<56x240xf32>
    %50 = tpu.matmul %47, %49, %cst_19 {dimension_numbers = #tpu.dot_dimension_numbers<[1], [0], [0], [1], [0, 0, 1, 1], [], []>} : vector<56x28xf32>, vector<28x240xf32>, vector<56x240xf32> -> vector<56x240xf32>
    %51 = arith.addf %39, %50 : vector<56x240xf32>
    %c0_20 = arith.constant 0 : index
    %c0_21 = arith.constant 0 : index
    %52 = vector.load %arg3[%c0_20, %c0_21] : memref<1x240xf32, #tpu.memory_space<vmem>>, vector<1x240xf32>
    %53 = vector.broadcast %52 : vector<1x240xf32> to vector<56x240xf32>
    %54 = arith.addf %51, %53 : vector<56x240xf32>
    %55 = tpu.iota {dimensions = array<i32: 0>} : vector<56x56xi32>
    %56 = tpu.iota {dimensions = array<i32: 1>} : vector<56x56xi32>
    %c1_i32_22 = arith.constant 1 : i32
    %57 = vector.broadcast %c1_i32_22 : i32 to vector<56x56xi32>
    %58 = arith.addi %55, %57 : vector<56x56xi32>
    %59 = arith.cmpi eq, %56, %58 : vector<56x56xi32>
    %60 = arith.extui %59 : vector<56x56xi1> to vector<56x56xi32>
    %61 = arith.sitofp %60 : vector<56x56xi32> to vector<56x56xf32>
    %cst_23 = arith.constant dense<0.000000e+00> : vector<56x240xf32>
    %62 = tpu.matmul %61, %54, %cst_23 {dimension_numbers = #tpu.dot_dimension_numbers<[1], [0], [0], [1], [0, 0, 1, 1], [], []>} : vector<56x56xf32>, vector<56x240xf32>, vector<56x240xf32> -> vector<56x240xf32>
    %63 = arith.maximumf %54, %62 : vector<56x240xf32>
    %64 = tpu.iota {dimensions = array<i32: 0>} : vector<240x240xi32>
    %65 = tpu.iota {dimensions = array<i32: 1>} : vector<240x240xi32>
    %c1_i32_24 = arith.constant 1 : i32
    %66 = vector.broadcast %c1_i32_24 : i32 to vector<240x240xi32>
    %67 = arith.addi %65, %66 : vector<240x240xi32>
    %68 = arith.cmpi eq, %64, %67 : vector<240x240xi32>
    %69 = arith.extui %68 : vector<240x240xi1> to vector<240x240xi32>
    %70 = arith.sitofp %69 : vector<240x240xi32> to vector<240x240xf32>
    %cst_25 = arith.constant dense<0.000000e+00> : vector<56x240xf32>
    %71 = tpu.matmul %63, %70, %cst_25 {dimension_numbers = #tpu.dot_dimension_numbers<[1], [0], [0], [1], [0, 0, 1, 1], [], []>} : vector<56x240xf32>, vector<240x240xf32>, vector<56x240xf32> -> vector<56x240xf32>
    %72 = arith.maximumf %63, %71 : vector<56x240xf32>
    %cst_26 = arith.constant 0.000000e+00 : f32
    %73 = vector.broadcast %cst_26 : f32 to vector<56x240xf32>
    %74 = arith.maximumf %72, %73 : vector<56x240xf32>
    %c0_27 = arith.constant 0 : index
    %c0_28 = arith.constant 0 : index
    %c0_29 = arith.constant 0 : index
    %75 = vector.load %arg4[%c0_27, %c0_28, %c0_29] : memref<5x240x160xf32, #tpu.memory_space<vmem>>, vector<1x240x160xf32>
    %76 = vector.shape_cast %75 : vector<1x240x160xf32> to vector<240x160xf32>
    %cst_30 = arith.constant dense<0.000000e+00> : vector<56x160xf32>
    %77 = tpu.matmul %74, %76, %cst_30 {dimension_numbers = #tpu.dot_dimension_numbers<[1], [0], [0], [1], [0, 0, 1, 1], [], []>} : vector<56x240xf32>, vector<240x160xf32>, vector<56x160xf32> -> vector<56x160xf32>
    %78 = tpu.iota {dimensions = array<i32: 0>} : vector<56x56xi32>
    %79 = tpu.iota {dimensions = array<i32: 1>} : vector<56x56xi32>
    %c2_i32_31 = arith.constant 2 : i32
    %80 = vector.broadcast %c2_i32_31 : i32 to vector<56x56xi32>
    %81 = arith.addi %78, %80 : vector<56x56xi32>
    %82 = arith.cmpi eq, %79, %81 : vector<56x56xi32>
    %83 = arith.extui %82 : vector<56x56xi1> to vector<56x56xi32>
    %84 = arith.sitofp %83 : vector<56x56xi32> to vector<56x56xf32>
    %cst_32 = arith.constant dense<0.000000e+00> : vector<56x240xf32>
    %85 = tpu.matmul %84, %74, %cst_32 {dimension_numbers = #tpu.dot_dimension_numbers<[1], [0], [0], [1], [0, 0, 1, 1], [], []>} : vector<56x56xf32>, vector<56x240xf32>, vector<56x240xf32> -> vector<56x240xf32>
    %c1_33 = arith.constant 1 : index
    %c0_34 = arith.constant 0 : index
    %c0_35 = arith.constant 0 : index
    %86 = vector.load %arg4[%c1_33, %c0_34, %c0_35] : memref<5x240x160xf32, #tpu.memory_space<vmem>>, vector<1x240x160xf32>
    %87 = vector.shape_cast %86 : vector<1x240x160xf32> to vector<240x160xf32>
    %cst_36 = arith.constant dense<0.000000e+00> : vector<56x160xf32>
    %88 = tpu.matmul %85, %87, %cst_36 {dimension_numbers = #tpu.dot_dimension_numbers<[1], [0], [0], [1], [0, 0, 1, 1], [], []>} : vector<56x240xf32>, vector<240x160xf32>, vector<56x160xf32> -> vector<56x160xf32>
    %89 = arith.addf %77, %88 : vector<56x160xf32>
    %90 = tpu.iota {dimensions = array<i32: 0>} : vector<56x56xi32>
    %91 = tpu.iota {dimensions = array<i32: 1>} : vector<56x56xi32>
    %c4_i32_37 = arith.constant 4 : i32
    %92 = vector.broadcast %c4_i32_37 : i32 to vector<56x56xi32>
    %93 = arith.addi %90, %92 : vector<56x56xi32>
    %94 = arith.cmpi eq, %91, %93 : vector<56x56xi32>
    %95 = arith.extui %94 : vector<56x56xi1> to vector<56x56xi32>
    %96 = arith.sitofp %95 : vector<56x56xi32> to vector<56x56xf32>
    %cst_38 = arith.constant dense<0.000000e+00> : vector<56x240xf32>
    %97 = tpu.matmul %96, %74, %cst_38 {dimension_numbers = #tpu.dot_dimension_numbers<[1], [0], [0], [1], [0, 0, 1, 1], [], []>} : vector<56x56xf32>, vector<56x240xf32>, vector<56x240xf32> -> vector<56x240xf32>
    %c2_39 = arith.constant 2 : index
    %c0_40 = arith.constant 0 : index
    %c0_41 = arith.constant 0 : index
    %98 = vector.load %arg4[%c2_39, %c0_40, %c0_41] : memref<5x240x160xf32, #tpu.memory_space<vmem>>, vector<1x240x160xf32>
    %99 = vector.shape_cast %98 : vector<1x240x160xf32> to vector<240x160xf32>
    %cst_42 = arith.constant dense<0.000000e+00> : vector<56x160xf32>
    %100 = tpu.matmul %97, %99, %cst_42 {dimension_numbers = #tpu.dot_dimension_numbers<[1], [0], [0], [1], [0, 0, 1, 1], [], []>} : vector<56x240xf32>, vector<240x160xf32>, vector<56x160xf32> -> vector<56x160xf32>
    %101 = arith.addf %89, %100 : vector<56x160xf32>
    %102 = tpu.iota {dimensions = array<i32: 0>} : vector<56x56xi32>
    %103 = tpu.iota {dimensions = array<i32: 1>} : vector<56x56xi32>
    %c6_i32 = arith.constant 6 : i32
    %104 = vector.broadcast %c6_i32 : i32 to vector<56x56xi32>
    %105 = arith.addi %102, %104 : vector<56x56xi32>
    %106 = arith.cmpi eq, %103, %105 : vector<56x56xi32>
    %107 = arith.extui %106 : vector<56x56xi1> to vector<56x56xi32>
    %108 = arith.sitofp %107 : vector<56x56xi32> to vector<56x56xf32>
    %cst_43 = arith.constant dense<0.000000e+00> : vector<56x240xf32>
    %109 = tpu.matmul %108, %74, %cst_43 {dimension_numbers = #tpu.dot_dimension_numbers<[1], [0], [0], [1], [0, 0, 1, 1], [], []>} : vector<56x56xf32>, vector<56x240xf32>, vector<56x240xf32> -> vector<56x240xf32>
    %c3_44 = arith.constant 3 : index
    %c0_45 = arith.constant 0 : index
    %c0_46 = arith.constant 0 : index
    %110 = vector.load %arg4[%c3_44, %c0_45, %c0_46] : memref<5x240x160xf32, #tpu.memory_space<vmem>>, vector<1x240x160xf32>
    %111 = vector.shape_cast %110 : vector<1x240x160xf32> to vector<240x160xf32>
    %cst_47 = arith.constant dense<0.000000e+00> : vector<56x160xf32>
    %112 = tpu.matmul %109, %111, %cst_47 {dimension_numbers = #tpu.dot_dimension_numbers<[1], [0], [0], [1], [0, 0, 1, 1], [], []>} : vector<56x240xf32>, vector<240x160xf32>, vector<56x160xf32> -> vector<56x160xf32>
    %113 = arith.addf %101, %112 : vector<56x160xf32>
    %114 = tpu.iota {dimensions = array<i32: 0>} : vector<56x56xi32>
    %115 = tpu.iota {dimensions = array<i32: 1>} : vector<56x56xi32>
    %c8_i32 = arith.constant 8 : i32
    %116 = vector.broadcast %c8_i32 : i32 to vector<56x56xi32>
    %117 = arith.addi %114, %116 : vector<56x56xi32>
    %118 = arith.cmpi eq, %115, %117 : vector<56x56xi32>
    %119 = arith.extui %118 : vector<56x56xi1> to vector<56x56xi32>
    %120 = arith.sitofp %119 : vector<56x56xi32> to vector<56x56xf32>
    %cst_48 = arith.constant dense<0.000000e+00> : vector<56x240xf32>
    %121 = tpu.matmul %120, %74, %cst_48 {dimension_numbers = #tpu.dot_dimension_numbers<[1], [0], [0], [1], [0, 0, 1, 1], [], []>} : vector<56x56xf32>, vector<56x240xf32>, vector<56x240xf32> -> vector<56x240xf32>
    %c4_49 = arith.constant 4 : index
    %c0_50 = arith.constant 0 : index
    %c0_51 = arith.constant 0 : index
    %122 = vector.load %arg4[%c4_49, %c0_50, %c0_51] : memref<5x240x160xf32, #tpu.memory_space<vmem>>, vector<1x240x160xf32>
    %123 = vector.shape_cast %122 : vector<1x240x160xf32> to vector<240x160xf32>
    %cst_52 = arith.constant dense<0.000000e+00> : vector<56x160xf32>
    %124 = tpu.matmul %121, %123, %cst_52 {dimension_numbers = #tpu.dot_dimension_numbers<[1], [0], [0], [1], [0, 0, 1, 1], [], []>} : vector<56x240xf32>, vector<240x160xf32>, vector<56x160xf32> -> vector<56x160xf32>
    %125 = arith.addf %113, %124 : vector<56x160xf32>
    %c0_53 = arith.constant 0 : index
    %c0_54 = arith.constant 0 : index
    %126 = vector.load %arg5[%c0_53, %c0_54] : memref<1x160xf32, #tpu.memory_space<vmem>>, vector<1x160xf32>
    %127 = vector.broadcast %126 : vector<1x160xf32> to vector<56x160xf32>
    %128 = arith.addf %125, %127 : vector<56x160xf32>
    %129 = tpu.iota {dimensions = array<i32: 0>} : vector<56x56xi32>
    %130 = tpu.iota {dimensions = array<i32: 1>} : vector<56x56xi32>
    %c2_i32_55 = arith.constant 2 : i32
    %131 = vector.broadcast %c2_i32_55 : i32 to vector<56x56xi32>
    %132 = arith.addi %129, %131 : vector<56x56xi32>
    %133 = arith.cmpi eq, %130, %132 : vector<56x56xi32>
    %134 = arith.extui %133 : vector<56x56xi1> to vector<56x56xi32>
    %135 = arith.sitofp %134 : vector<56x56xi32> to vector<56x56xf32>
    %cst_56 = arith.constant dense<0.000000e+00> : vector<56x160xf32>
    %136 = tpu.matmul %135, %128, %cst_56 {dimension_numbers = #tpu.dot_dimension_numbers<[1], [0], [0], [1], [0, 0, 1, 1], [], []>} : vector<56x56xf32>, vector<56x160xf32>, vector<56x160xf32> -> vector<56x160xf32>
    %137 = arith.maximumf %128, %136 : vector<56x160xf32>
    %138 = tpu.iota {dimensions = array<i32: 0>} : vector<160x160xi32>
    %139 = tpu.iota {dimensions = array<i32: 1>} : vector<160x160xi32>
    %c1_i32_57 = arith.constant 1 : i32
    %140 = vector.broadcast %c1_i32_57 : i32 to vector<160x160xi32>
    %141 = arith.addi %139, %140 : vector<160x160xi32>
    %142 = arith.cmpi eq, %138, %141 : vector<160x160xi32>
    %143 = arith.extui %142 : vector<160x160xi1> to vector<160x160xi32>
    %144 = arith.sitofp %143 : vector<160x160xi32> to vector<160x160xf32>
    %cst_58 = arith.constant dense<0.000000e+00> : vector<56x160xf32>
    %145 = tpu.matmul %137, %144, %cst_58 {dimension_numbers = #tpu.dot_dimension_numbers<[1], [0], [0], [1], [0, 0, 1, 1], [], []>} : vector<56x160xf32>, vector<160x160xf32>, vector<56x160xf32> -> vector<56x160xf32>
    %146 = arith.maximumf %137, %145 : vector<56x160xf32>
    %cst_59 = arith.constant 0.000000e+00 : f32
    %147 = vector.broadcast %cst_59 : f32 to vector<56x160xf32>
    %148 = arith.maximumf %146, %147 : vector<56x160xf32>
    %149 = tpu.iota {dimensions = array<i32: 0>} : vector<2x56xi32>
    %150 = tpu.iota {dimensions = array<i32: 1>} : vector<2x56xi32>
    %cst_60 = arith.constant 0.000000e+00 : f32
    %151 = vector.broadcast %cst_60 : f32 to vector<2x50xf32>
    %c28_i32 = arith.constant 28 : i32
    %152 = vector.broadcast %c28_i32 : i32 to vector<2x56xi32>
    %153 = arith.muli %149, %152 : vector<2x56xi32>
    %c0_i32 = arith.constant 0 : i32
    %154 = vector.broadcast %c0_i32 : i32 to vector<2x56xi32>
    %155 = arith.addi %153, %154 : vector<2x56xi32>
    %156 = arith.cmpi eq, %150, %155 : vector<2x56xi32>
    %157 = arith.extui %156 : vector<2x56xi1> to vector<2x56xi32>
    %158 = arith.sitofp %157 : vector<2x56xi32> to vector<2x56xf32>
    %cst_61 = arith.constant dense<0.000000e+00> : vector<2x160xf32>
    %159 = tpu.matmul %158, %148, %cst_61 {dimension_numbers = #tpu.dot_dimension_numbers<[1], [0], [0], [1], [0, 0, 1, 1], [], []>} : vector<2x56xf32>, vector<56x160xf32>, vector<2x160xf32> -> vector<2x160xf32>
    %c0_62 = arith.constant 0 : index
    %c0_63 = arith.constant 0 : index
    %c0_64 = arith.constant 0 : index
    %160 = vector.load %arg6[%c0_62, %c0_63, %c0_64] : memref<4x160x50xf32, #tpu.memory_space<vmem>>, vector<1x160x50xf32>
    %161 = vector.shape_cast %160 : vector<1x160x50xf32> to vector<160x50xf32>
    %cst_65 = arith.constant dense<0.000000e+00> : vector<2x50xf32>
    %162 = tpu.matmul %159, %161, %cst_65 {dimension_numbers = #tpu.dot_dimension_numbers<[1], [0], [0], [1], [0, 0, 1, 1], [], []>} : vector<2x160xf32>, vector<160x50xf32>, vector<2x50xf32> -> vector<2x50xf32>
    %163 = arith.addf %151, %162 : vector<2x50xf32>
    %c28_i32_66 = arith.constant 28 : i32
    %164 = vector.broadcast %c28_i32_66 : i32 to vector<2x56xi32>
    %165 = arith.muli %149, %164 : vector<2x56xi32>
    %c4_i32_67 = arith.constant 4 : i32
    %166 = vector.broadcast %c4_i32_67 : i32 to vector<2x56xi32>
    %167 = arith.addi %165, %166 : vector<2x56xi32>
    %168 = arith.cmpi eq, %150, %167 : vector<2x56xi32>
    %169 = arith.extui %168 : vector<2x56xi1> to vector<2x56xi32>
    %170 = arith.sitofp %169 : vector<2x56xi32> to vector<2x56xf32>
    %cst_68 = arith.constant dense<0.000000e+00> : vector<2x160xf32>
    %171 = tpu.matmul %170, %148, %cst_68 {dimension_numbers = #tpu.dot_dimension_numbers<[1], [0], [0], [1], [0, 0, 1, 1], [], []>} : vector<2x56xf32>, vector<56x160xf32>, vector<2x160xf32> -> vector<2x160xf32>
    %c1_69 = arith.constant 1 : index
    %c0_70 = arith.constant 0 : index
    %c0_71 = arith.constant 0 : index
    %172 = vector.load %arg6[%c1_69, %c0_70, %c0_71] : memref<4x160x50xf32, #tpu.memory_space<vmem>>, vector<1x160x50xf32>
    %173 = vector.shape_cast %172 : vector<1x160x50xf32> to vector<160x50xf32>
    %cst_72 = arith.constant dense<0.000000e+00> : vector<2x50xf32>
    %174 = tpu.matmul %171, %173, %cst_72 {dimension_numbers = #tpu.dot_dimension_numbers<[1], [0], [0], [1], [0, 0, 1, 1], [], []>} : vector<2x160xf32>, vector<160x50xf32>, vector<2x50xf32> -> vector<2x50xf32>
    %175 = arith.addf %163, %174 : vector<2x50xf32>
    %c28_i32_73 = arith.constant 28 : i32
    %176 = vector.broadcast %c28_i32_73 : i32 to vector<2x56xi32>
    %177 = arith.muli %149, %176 : vector<2x56xi32>
    %c8_i32_74 = arith.constant 8 : i32
    %178 = vector.broadcast %c8_i32_74 : i32 to vector<2x56xi32>
    %179 = arith.addi %177, %178 : vector<2x56xi32>
    %180 = arith.cmpi eq, %150, %179 : vector<2x56xi32>
    %181 = arith.extui %180 : vector<2x56xi1> to vector<2x56xi32>
    %182 = arith.sitofp %181 : vector<2x56xi32> to vector<2x56xf32>
    %cst_75 = arith.constant dense<0.000000e+00> : vector<2x160xf32>
    %183 = tpu.matmul %182, %148, %cst_75 {dimension_numbers = #tpu.dot_dimension_numbers<[1], [0], [0], [1], [0, 0, 1, 1], [], []>} : vector<2x56xf32>, vector<56x160xf32>, vector<2x160xf32> -> vector<2x160xf32>
    %c2_76 = arith.constant 2 : index
    %c0_77 = arith.constant 0 : index
    %c0_78 = arith.constant 0 : index
    %184 = vector.load %arg6[%c2_76, %c0_77, %c0_78] : memref<4x160x50xf32, #tpu.memory_space<vmem>>, vector<1x160x50xf32>
    %185 = vector.shape_cast %184 : vector<1x160x50xf32> to vector<160x50xf32>
    %cst_79 = arith.constant dense<0.000000e+00> : vector<2x50xf32>
    %186 = tpu.matmul %183, %185, %cst_79 {dimension_numbers = #tpu.dot_dimension_numbers<[1], [0], [0], [1], [0, 0, 1, 1], [], []>} : vector<2x160xf32>, vector<160x50xf32>, vector<2x50xf32> -> vector<2x50xf32>
    %187 = arith.addf %175, %186 : vector<2x50xf32>
    %c28_i32_80 = arith.constant 28 : i32
    %188 = vector.broadcast %c28_i32_80 : i32 to vector<2x56xi32>
    %189 = arith.muli %149, %188 : vector<2x56xi32>
    %c12_i32 = arith.constant 12 : i32
    %190 = vector.broadcast %c12_i32 : i32 to vector<2x56xi32>
    %191 = arith.addi %189, %190 : vector<2x56xi32>
    %192 = arith.cmpi eq, %150, %191 : vector<2x56xi32>
    %193 = arith.extui %192 : vector<2x56xi1> to vector<2x56xi32>
    %194 = arith.sitofp %193 : vector<2x56xi32> to vector<2x56xf32>
    %cst_81 = arith.constant dense<0.000000e+00> : vector<2x160xf32>
    %195 = tpu.matmul %194, %148, %cst_81 {dimension_numbers = #tpu.dot_dimension_numbers<[1], [0], [0], [1], [0, 0, 1, 1], [], []>} : vector<2x56xf32>, vector<56x160xf32>, vector<2x160xf32> -> vector<2x160xf32>
    %c3_82 = arith.constant 3 : index
    %c0_83 = arith.constant 0 : index
    %c0_84 = arith.constant 0 : index
    %196 = vector.load %arg6[%c3_82, %c0_83, %c0_84] : memref<4x160x50xf32, #tpu.memory_space<vmem>>, vector<1x160x50xf32>
    %197 = vector.shape_cast %196 : vector<1x160x50xf32> to vector<160x50xf32>
    %cst_85 = arith.constant dense<0.000000e+00> : vector<2x50xf32>
    %198 = tpu.matmul %195, %197, %cst_85 {dimension_numbers = #tpu.dot_dimension_numbers<[1], [0], [0], [1], [0, 0, 1, 1], [], []>} : vector<2x160xf32>, vector<160x50xf32>, vector<2x50xf32> -> vector<2x50xf32>
    %199 = arith.addf %187, %198 : vector<2x50xf32>
    %c0_86 = arith.constant 0 : index
    %c0_87 = arith.constant 0 : index
    %200 = vector.load %arg7[%c0_86, %c0_87] : memref<1x50xf32, #tpu.memory_space<vmem>>, vector<1x50xf32>
    %201 = vector.broadcast %200 : vector<1x50xf32> to vector<2x50xf32>
    %202 = arith.addf %199, %201 : vector<2x50xf32>
    %cst_88 = arith.constant 0.000000e+00 : f32
    %203 = vector.broadcast %cst_88 : f32 to vector<2x50xf32>
    %204 = arith.maximumf %202, %203 : vector<2x50xf32>
    %c0_89 = arith.constant 0 : index
    %c0_90 = arith.constant 0 : index
    %205 = vector.load %arg8[%c0_89, %c0_90] : memref<50x10xf32, #tpu.memory_space<vmem>>, vector<50x10xf32>
    %cst_91 = arith.constant dense<0.000000e+00> : vector<2x10xf32>
    %206 = tpu.matmul %204, %205, %cst_91 {dimension_numbers = #tpu.dot_dimension_numbers<[1], [0], [0], [1], [0, 0, 1, 1], [], []>} : vector<2x50xf32>, vector<50x10xf32>, vector<2x10xf32> -> vector<2x10xf32>
    %c0_92 = arith.constant 0 : index
    %c0_93 = arith.constant 0 : index
    %207 = vector.load %arg9[%c0_92, %c0_93] : memref<1x10xf32, #tpu.memory_space<vmem>>, vector<1x10xf32>
    %208 = vector.broadcast %207 : vector<1x10xf32> to vector<2x10xf32>
    %209 = arith.addf %206, %208 : vector<2x10xf32>
    %cst_94 = arith.constant 0.000000e+00 : f32
    %210 = vector.broadcast %cst_94 : f32 to vector<2x10xf32>
    %211 = arith.maximumf %209, %210 : vector<2x10xf32>
    %cst_95 = arith.constant dense<0xFF800000> : vector<2xf32>
    %212 = vector.multi_reduction <maximumf>, %211, %cst_95 [1] : vector<2x10xf32> to vector<2xf32>
    %213 = vector.shape_cast %212 : vector<2xf32> to vector<2x1xf32>
    %214 = vector.broadcast %213 : vector<2x1xf32> to vector<2x10xf32>
    %215 = arith.subf %211, %214 : vector<2x10xf32>
    %216 = math.exp %215 : vector<2x10xf32>
    %cst_96 = arith.constant dense<0.000000e+00> : vector<2xf32>
    %217 = vector.multi_reduction <add>, %216, %cst_96 [1] : vector<2x10xf32> to vector<2xf32>
    %218 = vector.shape_cast %217 : vector<2xf32> to vector<2x1xf32>
    %219 = math.log %218 : vector<2x1xf32>
    %220 = vector.broadcast %213 : vector<2x1xf32> to vector<2x10xf32>
    %221 = arith.subf %211, %220 : vector<2x10xf32>
    %222 = vector.broadcast %219 : vector<2x1xf32> to vector<2x10xf32>
    %223 = arith.subf %221, %222 : vector<2x10xf32>
    %c0_97 = arith.constant 0 : index
    %c0_98 = arith.constant 0 : index
    %224 = vector.load %arg10[%c0_97, %c0_98] : memref<2x10xf32, #tpu.memory_space<vmem>>, vector<2x10xf32>
    tpu.vector_store %arg10[%c0_97, %c0_98], %223 {strides = array<i32>} : memref<2x10xf32, #tpu.memory_space<vmem>>, vector<2x10xf32>,
    return
  }
  func.func @transform_0(%arg0: i32) -> (i32, i32) {
    %c0_i32 = arith.constant 0 : i32
    %c0_i32_0 = arith.constant 0 : i32
    return %arg0, %c0_i32 : i32, i32
  }
  func.func @transform_1(%arg0: i32) -> (i32, i32, i32) {
    %c0_i32 = arith.constant 0 : i32
    %c0_i32_0 = arith.constant 0 : i32
    %c0_i32_1 = arith.constant 0 : i32
    %c0_i32_2 = arith.constant 0 : i32
    return %c0_i32, %c0_i32_0, %c0_i32_1 : i32, i32, i32
  }
  func.func @transform_2(%arg0: i32) -> (i32, i32) {
    %c0_i32 = arith.constant 0 : i32
    %c0_i32_0 = arith.constant 0 : i32
    %c0_i32_1 = arith.constant 0 : i32
    return %c0_i32, %c0_i32_0 : i32, i32
  }
  func.func @transform_3(%arg0: i32) -> (i32, i32, i32) {
    %c0_i32 = arith.constant 0 : i32
    %c0_i32_0 = arith.constant 0 : i32
    %c0_i32_1 = arith.constant 0 : i32
    %c0_i32_2 = arith.constant 0 : i32
    return %c0_i32, %c0_i32_0, %c0_i32_1 : i32, i32, i32
  }
  func.func @transform_4(%arg0: i32) -> (i32, i32) {
    %c0_i32 = arith.constant 0 : i32
    %c0_i32_0 = arith.constant 0 : i32
    %c0_i32_1 = arith.constant 0 : i32
    return %c0_i32, %c0_i32_0 : i32, i32
  }
  func.func @transform_5(%arg0: i32) -> (i32, i32, i32) {
    %c0_i32 = arith.constant 0 : i32
    %c0_i32_0 = arith.constant 0 : i32
    %c0_i32_1 = arith.constant 0 : i32
    %c0_i32_2 = arith.constant 0 : i32
    return %c0_i32, %c0_i32_0, %c0_i32_1 : i32, i32, i32
  }
  func.func @transform_6(%arg0: i32) -> (i32, i32) {
    %c0_i32 = arith.constant 0 : i32
    %c0_i32_0 = arith.constant 0 : i32
    %c0_i32_1 = arith.constant 0 : i32
    return %c0_i32, %c0_i32_0 : i32, i32
  }
  func.func @transform_7(%arg0: i32) -> (i32, i32) {
    %c0_i32 = arith.constant 0 : i32
    %c0_i32_0 = arith.constant 0 : i32
    %c0_i32_1 = arith.constant 0 : i32
    return %c0_i32, %c0_i32_0 : i32, i32
  }
  func.func @transform_8(%arg0: i32) -> (i32, i32) {
    %c0_i32 = arith.constant 0 : i32
    %c0_i32_0 = arith.constant 0 : i32
    %c0_i32_1 = arith.constant 0 : i32
    return %c0_i32, %c0_i32_0 : i32, i32
  }
  func.func @transform_9(%arg0: i32) -> (i32, i32) {
    %c0_i32 = arith.constant 0 : i32
    %c0_i32_0 = arith.constant 0 : i32
    return %arg0, %c0_i32 : i32, i32
  }
}

</mosaic_0001>

<llo_original>
// kernel: vanilla_forward.1
$region0: #{vanilla_forward.1}
  #allocation0 [shape = 'u32[]', space=smem, size = 0x4, offset = 0x4, fixed_abs, tag = 'smem constant byte address 0x4 - core index']
  #allocation1 [shape = 'u32[144,128]{1,0:T(1,128)}', space=vmem, size = 0x12000, scoped, tag = 'internal scratch']
  %s0 = inlined_call_operand.vmem [shape: f32[56,28], index: 0, kind: input, shape index: {}]
  %s1 = inlined_call_operand.vmem [shape: f32[5,28,240], index: 1, kind: input, shape index: {}]
  %s2 = inlined_call_operand.vmem [shape: f32[1,240], index: 2, kind: input, shape index: {}]
  %s3 = inlined_call_operand.vmem [shape: f32[5,240,160], index: 3, kind: input, shape index: {}]
  %s4 = inlined_call_operand.vmem [shape: f32[1,160], index: 4, kind: input, shape index: {}]
  %s5 = inlined_call_operand.vmem [shape: f32[4,160,50], index: 5, kind: input, shape index: {}]
  %s6 = inlined_call_operand.vmem [shape: f32[1,50], index: 6, kind: input, shape index: {}]
  %s7 = inlined_call_operand.vmem [shape: f32[50,10], index: 7, kind: input, shape index: {}]
  %s8 = inlined_call_operand.vmem [shape: f32[1,10], index: 8, kind: input, shape index: {}]
  %s9 = inlined_call_operand.hbm [shape: f32[2,10], index: 9, kind: output, shape index: {}]
  %s10 = sld [smem:[#allocation0]]
  $region46: #{vanilla_forward.1} parent=0
    _
  %s12 = ssub.s32 1, %s10
  %s13 = scalar_select 0, %s12, %s10
  $region1: #{vanilla_forward.1} parent=0
    #allocation2 [shape = 'u8[1024]{0}', space=vmem, size = 0x400, scoped, tag = 'output window, operand 0, single buffered']
    #allocation3 [shape = 's32[1]{0}', space=sflag, size = 0x4, scoped, tag = 'scoped memory for vanilla_forward.1']
    %14 = vsyncpa [#allocation3], 0
    // Predicated region
    $region2: #{vanilla_forward.1} parent=1 // pred_check
      _
    $region3: #{vanilla_forward.1} parent=1 // pred_check_branch
      %16 = sbr.rel (0) target = $region5
    $region4: #{vanilla_forward.1} parent=1 // pred_region
      _
    $region5: #{vanilla_forward.1} parent=1 // pred_fallthru
      _
    // Predicated region
    $region6: #{vanilla_forward.1} parent=1 // pred_check
      _
    $region7: #{vanilla_forward.1} parent=1 // pred_check_branch
      %18 = sbr.rel (0) target = $region9
    $region8: #{vanilla_forward.1} parent=1 // pred_region
      _
    $region9: #{vanilla_forward.1} parent=1 // pred_fallthru
      _
    // Predicated region
    $region10: #{vanilla_forward.1} parent=1 // pred_check
      _
    $region11: #{vanilla_forward.1} parent=1 // pred_check_branch
      %20 = sbr.rel (0) target = $region13
    $region12: #{vanilla_forward.1} parent=1 // pred_region
      _
    $region13: #{vanilla_forward.1} parent=1 // pred_fallthru
      _
    // Predicated region
    $region14: #{vanilla_forward.1} parent=1 // pred_check
      _
    $region15: #{vanilla_forward.1} parent=1 // pred_check_branch
      %22 = sbr.rel (0) target = $region17
    $region16: #{vanilla_forward.1} parent=1 // pred_region
      _
    $region17: #{vanilla_forward.1} parent=1 // pred_fallthru
      _
    // Predicated region
    $region18: #{vanilla_forward.1} parent=1 // pred_check
      _
    $region19: #{vanilla_forward.1} parent=1 // pred_check_branch
      %24 = sbr.rel (0) target = $region21
    $region20: #{vanilla_forward.1} parent=1 // pred_region
      _
    $region21: #{vanilla_forward.1} parent=1 // pred_fallthru
      _
    // Predicated region
    $region22: #{vanilla_forward.1} parent=1 // pred_check
      _
    $region23: #{vanilla_forward.1} parent=1 // pred_check_branch
      %26 = sbr.rel (0) target = $region25
    $region24: #{vanilla_forward.1} parent=1 // pred_region
      _
    $region25: #{vanilla_forward.1} parent=1 // pred_fallthru
      _
    // Predicated region
    $region26: #{vanilla_forward.1} parent=1 // pred_check
      _
    $region27: #{vanilla_forward.1} parent=1 // pred_check_branch
      %28 = sbr.rel (0) target = $region29
    $region28: #{vanilla_forward.1} parent=1 // pred_region
      _
    $region29: #{vanilla_forward.1} parent=1 // pred_fallthru
      _
    // Predicated region
    $region30: #{vanilla_forward.1} parent=1 // pred_check
      _
    $region31: #{vanilla_forward.1} parent=1 // pred_check_branch
      %30 = sbr.rel (0) target = $region33
    $region32: #{vanilla_forward.1} parent=1 // pred_region
      _
    $region33: #{vanilla_forward.1} parent=1 // pred_fallthru
      _
    // Predicated region
    $region34: #{vanilla_forward.1} parent=1 // pred_check
      _
    $region35: #{vanilla_forward.1} parent=1 // pred_check_branch
      %32 = sbr.rel (0) target = $region37
    $region36: #{vanilla_forward.1} parent=1 // pred_region
      _
    $region37: #{vanilla_forward.1} parent=1 // pred_fallthru
      _
    %v33 = vld [vmem:[%s0] sm:$0xff]
    %v34 = vld [vmem:[%s0 + $0x8] sm:$0xff]
    %v35 = vld [vmem:[%s0 + $0x10] sm:$0xff]
    %v36 = vld [vmem:[%s0 + $0x18] sm:$0xff]
    %v37 = vld [vmem:[%s0 + $0x20] sm:$0xff]
    %v38 = vld [vmem:[%s0 + $0x28] sm:$0xff]
    %v39 = vld [vmem:[%s0 + $0x30] sm:$0xff]
    %v40 = vld [vmem:[%s1] sm:$0xff]
    %v41 = vld [vmem:[%s1 + $0x8] sm:$0xff]
    %v42 = vld [vmem:[%s1 + $0x10] sm:$0xff]
    %v43 = vld [vmem:[%s1 + $0x18] sm:$0xff]
    %v44 = vld [vmem:[%s1 + $0x20] sm:$0xff]
    %v45 = vld [vmem:[%s1 + $0x28] sm:$0xff]
    %v46 = vld [vmem:[%s1 + $0x30] sm:$0xf]
    %v47 = vld [vmem:[%s1 + $0x38] sm:$0xf]
    %v48 = vlaneseq
    %v49 = vshrl.u32 %v48, 7
    %v50 = vadd.s32 %v49, 8
    %v51 = vadd.s32 %v49, 16
    %v52 = vadd.s32 %v49, 24
    %v53 = vadd.s32 %v49, 32
    %v54 = vadd.s32 %v49, 40
    %v55 = vadd.s32 %v49, 48
    %v56 = vlaneseq
    %v57 = vand.u32 %v56, 127
    %v58 = vadd.s32 %v49, 1
    %v59 = vadd.s32 %v50, 1
    %v60 = vadd.s32 %v51, 1
    %v61 = vadd.s32 %v52, 1
    %v62 = vadd.s32 %v53, 1
    %v63 = vadd.s32 %v54, 1
    %v64 = vadd.s32 %v55, 1
    %vm65 = vcmp.eq.s32.totalorder %v57, %v58
    %vm66 = vcmp.eq.s32.totalorder %v57, %v59
    %vm67 = vcmp.eq.s32.totalorder %v57, %v60
    %vm68 = vcmp.eq.s32.totalorder %v57, %v61
    %vm69 = vcmp.eq.s32.totalorder %v57, %v62
    %vm70 = vcmp.eq.s32.totalorder %v57, %v63
    %vm71 = vcmp.eq.s32.totalorder %v57, %v64
    %v72 = vsel %vm65, 1, 0
    %v73 = vsel %vm66, 1, 0
    %v74 = vsel %vm67, 1, 0
    %v75 = vsel %vm68, 1, 0
    %v76 = vsel %vm69, 1, 0
    %v77 = vsel %vm70, 1, 0
    %v78 = vsel %vm71, 1, 0
    %v79 = vcvt.s32.f32 %v72
    %v80 = vcvt.s32.f32 %v73
    %v81 = vcvt.s32.f32 %v74
    %v82 = vcvt.s32.f32 %v75
    %v83 = vcvt.s32.f32 %v76
    %v84 = vcvt.s32.f32 %v77
    %v85 = vcvt.s32.f32 %v78
    %vm86 = vcmask 457728
    %v88 = vsel %vm86, %v79, 0
    %v91 = vsel %vm86, %v80, 0
    %v94 = vsel %vm86, %v81, 0
    %v97 = vsel %vm86, %v82, 0
    %v100 = vsel %vm86, %v83, 0
    %v103 = vsel %vm86, %v84, 0
    %v106 = vsel %vm86, %v85, 0
    %108 = vmatprep.subr.mxu0 0.0
    %109 = vmatpush1.msra.mxu0 %v33
    %110 = vmatprep.subr.mxu0 0.0
    %111 = vmatpush1.msra.mxu0 %v34
    %112 = vmatprep.subr.mxu0 0.0
    %113 = vmatpush1.msra.mxu0 %v35
    %114 = vmatprep.subr.mxu0 0.0
    %115 = vmatpush1.msra.mxu0 %v36
    %116 = vmatprep.subr.mxu0 0.0
    %117 = vmatpush1.msra.mxu0 %v37
    %118 = vmatprep.subr.mxu0 0.0
    %119 = vmatpush1.msra.mxu0 %v38
    %120 = vmatprep.subr.mxu0 0.0
    %121 = vmatpush1.msra.mxu0 %v39
    %122 = vmatprep.subr.mxu0 0.0
    %123 = vmatpush1.msra.mxu0 0.0
    %124 = vmatprep.subr.mxu0 0.0
    %125 = vmatpush1.msra.mxu0 0.0
    %126 = vmatprep.subr.mxu0 0.0
    %127 = vmatpush1.msra.mxu0 0.0
    %128 = vmatprep.subr.mxu0 0.0
    %129 = vmatpush1.msra.mxu0 0.0
    %130 = vmatprep.subr.mxu0 0.0
    %131 = vmatpush1.msra.mxu0 0.0
    %132 = vmatprep.subr.mxu0 0.0
    %133 = vmatpush1.msra.mxu0 0.0
    %134 = vmatprep.subr.mxu0 0.0
    %135 = vmatpush1.msra.mxu0 0.0
    %136 = vmatprep.subr.mxu0 0.0
    %137 = vmatpush1.msra.mxu0 0.0
    %138 = vmatprep.subr.mxu0 0.0
    %139 = vmatpush1.msra.mxu0 0.0
    %140 = vmatprep.subr.mxu0 0.0
    %141 = vmatpush1.msra.mxu0 0.0
    %142 = vmatprep.subr.mxu0 0.0
    %143 = vmatpush1.msra.mxu0 0.0
    %144 = vmatprep.subr.mxu0 0.0
    %145 = vmatpush1.msra.mxu0 0.0
    %146 = vmatprep.subr.mxu0 0.0
    %147 = vmatpush1.msra.mxu0 0.0
    %148 = vmatprep.subr.mxu0 0.0
    %149 = vmatpush1.msra.mxu0 0.0
    %150 = vmatprep.subr.mxu0 0.0
    %151 = vmatpush1.msra.mxu0 0.0
    %152 = vmatprep.subr.mxu0 0.0
    %153 = vmatpush1.msra.mxu0 0.0
    %154 = vmatprep.subr.mxu0 0.0
    %155 = vmatpush1.msra.mxu0 0.0
    %156 = vmatprep.subr.mxu0 0.0
    %157 = vmatpush1.msra.mxu0 0.0
    %158 = vmatprep.subr.mxu0 0.0
    %159 = vmatpush1.msra.mxu0 0.0
    %160 = vmatprep.subr.mxu0 0.0
    %161 = vmatpush1.msra.mxu0 0.0
    %162 = vmatprep.subr.mxu0 0.0
    %163 = vmatpush1.msra.mxu0 0.0
    %164 = vmatprep.subr.mxu0 0.0
    %165 = vmatpush1.msra.mxu0 0.0
    %166 = vmatprep.subr.mxu0 0.0
    %167 = vmatpush1.msra.mxu0 0.0
    %168 = vmatprep.subr.mxu0 0.0
    %169 = vmatpush1.msra.mxu0 0.0
    %170 = vmatprep.subr.mxu0 0.0
    %171 = vmatpush1.msra.mxu0 0.0
    %172 = vmatprep.mubr.f32.mxu0 0.0
    %173 = vmatmul.mubr.f32.gmra.mrb[0].mxu0 %v88
    %v174 = vpop.f32.mrb[0].mxu0
    %v175 = vadd.f32 0.0, %v174
    %v176 = vpop.f32.mrb[0].mxu0
    %177 = vmatprep.mubr.f32.mxu0 0.0
    %178 = vmatmul.mubr.f32.gmra.mrb[0].mxu0 %v91
    %v179 = vpop.f32.mrb[0].mxu0
    %v180 = vadd.f32 0.0, %v179
    %v181 = vpop.f32.mrb[0].mxu0
    %182 = vmatprep.mubr.f32.mxu0 0.0
    %183 = vmatmul.mubr.f32.gmra.mrb[0].mxu0 %v94
    %v184 = vpop.f32.mrb[0].mxu0
    %v185 = vadd.f32 0.0, %v184
    %v186 = vpop.f32.mrb[0].mxu0
    %187 = vmatprep.mubr.f32.mxu0 0.0
    %188 = vmatmul.mubr.f32.gmra.mrb[0].mxu0 %v97
    %v189 = vpop.f32.mrb[0].mxu0
    %v190 = vadd.f32 0.0, %v189
    %v191 = vpop.f32.mrb[0].mxu0
    %192 = vmatprep.mubr.f32.mxu0 0.0
    %193 = vmatmul.mubr.f32.gmra.mrb[0].mxu0 %v100
    %v194 = vpop.f32.mrb[0].mxu0
    %v195 = vadd.f32 0.0, %v194
    %v196 = vpop.f32.mrb[0].mxu0
    %197 = vmatprep.mubr.f32.mxu0 0.0
    %198 = vmatmul.mubr.f32.gmra.mrb[0].mxu0 %v103
    %v199 = vpop.f32.mrb[0].mxu0
    %v200 = vadd.f32 0.0, %v199
    %v201 = vpop.f32.mrb[0].mxu0
    %202 = vmatprep.mubr.f32.mxu0 0.0
    %203 = vmatmul.mubr.f32.gmra.mrb[0].mxu0 %v106
    %v204 = vpop.f32.mrb[0].mxu0
    %v205 = vadd.f32 0.0, %v204
    %v206 = vpop.f32.mrb[0].mxu0
    %207 = vdwg.mxu0
    %s208 = scalar_lea.vmem %s1, 64
    %v209 = vld [vmem:[%s208] sm:$0xff]
    %v210 = vld [vmem:[%s208 + $0x8] sm:$0xff]
    %v211 = vld [vmem:[%s208 + $0x10] sm:$0xff]
    %v212 = vld [vmem:[%s208 + $0x18] sm:$0xff]
    %v213 = vld [vmem:[%s208 + $0x20] sm:$0xff]
    %v214 = vld [vmem:[%s208 + $0x28] sm:$0xff]
    %v215 = vld [vmem:[%s208 + $0x30] sm:$0xf]
    %v216 = vld [vmem:[%s208 + $0x38] sm:$0xf]
    %vm217 = vcmask 228352
    %v219 = vsel %vm217, %v175, 0
    %v222 = vsel %vm217, %v180, 0
    %v225 = vsel %vm217, %v185, 0
    %v228 = vsel %vm217, %v190, 0
    %v231 = vsel %vm217, %v195, 0
    %v234 = vsel %vm217, %v200, 0
    %v237 = vsel %vm217, %v205, 0
    %vm239 = vcmask 1043456
    %v241 = vsel %vm239, %v215, 0
    %v244 = vsel %vm239, %v216, 0
    %246 = vmatprep.subr.mxu0 %v210
    %247 = vmatpush1.msra.mxu0 %v209
    %248 = vmatprep.subr.mxu0 %v212
    %249 = vmatpush1.msra.mxu0 %v211
    %250 = vmatprep.subr.mxu0 %v214
    %251 = vmatpush1.msra.mxu0 %v213
    %252 = vmatprep.subr.mxu0 %v244
    %253 = vmatpush1.msra.mxu0 %v241
    %254 = vmatprep.subr.mxu0 0.0
    %255 = vmatpush1.msra.mxu0 0.0
    %256 = vmatprep.subr.mxu0 0.0
    %257 = vmatpush1.msra.mxu0 0.0
    %258 = vmatprep.subr.mxu0 0.0
    %259 = vmatpush1.msra.mxu0 0.0
    %260 = vmatprep.subr.mxu0 0.0
    %261 = vmatpush1.msra.mxu0 0.0
    %262 = vmatprep.subr.mxu0 0.0
    %263 = vmatpush1.msra.mxu0 0.0
    %264 = vmatprep.subr.mxu0 0.0
    %265 = vmatpush1.msra.mxu0 0.0
    %266 = vmatprep.subr.mxu0 0.0
    %267 = vmatpush1.msra.mxu0 0.0
    %268 = vmatprep.subr.mxu0 0.0
    %269 = vmatpush1.msra.mxu0 0.0
    %270 = vmatprep.subr.mxu0 0.0
    %271 = vmatpush1.msra.mxu0 0.0
    %272 = vmatprep.subr.mxu0 0.0
    %273 = vmatpush1.msra.mxu0 0.0
    %274 = vmatprep.subr.mxu0 0.0
    %275 = vmatpush1.msra.mxu0 0.0
    %276 = vmatprep.subr.mxu0 0.0
    %277 = vmatpush1.msra.mxu0 0.0
    %278 = vmatprep.subr.mxu0 0.0
    %279 = vmatpush1.msra.mxu0 0.0
    %280 = vmatprep.subr.mxu0 0.0
    %281 = vmatpush1.msra.mxu0 0.0
    %282 = vmatprep.subr.mxu0 0.0
    %283 = vmatpush1.msra.mxu0 0.0
    %284 = vmatprep.subr.mxu0 0.0
    %285 = vmatpush1.msra.mxu0 0.0
    %286 = vmatprep.subr.mxu0 0.0
    %287 = vmatpush1.msra.mxu0 0.0
    %288 = vmatprep.subr.mxu0 0.0
    %289 = vmatpush1.msra.mxu0 0.0
    %290 = vmatprep.subr.mxu0 0.0
    %291 = vmatpush1.msra.mxu0 0.0
    %292 = vmatprep.subr.mxu0 0.0
    %293 = vmatpush1.msra.mxu0 0.0
    %294 = vmatprep.subr.mxu0 0.0
    %295 = vmatpush1.msra.mxu0 0.0
    %296 = vmatprep.subr.mxu0 0.0
    %297 = vmatpush1.msra.mxu0 0.0
    %298 = vmatprep.subr.mxu0 0.0
    %299 = vmatpush1.msra.mxu0 0.0
    %300 = vmatprep.subr.mxu0 0.0
    %301 = vmatpush1.msra.mxu0 0.0
    %302 = vmatprep.subr.mxu0 0.0
    %303 = vmatpush1.msra.mxu0 0.0
    %304 = vmatprep.subr.mxu0 0.0
    %305 = vmatpush1.msra.mxu0 0.0
    %306 = vmatprep.subr.mxu0 0.0
    %307 = vmatpush1.msra.mxu0 0.0
    %308 = vmatprep.subr.mxu0 0.0
    %309 = vmatpush1.msra.mxu0 0.0
    %310 = vmatprep.mubr.f32.mxu0 0.0
    %311 = vmatmul.mubr.f32.gmra.mrb[0].mxu0 %v219
    %v312 = vpop.f32.mrb[0].mxu0
    %v313 = vadd.f32 0.0, %v312
    %v314 = vpop.f32.mrb[0].mxu0
    %v315 = vadd.f32 0.0, %v314
    %316 = vmatprep.mubr.f32.mxu0 0.0
    %317 = vmatmul.mubr.f32.gmra.mrb[0].mxu0 %v222
    %v318 = vpop.f32.mrb[0].mxu0
    %v319 = vadd.f32 0.0, %v318
    %v320 = vpop.f32.mrb[0].mxu0
    %v321 = vadd.f32 0.0, %v320
    %322 = vmatprep.mubr.f32.mxu0 0.0
    %323 = vmatmul.mubr.f32.gmra.mrb[0].mxu0 %v225
    %v324 = vpop.f32.mrb[0].mxu0
    %v325 = vadd.f32 0.0, %v324
    %v326 = vpop.f32.mrb[0].mxu0
    %v327 = vadd.f32 0.0, %v326
    %328 = vmatprep.mubr.f32.mxu0 0.0
    %329 = vmatmul.mubr.f32.gmra.mrb[0].mxu0 %v228
    %v330 = vpop.f32.mrb[0].mxu0
    %v331 = vadd.f32 0.0, %v330
    %v332 = vpop.f32.mrb[0].mxu0
    %v333 = vadd.f32 0.0, %v332
    %334 = vmatprep.mubr.f32.mxu0 0.0
    %335 = vmatmul.mubr.f32.gmra.mrb[0].mxu0 %v231
    %v336 = vpop.f32.mrb[0].mxu0
    %v337 = vadd.f32 0.0, %v336
    %v338 = vpop.f32.mrb[0].mxu0
    %v339 = vadd.f32 0.0, %v338
    %340 = vmatprep.mubr.f32.mxu0 0.0
    %341 = vmatmul.mubr.f32.gmra.mrb[0].mxu0 %v234
    %v342 = vpop.f32.mrb[0].mxu0
    %v343 = vadd.f32 0.0, %v342
    %v344 = vpop.f32.mrb[0].mxu0
    %v345 = vadd.f32 0.0, %v344
    %346 = vmatprep.mubr.f32.mxu0 0.0
    %347 = vmatmul.mubr.f32.gmra.mrb[0].mxu0 %v237
    %v348 = vpop.f32.mrb[0].mxu0
    %v349 = vadd.f32 0.0, %v348
    %v350 = vpop.f32.mrb[0].mxu0
    %v351 = vadd.f32 0.0, %v350
    %352 = vdwg.mxu0
    %v354 = vsel %vm217, %v33, 0
    %v357 = vsel %vm217, %v34, 0
    %v360 = vsel %vm217, %v35, 0
    %v363 = vsel %vm217, %v36, 0
    %v366 = vsel %vm217, %v37, 0
    %v369 = vsel %vm217, %v38, 0
    %v372 = vsel %vm217, %v39, 0
    %v375 = vsel %vm239, %v46, 0
    %v378 = vsel %vm239, %v47, 0
    %380 = vmatprep.subr.mxu0 %v41
    %381 = vmatpush1.msra.mxu0 %v40
    %382 = vmatprep.subr.mxu0 %v43
    %383 = vmatpush1.msra.mxu0 %v42
    %384 = vmatprep.subr.mxu0 %v45
    %385 = vmatpush1.msra.mxu0 %v44
    %386 = vmatprep.subr.mxu0 %v378
    %387 = vmatpush1.msra.mxu0 %v375
    %388 = vmatprep.subr.mxu0 0.0
    %389 = vmatpush1.msra.mxu0 0.0
    %390 = vmatprep.subr.mxu0 0.0
    %391 = vmatpush1.msra.mxu0 0.0
    %392 = vmatprep.subr.mxu0 0.0
    %393 = vmatpush1.msra.mxu0 0.0
    %394 = vmatprep.subr.mxu0 0.0
    %395 = vmatpush1.msra.mxu0 0.0
    %396 = vmatprep.subr.mxu0 0.0
    %397 = vmatpush1.msra.mxu0 0.0
    %398 = vmatprep.subr.mxu0 0.0
    %399 = vmatpush1.msra.mxu0 0.0
    %400 = vmatprep.subr.mxu0 0.0
    %401 = vmatpush1.msra.mxu0 0.0
    %402 = vmatprep.subr.mxu0 0.0
    %403 = vmatpush1.msra.mxu0 0.0
    %404 = vmatprep.subr.mxu0 0.0
    %405 = vmatpush1.msra.mxu0 0.0
    %406 = vmatprep.subr.mxu0 0.0
    %407 = vmatpush1.msra.mxu0 0.0
    %408 = vmatprep.subr.mxu0 0.0
    %409 = vmatpush1.msra.mxu0 0.0
    %410 = vmatprep.subr.mxu0 0.0
    %411 = vmatpush1.msra.mxu0 0.0
    %412 = vmatprep.subr.mxu0 0.0
    %413 = vmatpush1.msra.mxu0 0.0
    %414 = vmatprep.subr.mxu0 0.0
    %415 = vmatpush1.msra.mxu0 0.0
    %416 = vmatprep.subr.mxu0 0.0
    %417 = vmatpush1.msra.mxu0 0.0
    %418 = vmatprep.subr.mxu0 0.0
    %419 = vmatpush1.msra.mxu0 0.0
    %420 = vmatprep.subr.mxu0 0.0
    %421 = vmatpush1.msra.mxu0 0.0
    %422 = vmatprep.subr.mxu0 0.0
    %423 = vmatpush1.msra.mxu0 0.0
    %424 = vmatprep.subr.mxu0 0.0
    %425 = vmatpush1.msra.mxu0 0.0
    %426 = vmatprep.subr.mxu0 0.0
    %427 = vmatpush1.msra.mxu0 0.0
    %428 = vmatprep.subr.mxu0 0.0
    %429 = vmatpush1.msra.mxu0 0.0
    %430 = vmatprep.subr.mxu0 0.0
    %431 = vmatpush1.msra.mxu0 0.0
    %432 = vmatprep.subr.mxu0 0.0
    %433 = vmatpush1.msra.mxu0 0.0
    %434 = vmatprep.subr.mxu0 0.0
    %435 = vmatpush1.msra.mxu0 0.0
    %436 = vmatprep.subr.mxu0 0.0
    %437 = vmatpush1.msra.mxu0 0.0
    %438 = vmatprep.subr.mxu0 0.0
    %439 = vmatpush1.msra.mxu0 0.0
    %440 = vmatprep.subr.mxu0 0.0
    %441 = vmatpush1.msra.mxu0 0.0
    %442 = vmatprep.subr.mxu0 0.0
    %443 = vmatpush1.msra.mxu0 0.0
    %444 = vmatprep.mubr.f32.mxu0 0.0
    %445 = vmatmul.mubr.f32.gmra.mrb[0].mxu0 %v354
    %v446 = vpop.f32.mrb[0].mxu0
    %v447 = vadd.f32 %v313, %v446
    %v448 = vpop.f32.mrb[0].mxu0
    %v449 = vadd.f32 %v315, %v448
    %450 = vmatprep.mubr.f32.mxu0 0.0
    %451 = vmatmul.mubr.f32.gmra.mrb[0].mxu0 %v357
    %v452 = vpop.f32.mrb[0].mxu0
    %v453 = vadd.f32 %v319, %v452
    %v454 = vpop.f32.mrb[0].mxu0
    %v455 = vadd.f32 %v321, %v454
    %456 = vmatprep.mubr.f32.mxu0 0.0
    %457 = vmatmul.mubr.f32.gmra.mrb[0].mxu0 %v360
    %v458 = vpop.f32.mrb[0].mxu0
    %v459 = vadd.f32 %v325, %v458
    %v460 = vpop.f32.mrb[0].mxu0
    %v461 = vadd.f32 %v327, %v460
    %462 = vmatprep.mubr.f32.mxu0 0.0
    %463 = vmatmul.mubr.f32.gmra.mrb[0].mxu0 %v363
    %v464 = vpop.f32.mrb[0].mxu0
    %v465 = vadd.f32 %v331, %v464
    %v466 = vpop.f32.mrb[0].mxu0
    %v467 = vadd.f32 %v333, %v466
    %468 = vmatprep.mubr.f32.mxu0 0.0
    %469 = vmatmul.mubr.f32.gmra.mrb[0].mxu0 %v366
    %v470 = vpop.f32.mrb[0].mxu0
    %v471 = vadd.f32 %v337, %v470
    %v472 = vpop.f32.mrb[0].mxu0
    %v473 = vadd.f32 %v339, %v472
    %474 = vmatprep.mubr.f32.mxu0 0.0
    %475 = vmatmul.mubr.f32.gmra.mrb[0].mxu0 %v369
    %v476 = vpop.f32.mrb[0].mxu0
    %v477 = vadd.f32 %v343, %v476
    %v478 = vpop.f32.mrb[0].mxu0
    %v479 = vadd.f32 %v345, %v478
    %480 = vmatprep.mubr.f32.mxu0 0.0
    %481 = vmatmul.mubr.f32.gmra.mrb[0].mxu0 %v372
    %v482 = vpop.f32.mrb[0].mxu0
    %v483 = vadd.f32 %v349, %v482
    %v484 = vpop.f32.mrb[0].mxu0
    %v485 = vadd.f32 %v351, %v484
    %486 = vdwg.mxu0
    %v487 = vadd.s32 %v49, 2
    %v488 = vadd.s32 %v50, 2
    %v489 = vadd.s32 %v51, 2
    %v490 = vadd.s32 %v52, 2
    %v491 = vadd.s32 %v53, 2
    %v492 = vadd.s32 %v54, 2
    %v493 = vadd.s32 %v55, 2
    %vm494 = vcmp.eq.s32.totalorder %v57, %v487
    %vm495 = vcmp.eq.s32.totalorder %v57, %v488
    %vm496 = vcmp.eq.s32.totalorder %v57, %v489
    %vm497 = vcmp.eq.s32.totalorder %v57, %v490
    %vm498 = vcmp.eq.s32.totalorder %v57, %v491
    %vm499 = vcmp.eq.s32.totalorder %v57, %v492
    %vm500 = vcmp.eq.s32.totalorder %v57, %v493
    %v501 = vsel %vm494, 1, 0
    %v502 = vsel %vm495, 1, 0
    %v503 = vsel %vm496, 1, 0
    %v504 = vsel %vm497, 1, 0
    %v505 = vsel %vm498, 1, 0
    %v506 = vsel %vm499, 1, 0
    %v507 = vsel %vm500, 1, 0
    %v508 = vcvt.s32.f32 %v501
    %v509 = vcvt.s32.f32 %v502
    %v510 = vcvt.s32.f32 %v503
    %v511 = vcvt.s32.f32 %v504
    %v512 = vcvt.s32.f32 %v505
    %v513 = vcvt.s32.f32 %v506
    %v514 = vcvt.s32.f32 %v507
    %v516 = vsel %vm86, %v508, 0
    %v519 = vsel %vm86, %v509, 0
    %v522 = vsel %vm86, %v510, 0
    %v525 = vsel %vm86, %v511, 0
    %v528 = vsel %vm86, %v512, 0
    %v531 = vsel %vm86, %v513, 0
    %v534 = vsel %vm86, %v514, 0
    %536 = vmatprep.subr.mxu0 0.0
    %537 = vmatpush1.msra.mxu0 %v33
    %538 = vmatprep.subr.mxu0 0.0
    %539 = vmatpush1.msra.mxu0 %v34
    %540 = vmatprep.subr.mxu0 0.0
    %541 = vmatpush1.msra.mxu0 %v35
    %542 = vmatprep.subr.mxu0 0.0
    %543 = vmatpush1.msra.mxu0 %v36
    %544 = vmatprep.subr.mxu0 0.0
    %545 = vmatpush1.msra.mxu0 %v37
    %546 = vmatprep.subr.mxu0 0.0
    %547 = vmatpush1.msra.mxu0 %v38
    %548 = vmatprep.subr.mxu0 0.0
    %549 = vmatpush1.msra.mxu0 %v39
    %550 = vmatprep.subr.mxu0 0.0
    %551 = vmatpush1.msra.mxu0 0.0
    %552 = vmatprep.subr.mxu0 0.0
    %553 = vmatpush1.msra.mxu0 0.0
    %554 = vmatprep.subr.mxu0 0.0
    %555 = vmatpush1.msra.mxu0 0.0
    %556 = vmatprep.subr.mxu0 0.0
    %557 = vmatpush1.msra.mxu0 0.0
    %558 = vmatprep.subr.mxu0 0.0
    %559 = vmatpush1.msra.mxu0 0.0
    %560 = vmatprep.subr.mxu0 0.0
    %561 = vmatpush1.msra.mxu0 0.0
    %562 = vmatprep.subr.mxu0 0.0
    %563 = vmatpush1.msra.mxu0 0.0
    %564 = vmatprep.subr.mxu0 0.0
    %565 = vmatpush1.msra.mxu0 0.0
    %566 = vmatprep.subr.mxu0 0.0
    %567 = vmatpush1.msra.mxu0 0.0
    %568 = vmatprep.subr.mxu0 0.0
    %569 = vmatpush1.msra.mxu0 0.0
    %570 = vmatprep.subr.mxu0 0.0
    %571 = vmatpush1.msra.mxu0 0.0
    %572 = vmatprep.subr.mxu0 0.0
    %573 = vmatpush1.msra.mxu0 0.0
    %574 = vmatprep.subr.mxu0 0.0
    %575 = vmatpush1.msra.mxu0 0.0
    %576 = vmatprep.subr.mxu0 0.0
    %577 = vmatpush1.msra.mxu0 0.0
    %578 = vmatprep.subr.mxu0 0.0
    %579 = vmatpush1.msra.mxu0 0.0
    %580 = vmatprep.subr.mxu0 0.0
    %581 = vmatpush1.msra.mxu0 0.0
    %582 = vmatprep.subr.mxu0 0.0
    %583 = vmatpush1.msra.mxu0 0.0
    %584 = vmatprep.subr.mxu0 0.0
    %585 = vmatpush1.msra.mxu0 0.0
    %586 = vmatprep.subr.mxu0 0.0
    %587 = vmatpush1.msra.mxu0 0.0
    %588 = vmatprep.subr.mxu0 0.0
    %589 = vmatpush1.msra.mxu0 0.0
    %590 = vmatprep.subr.mxu0 0.0
    %591 = vmatpush1.msra.mxu0 0.0
    %592 = vmatprep.subr.mxu0 0.0
    %593 = vmatpush1.msra.mxu0 0.0
    %594 = vmatprep.subr.mxu0 0.0
    %595 = vmatpush1.msra.mxu0 0.0
    %596 = vmatprep.subr.mxu0 0.0
    %597 = vmatpush1.msra.mxu0 0.0
    %598 = vmatprep.subr.mxu0 0.0
    %599 = vmatpush1.msra.mxu0 0.0
    %600 = vmatprep.mubr.f32.mxu0 0.0
    %601 = vmatmul.mubr.f32.gmra.mrb[0].mxu0 %v516
    %v602 = vpop.f32.mrb[0].mxu0
    %v603 = vadd.f32 0.0, %v602
    %v604 = vpop.f32.mrb[0].mxu0
    %605 = vmatprep.mubr.f32.mxu0 0.0
    %606 = vmatmul.mubr.f32.gmra.mrb[0].mxu0 %v519
    %v607 = vpop.f32.mrb[0].mxu0
    %v608 = vadd.f32 0.0, %v607
    %v609 = vpop.f32.mrb[0].mxu0
    %610 = vmatprep.mubr.f32.mxu0 0.0
    %611 = vmatmul.mubr.f32.gmra.mrb[0].mxu0 %v522
    %v612 = vpop.f32.mrb[0].mxu0
    %v613 = vadd.f32 0.0, %v612
    %v614 = vpop.f32.mrb[0].mxu0
    %615 = vmatprep.mubr.f32.mxu0 0.0
    %616 = vmatmul.mubr.f32.gmra.mrb[0].mxu0 %v525
    %v617 = vpop.f32.mrb[0].mxu0
    %v618 = vadd.f32 0.0, %v617
    %v619 = vpop.f32.mrb[0].mxu0
    %620 = vmatprep.mubr.f32.mxu0 0.0
    %621 = vmatmul.mubr.f32.gmra.mrb[0].mxu0 %v528
    %v622 = vpop.f32.mrb[0].mxu0
    %v623 = vadd.f32 0.0, %v622
    %v624 = vpop.f32.mrb[0].mxu0
    %625 = vmatprep.mubr.f32.mxu0 0.0
    %626 = vmatmul.mubr.f32.gmra.mrb[0].mxu0 %v531
    %v627 = vpop.f32.mrb[0].mxu0
    %v628 = vadd.f32 0.0, %v627
    %v629 = vpop.f32.mrb[0].mxu0
    %630 = vmatprep.mubr.f32.mxu0 0.0
    %631 = vmatmul.mubr.f32.gmra.mrb[0].mxu0 %v534
    %v632 = vpop.f32.mrb[0].mxu0
    %v633 = vadd.f32 0.0, %v632
    %v634 = vpop.f32.mrb[0].mxu0
    %635 = vdwg.mxu0
    %s636 = scalar_lea.vmem %s1, 128
    %v637 = vld [vmem:[%s636] sm:$0xff]
    %v638 = vld [vmem:[%s636 + $0x8] sm:$0xff]
    %v639 = vld [vmem:[%s636 + $0x10] sm:$0xff]
    %v640 = vld [vmem:[%s636 + $0x18] sm:$0xff]
    %v641 = vld [vmem:[%s636 + $0x20] sm:$0xff]
    %v642 = vld [vmem:[%s636 + $0x28] sm:$0xff]
    %v643 = vld [vmem:[%s636 + $0x30] sm:$0xf]
    %v644 = vld [vmem:[%s636 + $0x38] sm:$0xf]
    %v646 = vsel %vm217, %v603, 0
    %v649 = vsel %vm217, %v608, 0
    %v652 = vsel %vm217, %v613, 0
    %v655 = vsel %vm217, %v618, 0
    %v658 = vsel %vm217, %v623, 0
    %v661 = vsel %vm217, %v628, 0
    %v664 = vsel %vm217, %v633, 0
    %v667 = vsel %vm239, %v643, 0
    %v670 = vsel %vm239, %v644, 0
    %672 = vmatprep.subr.mxu0 %v638
    %673 = vmatpush1.msra.mxu0 %v637
    %674 = vmatprep.subr.mxu0 %v640
    %675 = vmatpush1.msra.mxu0 %v639
    %676 = vmatprep.subr.mxu0 %v642
    %677 = vmatpush1.msra.mxu0 %v641
    %678 = vmatprep.subr.mxu0 %v670
    %679 = vmatpush1.msra.mxu0 %v667
    %680 = vmatprep.subr.mxu0 0.0
    %681 = vmatpush1.msra.mxu0 0.0
    %682 = vmatprep.subr.mxu0 0.0
    %683 = vmatpush1.msra.mxu0 0.0
    %684 = vmatprep.subr.mxu0 0.0
    %685 = vmatpush1.msra.mxu0 0.0
    %686 = vmatprep.subr.mxu0 0.0
    %687 = vmatpush1.msra.mxu0 0.0
    %688 = vmatprep.subr.mxu0 0.0
    %689 = vmatpush1.msra.mxu0 0.0
    %690 = vmatprep.subr.mxu0 0.0
    %691 = vmatpush1.msra.mxu0 0.0
    %692 = vmatprep.subr.mxu0 0.0
    %693 = vmatpush1.msra.mxu0 0.0
    %694 = vmatprep.subr.mxu0 0.0
    %695 = vmatpush1.msra.mxu0 0.0
    %696 = vmatprep.subr.mxu0 0.0
    %697 = vmatpush1.msra.mxu0 0.0
    %698 = vmatprep.subr.mxu0 0.0
    %699 = vmatpush1.msra.mxu0 0.0
    %700 = vmatprep.subr.mxu0 0.0
    %701 = vmatpush1.msra.mxu0 0.0
    %702 = vmatprep.subr.mxu0 0.0
    %703 = vmatpush1.msra.mxu0 0.0
    %704 = vmatprep.subr.mxu0 0.0
    %705 = vmatpush1.msra.mxu0 0.0
    %706 = vmatprep.subr.mxu0 0.0
    %707 = vmatpush1.msra.mxu0 0.0
    %708 = vmatprep.subr.mxu0 0.0
    %709 = vmatpush1.msra.mxu0 0.0
    %710 = vmatprep.subr.mxu0 0.0
    %711 = vmatpush1.msra.mxu0 0.0
    %712 = vmatprep.subr.mxu0 0.0
    %713 = vmatpush1.msra.mxu0 0.0
    %714 = vmatprep.subr.mxu0 0.0
    %715 = vmatpush1.msra.mxu0 0.0
    %716 = vmatprep.subr.mxu0 0.0
    %717 = vmatpush1.msra.mxu0 0.0
    %718 = vmatprep.subr.mxu0 0.0
    %719 = vmatpush1.msra.mxu0 0.0
    %720 = vmatprep.subr.mxu0 0.0
    %721 = vmatpush1.msra.mxu0 0.0
    %722 = vmatprep.subr.mxu0 0.0
    %723 = vmatpush1.msra.mxu0 0.0
    %724 = vmatprep.subr.mxu0 0.0
    %725 = vmatpush1.msra.mxu0 0.0
    %726 = vmatprep.subr.mxu0 0.0
    %727 = vmatpush1.msra.mxu0 0.0
    %728 = vmatprep.subr.mxu0 0.0
    %729 = vmatpush1.msra.mxu0 0.0
    %730 = vmatprep.subr.mxu0 0.0
    %731 = vmatpush1.msra.mxu0 0.0
    %732 = vmatprep.subr.mxu0 0.0
    %733 = vmatpush1.msra.mxu0 0.0
    %734 = vmatprep.subr.mxu0 0.0
    %735 = vmatpush1.msra.mxu0 0.0
    %736 = vmatprep.mubr.f32.mxu0 0.0
    %737 = vmatmul.mubr.f32.gmra.mrb[0].mxu0 %v646
    %v738 = vpop.f32.mrb[0].mxu0
    %v739 = vadd.f32 0.0, %v738
    %v740 = vpop.f32.mrb[0].mxu0
    %v741 = vadd.f32 0.0, %v740
    %742 = vmatprep.mubr.f32.mxu0 0.0
    %743 = vmatmul.mubr.f32.gmra.mrb[0].mxu0 %v649
    %v744 = vpop.f32.mrb[0].mxu0
    %v745 = vadd.f32 0.0, %v744
    %v746 = vpop.f32.mrb[0].mxu0
    %v747 = vadd.f32 0.0, %v746
    %748 = vmatprep.mubr.f32.mxu0 0.0
    %749 = vmatmul.mubr.f32.gmra.mrb[0].mxu0 %v652
    %v750 = vpop.f32.mrb[0].mxu0
    %v751 = vadd.f32 0.0, %v750
    %v752 = vpop.f32.mrb[0].mxu0
    %v753 = vadd.f32 0.0, %v752
    %754 = vmatprep.mubr.f32.mxu0 0.0
    %755 = vmatmul.mubr.f32.gmra.mrb[0].mxu0 %v655
    %v756 = vpop.f32.mrb[0].mxu0
    %v757 = vadd.f32 0.0, %v756
    %v758 = vpop.f32.mrb[0].mxu0
    %v759 = vadd.f32 0.0, %v758
    %760 = vmatprep.mubr.f32.mxu0 0.0
    %761 = vmatmul.mubr.f32.gmra.mrb[0].mxu0 %v658
    %v762 = vpop.f32.mrb[0].mxu0
    %v763 = vadd.f32 0.0, %v762
    %v764 = vpop.f32.mrb[0].mxu0
    %v765 = vadd.f32 0.0, %v764
    %766 = vmatprep.mubr.f32.mxu0 0.0
    %767 = vmatmul.mubr.f32.gmra.mrb[0].mxu0 %v661
    %v768 = vpop.f32.mrb[0].mxu0
    %v769 = vadd.f32 0.0, %v768
    %v770 = vpop.f32.mrb[0].mxu0
    %v771 = vadd.f32 0.0, %v770
    %772 = vmatprep.mubr.f32.mxu0 0.0
    %773 = vmatmul.mubr.f32.gmra.mrb[0].mxu0 %v664
    %v774 = vpop.f32.mrb[0].mxu0
    %v775 = vadd.f32 0.0, %v774
    %v776 = vpop.f32.mrb[0].mxu0
    %v777 = vadd.f32 0.0, %v776
    %778 = vdwg.mxu0
    %v779 = vadd.f32 %v447, %v739
    %v780 = vadd.f32 %v449, %v741
    %v781 = vadd.f32 %v453, %v745
    %v782 = vadd.f32 %v455, %v747
    %v783 = vadd.f32 %v459, %v751
    %v784 = vadd.f32 %v461, %v753
    %v785 = vadd.f32 %v465, %v757
    %v786 = vadd.f32 %v467, %v759
    %v787 = vadd.f32 %v471, %v763
    %v788 = vadd.f32 %v473, %v765
    %v789 = vadd.f32 %v477, %v769
    %v790 = vadd.f32 %v479, %v771
    %v791 = vadd.f32 %v483, %v775
    %v792 = vadd.f32 %v485, %v777
    %v793 = vadd.s32 %v49, 3
    %v794 = vadd.s32 %v50, 3
    %v795 = vadd.s32 %v51, 3
    %v796 = vadd.s32 %v52, 3
    %v797 = vadd.s32 %v53, 3
    %v798 = vadd.s32 %v54, 3
    %v799 = vadd.s32 %v55, 3
    %vm800 = vcmp.eq.s32.totalorder %v57, %v793
    %vm801 = vcmp.eq.s32.totalorder %v57, %v794
    %vm802 = vcmp.eq.s32.totalorder %v57, %v795
    %vm803 = vcmp.eq.s32.totalorder %v57, %v796
    %vm804 = vcmp.eq.s32.totalorder %v57, %v797
    %vm805 = vcmp.eq.s32.totalorder %v57, %v798
    %vm806 = vcmp.eq.s32.totalorder %v57, %v799
    %v807 = vsel %vm800, 1, 0
    %v808 = vsel %vm801, 1, 0
    %v809 = vsel %vm802, 1, 0
    %v810 = vsel %vm803, 1, 0
    %v811 = vsel %vm804, 1, 0
    %v812 = vsel %vm805, 1, 0
    %v813 = vsel %vm806, 1, 0
    %v814 = vcvt.s32.f32 %v807
    %v815 = vcvt.s32.f32 %v808
    %v816 = vcvt.s32.f32 %v809
    %v817 = vcvt.s32.f32 %v810
    %v818 = vcvt.s32.f32 %v811
    %v819 = vcvt.s32.f32 %v812
    %v820 = vcvt.s32.f32 %v813
    %v822 = vsel %vm86, %v814, 0
    %v825 = vsel %vm86, %v815, 0
    %v828 = vsel %vm86, %v816, 0
    %v831 = vsel %vm86, %v817, 0
    %v834 = vsel %vm86, %v818, 0
    %v837 = vsel %vm86, %v819, 0
    %v840 = vsel %vm86, %v820, 0
    %842 = vmatprep.subr.mxu0 0.0
    %843 = vmatpush1.msra.mxu0 %v33
    %844 = vmatprep.subr.mxu0 0.0
    %845 = vmatpush1.msra.mxu0 %v34
    %846 = vmatprep.subr.mxu0 0.0
    %847 = vmatpush1.msra.mxu0 %v35
    %848 = vmatprep.subr.mxu0 0.0
    %849 = vmatpush1.msra.mxu0 %v36
    %850 = vmatprep.subr.mxu0 0.0
    %851 = vmatpush1.msra.mxu0 %v37
    %852 = vmatprep.subr.mxu0 0.0
    %853 = vmatpush1.msra.mxu0 %v38
    %854 = vmatprep.subr.mxu0 0.0
    %855 = vmatpush1.msra.mxu0 %v39
    %856 = vmatprep.subr.mxu0 0.0
    %857 = vmatpush1.msra.mxu0 0.0
    %858 = vmatprep.subr.mxu0 0.0
    %859 = vmatpush1.msra.mxu0 0.0
    %860 = vmatprep.subr.mxu0 0.0
    %861 = vmatpush1.msra.mxu0 0.0
    %862 = vmatprep.subr.mxu0 0.0
    %863 = vmatpush1.msra.mxu0 0.0
    %864 = vmatprep.subr.mxu0 0.0
    %865 = vmatpush1.msra.mxu0 0.0
    %866 = vmatprep.subr.mxu0 0.0
    %867 = vmatpush1.msra.mxu0 0.0
    %868 = vmatprep.subr.mxu0 0.0
    %869 = vmatpush1.msra.mxu0 0.0
    %870 = vmatprep.subr.mxu0 0.0
    %871 = vmatpush1.msra.mxu0 0.0
    %872 = vmatprep.subr.mxu0 0.0
    %873 = vmatpush1.msra.mxu0 0.0
    %874 = vmatprep.subr.mxu0 0.0
    %875 = vmatpush1.msra.mxu0 0.0
    %876 = vmatprep.subr.mxu0 0.0
    %877 = vmatpush1.msra.mxu0 0.0
    %878 = vmatprep.subr.mxu0 0.0
    %879 = vmatpush1.msra.mxu0 0.0
    %880 = vmatprep.subr.mxu0 0.0
    %881 = vmatpush1.msra.mxu0 0.0
    %882 = vmatprep.subr.mxu0 0.0
    %883 = vmatpush1.msra.mxu0 0.0
    %884 = vmatprep.subr.mxu0 0.0
    %885 = vmatpush1.msra.mxu0 0.0
    %886 = vmatprep.subr.mxu0 0.0
    %887 = vmatpush1.msra.mxu0 0.0
    %888 = vmatprep.subr.mxu0 0.0
    %889 = vmatpush1.msra.mxu0 0.0
    %890 = vmatprep.subr.mxu0 0.0
    %891 = vmatpush1.msra.mxu0 0.0
    %892 = vmatprep.subr.mxu0 0.0
    %893 = vmatpush1.msra.mxu0 0.0
    %894 = vmatprep.subr.mxu0 0.0
    %895 = vmatpush1.msra.mxu0 0.0
    %896 = vmatprep.subr.mxu0 0.0
    %897 = vmatpush1.msra.mxu0 0.0
    %898 = vmatprep.subr.mxu0 0.0
    %899 = vmatpush1.msra.mxu0 0.0
    %900 = vmatprep.subr.mxu0 0.0
    %901 = vmatpush1.msra.mxu0 0.0
    %902 = vmatprep.subr.mxu0 0.0
    %903 = vmatpush1.msra.mxu0 0.0
    %904 = vmatprep.subr.mxu0 0.0
    %905 = vmatpush1.msra.mxu0 0.0
    %906 = vmatprep.mubr.f32.mxu0 0.0
    %907 = vmatmul.mubr.f32.gmra.mrb[0].mxu0 %v822
    %v908 = vpop.f32.mrb[0].mxu0
    %v909 = vadd.f32 0.0, %v908
    %v910 = vpop.f32.mrb[0].mxu0
    %911 = vmatprep.mubr.f32.mxu0 0.0
    %912 = vmatmul.mubr.f32.gmra.mrb[0].mxu0 %v825
    %v913 = vpop.f32.mrb[0].mxu0
    %v914 = vadd.f32 0.0, %v913
    %v915 = vpop.f32.mrb[0].mxu0
    %916 = vmatprep.mubr.f32.mxu0 0.0
    %917 = vmatmul.mubr.f32.gmra.mrb[0].mxu0 %v828
    %v918 = vpop.f32.mrb[0].mxu0
    %v919 = vadd.f32 0.0, %v918
    %v920 = vpop.f32.mrb[0].mxu0
    %921 = vmatprep.mubr.f32.mxu0 0.0
    %922 = vmatmul.mubr.f32.gmra.mrb[0].mxu0 %v831
    %v923 = vpop.f32.mrb[0].mxu0
    %v924 = vadd.f32 0.0, %v923
    %v925 = vpop.f32.mrb[0].mxu0
    %926 = vmatprep.mubr.f32.mxu0 0.0
    %927 = vmatmul.mubr.f32.gmra.mrb[0].mxu0 %v834
    %v928 = vpop.f32.mrb[0].mxu0
    %v929 = vadd.f32 0.0, %v928
    %v930 = vpop.f32.mrb[0].mxu0
    %931 = vmatprep.mubr.f32.mxu0 0.0
    %932 = vmatmul.mubr.f32.gmra.mrb[0].mxu0 %v837
    %v933 = vpop.f32.mrb[0].mxu0
    %v934 = vadd.f32 0.0, %v933
    %v935 = vpop.f32.mrb[0].mxu0
    %936 = vmatprep.mubr.f32.mxu0 0.0
    %937 = vmatmul.mubr.f32.gmra.mrb[0].mxu0 %v840
    %v938 = vpop.f32.mrb[0].mxu0
    %v939 = vadd.f32 0.0, %v938
    %v940 = vpop.f32.mrb[0].mxu0
    %941 = vdwg.mxu0
    %s942 = scalar_lea.vmem %s1, 192
    %v943 = vld [vmem:[%s942] sm:$0xff]
    %v944 = vld [vmem:[%s942 + $0x8] sm:$0xff]
    %v945 = vld [vmem:[%s942 + $0x10] sm:$0xff]
    %v946 = vld [vmem:[%s942 + $0x18] sm:$0xff]
    %v947 = vld [vmem:[%s942 + $0x20] sm:$0xff]
    %v948 = vld [vmem:[%s942 + $0x28] sm:$0xff]
    %v949 = vld [vmem:[%s942 + $0x30] sm:$0xf]
    %v950 = vld [vmem:[%s942 + $0x38] sm:$0xf]
    %v952 = vsel %vm217, %v909, 0
    %v955 = vsel %vm217, %v914, 0
    %v958 = vsel %vm217, %v919, 0
    %v961 = vsel %vm217, %v924, 0
    %v964 = vsel %vm217, %v929, 0
    %v967 = vsel %vm217, %v934, 0
    %v970 = vsel %vm217, %v939, 0
    %v973 = vsel %vm239, %v949, 0
    %v976 = vsel %vm239, %v950, 0
    %978 = vmatprep.subr.mxu0 %v944
    %979 = vmatpush1.msra.mxu0 %v943
    %980 = vmatprep.subr.mxu0 %v946
    %981 = vmatpush1.msra.mxu0 %v945
    %982 = vmatprep.subr.mxu0 %v948
    %983 = vmatpush1.msra.mxu0 %v947
    %984 = vmatprep.subr.mxu0 %v976
    %985 = vmatpush1.msra.mxu0 %v973
    %986 = vmatprep.subr.mxu0 0.0
    %987 = vmatpush1.msra.mxu0 0.0
    %988 = vmatprep.subr.mxu0 0.0
    %989 = vmatpush1.msra.mxu0 0.0
    %990 = vmatprep.subr.mxu0 0.0
    %991 = vmatpush1.msra.mxu0 0.0
    %992 = vmatprep.subr.mxu0 0.0
    %993 = vmatpush1.msra.mxu0 0.0
    %994 = vmatprep.subr.mxu0 0.0
    %995 = vmatpush1.msra.mxu0 0.0
    %996 = vmatprep.subr.mxu0 0.0
    %997 = vmatpush1.msra.mxu0 0.0
    %998 = vmatprep.subr.mxu0 0.0
    %999 = vmatpush1.msra.mxu0 0.0
    %1000 = vmatprep.subr.mxu0 0.0
    %1001 = vmatpush1.msra.mxu0 0.0
    %1002 = vmatprep.subr.mxu0 0.0
    %1003 = vmatpush1.msra.mxu0 0.0
    %1004 = vmatprep.subr.mxu0 0.0
    %1005 = vmatpush1.msra.mxu0 0.0
    %1006 = vmatprep.subr.mxu0 0.0
    %1007 = vmatpush1.msra.mxu0 0.0
    %1008 = vmatprep.subr.mxu0 0.0
    %1009 = vmatpush1.msra.mxu0 0.0
    %1010 = vmatprep.subr.mxu0 0.0
    %1011 = vmatpush1.msra.mxu0 0.0
    %1012 = vmatprep.subr.mxu0 0.0
    %1013 = vmatpush1.msra.mxu0 0.0
    %1014 = vmatprep.subr.mxu0 0.0
    %1015 = vmatpush1.msra.mxu0 0.0
    %1016 = vmatprep.subr.mxu0 0.0
    %1017 = vmatpush1.msra.mxu0 0.0
    %1018 = vmatprep.subr.mxu0 0.0
    %1019 = vmatpush1.msra.mxu0 0.0
    %1020 = vmatprep.subr.mxu0 0.0
    %1021 = vmatpush1.msra.mxu0 0.0
    %1022 = vmatprep.subr.mxu0 0.0
    %1023 = vmatpush1.msra.mxu0 0.0
    %1024 = vmatprep.subr.mxu0 0.0
    %1025 = vmatpush1.msra.mxu0 0.0
    %1026 = vmatprep.subr.mxu0 0.0
    %1027 = vmatpush1.msra.mxu0 0.0
    %1028 = vmatprep.subr.mxu0 0.0
    %1029 = vmatpush1.msra.mxu0 0.0
    %1030 = vmatprep.subr.mxu0 0.0
    %1031 = vmatpush1.msra.mxu0 0.0
    %1032 = vmatprep.subr.mxu0 0.0
    %1033 = vmatpush1.msra.mxu0 0.0
    %1034 = vmatprep.subr.mxu0 0.0
    %1035 = vmatpush1.msra.mxu0 0.0
    %1036 = vmatprep.subr.mxu0 0.0
    %1037 = vmatpush1.msra.mxu0 0.0
    %1038 = vmatprep.subr.mxu0 0.0
    %1039 = vmatpush1.msra.mxu0 0.0
    %1040 = vmatprep.subr.mxu0 0.0
    %1041 = vmatpush1.msra.mxu0 0.0
    %1042 = vmatprep.mubr.f32.mxu0 0.0
    %1043 = vmatmul.mubr.f32.gmra.mrb[0].mxu0 %v952
    %v1044 = vpop.f32.mrb[0].mxu0
    %v1045 = vadd.f32 0.0, %v1044
    %v1046 = vpop.f32.mrb[0].mxu0
    %v1047 = vadd.f32 0.0, %v1046
    %1048 = vmatprep.mubr.f32.mxu0 0.0
    %1049 = vmatmul.mubr.f32.gmra.mrb[0].mxu0 %v955
    %v1050 = vpop.f32.mrb[0].mxu0
    %v1051 = vadd.f32 0.0, %v1050
    %v1052 = vpop.f32.mrb[0].mxu0
    %v1053 = vadd.f32 0.0, %v1052
    %1054 = vmatprep.mubr.f32.mxu0 0.0
    %1055 = vmatmul.mubr.f32.gmra.mrb[0].mxu0 %v958
    %v1056 = vpop.f32.mrb[0].mxu0
    %v1057 = vadd.f32 0.0, %v1056
    %v1058 = vpop.f32.mrb[0].mxu0
    %v1059 = vadd.f32 0.0, %v1058
    %1060 = vmatprep.mubr.f32.mxu0 0.0
    %1061 = vmatmul.mubr.f32.gmra.mrb[0].mxu0 %v961
    %v1062 = vpop.f32.mrb[0].mxu0
    %v1063 = vadd.f32 0.0, %v1062
    %v1064 = vpop.f32.mrb[0].mxu0
    %v1065 = vadd.f32 0.0, %v1064
    %1066 = vmatprep.mubr.f32.mxu0 0.0
    %1067 = vmatmul.mubr.f32.gmra.mrb[0].mxu0 %v964
    %v1068 = vpop.f32.mrb[0].mxu0
    %v1069 = vadd.f32 0.0, %v1068
    %v1070 = vpop.f32.mrb[0].mxu0
    %v1071 = vadd.f32 0.0, %v1070
    %1072 = vmatprep.mubr.f32.mxu0 0.0
    %1073 = vmatmul.mubr.f32.gmra.mrb[0].mxu0 %v967
    %v1074 = vpop.f32.mrb[0].mxu0
    %v1075 = vadd.f32 0.0, %v1074
    %v1076 = vpop.f32.mrb[0].mxu0
    %v1077 = vadd.f32 0.0, %v1076
    %1078 = vmatprep.mubr.f32.mxu0 0.0
    %1079 = vmatmul.mubr.f32.gmra.mrb[0].mxu0 %v970
    %v1080 = vpop.f32.mrb[0].mxu0
    %v1081 = vadd.f32 0.0, %v1080
    %v1082 = vpop.f32.mrb[0].mxu0
    %v1083 = vadd.f32 0.0, %v1082
    %1084 = vdwg.mxu0
    %v1085 = vadd.f32 %v779, %v1045
    %v1086 = vadd.f32 %v780, %v1047
    %v1087 = vadd.f32 %v781, %v1051
    %v1088 = vadd.f32 %v782, %v1053
    %v1089 = vadd.f32 %v783, %v1057
    %v1090 = vadd.f32 %v784, %v1059
    %v1091 = vadd.f32 %v785, %v1063
    %v1092 = vadd.f32 %v786, %v1065
    %v1093 = vadd.f32 %v787, %v1069
    %v1094 = vadd.f32 %v788, %v1071
    %v1095 = vadd.f32 %v789, %v1075
    %v1096 = vadd.f32 %v790, %v1077
    %v1097 = vadd.f32 %v791, %v1081
    %v1098 = vadd.f32 %v792, %v1083
    %v1099 = vadd.s32 %v49, 4
    %v1100 = vadd.s32 %v50, 4
    %v1101 = vadd.s32 %v51, 4
    %v1102 = vadd.s32 %v52, 4
    %v1103 = vadd.s32 %v53, 4
    %v1104 = vadd.s32 %v54, 4
    %v1105 = vadd.s32 %v55, 4
    %vm1106 = vcmp.eq.s32.totalorder %v57, %v1099
    %vm1107 = vcmp.eq.s32.totalorder %v57, %v1100
    %vm1108 = vcmp.eq.s32.totalorder %v57, %v1101
    %vm1109 = vcmp.eq.s32.totalorder %v57, %v1102
    %vm1110 = vcmp.eq.s32.totalorder %v57, %v1103
    %vm1111 = vcmp.eq.s32.totalorder %v57, %v1104
    %vm1112 = vcmp.eq.s32.totalorder %v57, %v1105
    %v1113 = vsel %vm1106, 1, 0
    %v1114 = vsel %vm1107, 1, 0
    %v1115 = vsel %vm1108, 1, 0
    %v1116 = vsel %vm1109, 1, 0
    %v1117 = vsel %vm1110, 1, 0
    %v1118 = vsel %vm1111, 1, 0
    %v1119 = vsel %vm1112, 1, 0
    %v1120 = vcvt.s32.f32 %v1113
    %v1121 = vcvt.s32.f32 %v1114
    %v1122 = vcvt.s32.f32 %v1115
    %v1123 = vcvt.s32.f32 %v1116
    %v1124 = vcvt.s32.f32 %v1117
    %v1125 = vcvt.s32.f32 %v1118
    %v1126 = vcvt.s32.f32 %v1119
    %v1128 = vsel %vm86, %v1120, 0
    %v1131 = vsel %vm86, %v1121, 0
    %v1134 = vsel %vm86, %v1122, 0
    %v1137 = vsel %vm86, %v1123, 0
    %v1140 = vsel %vm86, %v1124, 0
    %v1143 = vsel %vm86, %v1125, 0
    %v1146 = vsel %vm86, %v1126, 0
    %1148 = vmatprep.subr.mxu0 0.0
    %1149 = vmatpush1.msra.mxu0 %v33
    %1150 = vmatprep.subr.mxu0 0.0
    %1151 = vmatpush1.msra.mxu0 %v34
    %1152 = vmatprep.subr.mxu0 0.0
    %1153 = vmatpush1.msra.mxu0 %v35
    %1154 = vmatprep.subr.mxu0 0.0
    %1155 = vmatpush1.msra.mxu0 %v36
    %1156 = vmatprep.subr.mxu0 0.0
    %1157 = vmatpush1.msra.mxu0 %v37
    %1158 = vmatprep.subr.mxu0 0.0
    %1159 = vmatpush1.msra.mxu0 %v38
    %1160 = vmatprep.subr.mxu0 0.0
    %1161 = vmatpush1.msra.mxu0 %v39
    %1162 = vmatprep.subr.mxu0 0.0
    %1163 = vmatpush1.msra.mxu0 0.0
    %1164 = vmatprep.subr.mxu0 0.0
    %1165 = vmatpush1.msra.mxu0 0.0
    %1166 = vmatprep.subr.mxu0 0.0
    %1167 = vmatpush1.msra.mxu0 0.0
    %1168 = vmatprep.subr.mxu0 0.0
    %1169 = vmatpush1.msra.mxu0 0.0
    %1170 = vmatprep.subr.mxu0 0.0
    %1171 = vmatpush1.msra.mxu0 0.0
    %1172 = vmatprep.subr.mxu0 0.0
    %1173 = vmatpush1.msra.mxu0 0.0
    %1174 = vmatprep.subr.mxu0 0.0
    %1175 = vmatpush1.msra.mxu0 0.0
    %1176 = vmatprep.subr.mxu0 0.0
    %1177 = vmatpush1.msra.mxu0 0.0
    %1178 = vmatprep.subr.mxu0 0.0
    %1179 = vmatpush1.msra.mxu0 0.0
    %1180 = vmatprep.subr.mxu0 0.0
    %1181 = vmatpush1.msra.mxu0 0.0
    %1182 = vmatprep.subr.mxu0 0.0
    %1183 = vmatpush1.msra.mxu0 0.0
    %1184 = vmatprep.subr.mxu0 0.0
    %1185 = vmatpush1.msra.mxu0 0.0
    %1186 = vmatprep.subr.mxu0 0.0
    %1187 = vmatpush1.msra.mxu0 0.0
    %1188 = vmatprep.subr.mxu0 0.0
    %1189 = vmatpush1.msra.mxu0 0.0
    %1190 = vmatprep.subr.mxu0 0.0
    %1191 = vmatpush1.msra.mxu0 0.0
    %1192 = vmatprep.subr.mxu0 0.0
    %1193 = vmatpush1.msra.mxu0 0.0
    %1194 = vmatprep.subr.mxu0 0.0
    %1195 = vmatpush1.msra.mxu0 0.0
    %1196 = vmatprep.subr.mxu0 0.0
    %1197 = vmatpush1.msra.mxu0 0.0
    %1198 = vmatprep.subr.mxu0 0.0
    %1199 = vmatpush1.msra.mxu0 0.0
    %1200 = vmatprep.subr.mxu0 0.0
    %1201 = vmatpush1.msra.mxu0 0.0
    %1202 = vmatprep.subr.mxu0 0.0
    %1203 = vmatpush1.msra.mxu0 0.0
    %1204 = vmatprep.subr.mxu0 0.0
    %1205 = vmatpush1.msra.mxu0 0.0
    %1206 = vmatprep.subr.mxu0 0.0
    %1207 = vmatpush1.msra.mxu0 0.0
    %1208 = vmatprep.subr.mxu0 0.0
    %1209 = vmatpush1.msra.mxu0 0.0
    %1210 = vmatprep.subr.mxu0 0.0
    %1211 = vmatpush1.msra.mxu0 0.0
    %1212 = vmatprep.mubr.f32.mxu0 0.0
    %1213 = vmatmul.mubr.f32.gmra.mrb[0].mxu0 %v1128
    %v1214 = vpop.f32.mrb[0].mxu0
    %v1215 = vadd.f32 0.0, %v1214
    %v1216 = vpop.f32.mrb[0].mxu0
    %1217 = vmatprep.mubr.f32.mxu0 0.0
    %1218 = vmatmul.mubr.f32.gmra.mrb[0].mxu0 %v1131
    %v1219 = vpop.f32.mrb[0].mxu0
    %v1220 = vadd.f32 0.0, %v1219
    %v1221 = vpop.f32.mrb[0].mxu0
    %1222 = vmatprep.mubr.f32.mxu0 0.0
    %1223 = vmatmul.mubr.f32.gmra.mrb[0].mxu0 %v1134
    %v1224 = vpop.f32.mrb[0].mxu0
    %v1225 = vadd.f32 0.0, %v1224
    %v1226 = vpop.f32.mrb[0].mxu0
    %1227 = vmatprep.mubr.f32.mxu0 0.0
    %1228 = vmatmul.mubr.f32.gmra.mrb[0].mxu0 %v1137
    %v1229 = vpop.f32.mrb[0].mxu0
    %v1230 = vadd.f32 0.0, %v1229
    %v1231 = vpop.f32.mrb[0].mxu0
    %1232 = vmatprep.mubr.f32.mxu0 0.0
    %1233 = vmatmul.mubr.f32.gmra.mrb[0].mxu0 %v1140
    %v1234 = vpop.f32.mrb[0].mxu0
    %v1235 = vadd.f32 0.0, %v1234
    %v1236 = vpop.f32.mrb[0].mxu0
    %1237 = vmatprep.mubr.f32.mxu0 0.0
    %1238 = vmatmul.mubr.f32.gmra.mrb[0].mxu0 %v1143
    %v1239 = vpop.f32.mrb[0].mxu0
    %v1240 = vadd.f32 0.0, %v1239
    %v1241 = vpop.f32.mrb[0].mxu0
    %1242 = vmatprep.mubr.f32.mxu0 0.0
    %1243 = vmatmul.mubr.f32.gmra.mrb[0].mxu0 %v1146
    %v1244 = vpop.f32.mrb[0].mxu0
    %v1245 = vadd.f32 0.0, %v1244
    %v1246 = vpop.f32.mrb[0].mxu0
    %1247 = vdwg.mxu0
    %s1248 = scalar_lea.vmem %s1, 256
    %v1249 = vld [vmem:[%s1248] sm:$0xff]
    %v1250 = vld [vmem:[%s1248 + $0x8] sm:$0xff]
    %v1251 = vld [vmem:[%s1248 + $0x10] sm:$0xff]
    %v1252 = vld [vmem:[%s1248 + $0x18] sm:$0xff]
    %v1253 = vld [vmem:[%s1248 + $0x20] sm:$0xff]
    %v1254 = vld [vmem:[%s1248 + $0x28] sm:$0xff]
    %v1255 = vld [vmem:[%s1248 + $0x30] sm:$0xf]
    %v1256 = vld [vmem:[%s1248 + $0x38] sm:$0xf]
    %v1258 = vsel %vm217, %v1215, 0
    %v1261 = vsel %vm217, %v1220, 0
    %v1264 = vsel %vm217, %v1225, 0
    %v1267 = vsel %vm217, %v1230, 0
    %v1270 = vsel %vm217, %v1235, 0
    %v1273 = vsel %vm217, %v1240, 0
    %v1276 = vsel %vm217, %v1245, 0
    %v1279 = vsel %vm239, %v1255, 0
    %v1282 = vsel %vm239, %v1256, 0
    %1284 = vmatprep.subr.mxu0 %v1250
    %1285 = vmatpush1.msra.mxu0 %v1249
    %1286 = vmatprep.subr.mxu0 %v1252
    %1287 = vmatpush1.msra.mxu0 %v1251
    %1288 = vmatprep.subr.mxu0 %v1254
    %1289 = vmatpush1.msra.mxu0 %v1253
    %1290 = vmatprep.subr.mxu0 %v1282
    %1291 = vmatpush1.msra.mxu0 %v1279
    %1292 = vmatprep.subr.mxu0 0.0
    %1293 = vmatpush1.msra.mxu0 0.0
    %1294 = vmatprep.subr.mxu0 0.0
    %1295 = vmatpush1.msra.mxu0 0.0
    %1296 = vmatprep.subr.mxu0 0.0
    %1297 = vmatpush1.msra.mxu0 0.0
    %1298 = vmatprep.subr.mxu0 0.0
    %1299 = vmatpush1.msra.mxu0 0.0
    %1300 = vmatprep.subr.mxu0 0.0
    %1301 = vmatpush1.msra.mxu0 0.0
    %1302 = vmatprep.subr.mxu0 0.0
    %1303 = vmatpush1.msra.mxu0 0.0
    %1304 = vmatprep.subr.mxu0 0.0
    %1305 = vmatpush1.msra.mxu0 0.0
    %1306 = vmatprep.subr.mxu0 0.0
    %1307 = vmatpush1.msra.mxu0 0.0
    %1308 = vmatprep.subr.mxu0 0.0
    %1309 = vmatpush1.msra.mxu0 0.0
    %1310 = vmatprep.subr.mxu0 0.0
    %1311 = vmatpush1.msra.mxu0 0.0
    %1312 = vmatprep.subr.mxu0 0.0
    %1313 = vmatpush1.msra.mxu0 0.0
    %1314 = vmatprep.subr.mxu0 0.0
    %1315 = vmatpush1.msra.mxu0 0.0
    %1316 = vmatprep.subr.mxu0 0.0
    %1317 = vmatpush1.msra.mxu0 0.0
    %1318 = vmatprep.subr.mxu0 0.0
    %1319 = vmatpush1.msra.mxu0 0.0
    %1320 = vmatprep.subr.mxu0 0.0
    %1321 = vmatpush1.msra.mxu0 0.0
    %1322 = vmatprep.subr.mxu0 0.0
    %1323 = vmatpush1.msra.mxu0 0.0
    %1324 = vmatprep.subr.mxu0 0.0
    %1325 = vmatpush1.msra.mxu0 0.0
    %1326 = vmatprep.subr.mxu0 0.0
    %1327 = vmatpush1.msra.mxu0 0.0
    %1328 = vmatprep.subr.mxu0 0.0
    %1329 = vmatpush1.msra.mxu0 0.0
    %1330 = vmatprep.subr.mxu0 0.0
    %1331 = vmatpush1.msra.mxu0 0.0
    %1332 = vmatprep.subr.mxu0 0.0
    %1333 = vmatpush1.msra.mxu0 0.0
    %1334 = vmatprep.subr.mxu0 0.0
    %1335 = vmatpush1.msra.mxu0 0.0
    %1336 = vmatprep.subr.mxu0 0.0
    %1337 = vmatpush1.msra.mxu0 0.0
    %1338 = vmatprep.subr.mxu0 0.0
    %1339 = vmatpush1.msra.mxu0 0.0
    %1340 = vmatprep.subr.mxu0 0.0
    %1341 = vmatpush1.msra.mxu0 0.0
    %1342 = vmatprep.subr.mxu0 0.0
    %1343 = vmatpush1.msra.mxu0 0.0
    %1344 = vmatprep.subr.mxu0 0.0
    %1345 = vmatpush1.msra.mxu0 0.0
    %1346 = vmatprep.subr.mxu0 0.0
    %1347 = vmatpush1.msra.mxu0 0.0
    %1348 = vmatprep.mubr.f32.mxu0 0.0
    %1349 = vmatmul.mubr.f32.gmra.mrb[0].mxu0 %v1258
    %v1350 = vpop.f32.mrb[0].mxu0
    %v1351 = vadd.f32 0.0, %v1350
    %v1352 = vpop.f32.mrb[0].mxu0
    %v1353 = vadd.f32 0.0, %v1352
    %1354 = vmatprep.mubr.f32.mxu0 0.0
    %1355 = vmatmul.mubr.f32.gmra.mrb[0].mxu0 %v1261
    %v1356 = vpop.f32.mrb[0].mxu0
    %v1357 = vadd.f32 0.0, %v1356
    %v1358 = vpop.f32.mrb[0].mxu0
    %v1359 = vadd.f32 0.0, %v1358
    %1360 = vmatprep.mubr.f32.mxu0 0.0
    %1361 = vmatmul.mubr.f32.gmra.mrb[0].mxu0 %v1264
    %v1362 = vpop.f32.mrb[0].mxu0
    %v1363 = vadd.f32 0.0, %v1362
    %v1364 = vpop.f32.mrb[0].mxu0
    %v1365 = vadd.f32 0.0, %v1364
    %1366 = vmatprep.mubr.f32.mxu0 0.0
    %1367 = vmatmul.mubr.f32.gmra.mrb[0].mxu0 %v1267
    %v1368 = vpop.f32.mrb[0].mxu0
    %v1369 = vadd.f32 0.0, %v1368
    %v1370 = vpop.f32.mrb[0].mxu0
    %v1371 = vadd.f32 0.0, %v1370
    %1372 = vmatprep.mubr.f32.mxu0 0.0
    %1373 = vmatmul.mubr.f32.gmra.mrb[0].mxu0 %v1270
    %v1374 = vpop.f32.mrb[0].mxu0
    %v1375 = vadd.f32 0.0, %v1374
    %v1376 = vpop.f32.mrb[0].mxu0
    %v1377 = vadd.f32 0.0, %v1376
    %1378 = vmatprep.mubr.f32.mxu0 0.0
    %1379 = vmatmul.mubr.f32.gmra.mrb[0].mxu0 %v1273
    %v1380 = vpop.f32.mrb[0].mxu0
    %v1381 = vadd.f32 0.0, %v1380
    %v1382 = vpop.f32.mrb[0].mxu0
    %v1383 = vadd.f32 0.0, %v1382
    %1384 = vmatprep.mubr.f32.mxu0 0.0
    %1385 = vmatmul.mubr.f32.gmra.mrb[0].mxu0 %v1276
    %v1386 = vpop.f32.mrb[0].mxu0
    %v1387 = vadd.f32 0.0, %v1386
    %v1388 = vpop.f32.mrb[0].mxu0
    %v1389 = vadd.f32 0.0, %v1388
    %1390 = vdwg.mxu0
    %v1391 = vadd.f32 %v1085, %v1351
    %v1392 = vadd.f32 %v1086, %v1353
    %v1393 = vadd.f32 %v1087, %v1357
    %v1394 = vadd.f32 %v1088, %v1359
    %v1395 = vadd.f32 %v1089, %v1363
    %v1396 = vadd.f32 %v1090, %v1365
    %v1397 = vadd.f32 %v1091, %v1369
    %v1398 = vadd.f32 %v1092, %v1371
    %v1399 = vadd.f32 %v1093, %v1375
    %v1400 = vadd.f32 %v1094, %v1377
    %v1401 = vadd.f32 %v1095, %v1381
    %v1402 = vadd.f32 %v1096, %v1383
    %v1403 = vadd.f32 %v1097, %v1387
    %v1404 = vadd.f32 %v1098, %v1389
    %v1405 = vld [vmem:[%s2] sm:$0x3]
    %v1407 = vlaneseq
    %v1408 = vshrl.u32 %v1407, 7
    %v1409 = vsub.s32 0, %v1408
    %v1410 = vrot.slane %v1405, %v1409
    %v1411 = vlaneseq
    %v1412 = vshrl.u32 %v1411, 7
    %v1413 = vsub.s32 1, %v1412
    %v1414 = vrot.slane %v1405, %v1413
    %v1417 = vadd.f32 %v1391, %v1410
    %v1418 = vadd.f32 %v1392, %v1414
    %v1419 = vadd.f32 %v1393, %v1410
    %v1420 = vadd.f32 %v1394, %v1414
    %v1421 = vadd.f32 %v1395, %v1410
    %v1422 = vadd.f32 %v1396, %v1414
    %v1423 = vadd.f32 %v1397, %v1410
    %v1424 = vadd.f32 %v1398, %v1414
    %v1425 = vadd.f32 %v1399, %v1410
    %v1426 = vadd.f32 %v1400, %v1414
    %v1427 = vadd.f32 %v1401, %v1410
    %v1428 = vadd.f32 %v1402, %v1414
    %v1429 = vadd.f32 %v1403, %v1410
    %v1430 = vadd.f32 %v1404, %v1414
    %1431 = vmatprep.subr.mxu0 %v1418
    %1432 = vmatpush1.msra.mxu0 %v1417
    %1433 = vmatprep.subr.mxu0 %v1420
    %1434 = vmatpush1.msra.mxu0 %v1419
    %1435 = vmatprep.subr.mxu0 %v1422
    %1436 = vmatpush1.msra.mxu0 %v1421
    %1437 = vmatprep.subr.mxu0 %v1424
    %1438 = vmatpush1.msra.mxu0 %v1423
    %1439 = vmatprep.subr.mxu0 %v1426
    %1440 = vmatpush1.msra.mxu0 %v1425
    %1441 = vmatprep.subr.mxu0 %v1428
    %1442 = vmatpush1.msra.mxu0 %v1427
    %1443 = vmatprep.subr.mxu0 %v1430
    %1444 = vmatpush1.msra.mxu0 %v1429
    %1445 = vmatprep.subr.mxu0 0.0
    %1446 = vmatpush1.msra.mxu0 0.0
    %1447 = vmatprep.subr.mxu0 0.0
    %1448 = vmatpush1.msra.mxu0 0.0
    %1449 = vmatprep.subr.mxu0 0.0
    %1450 = vmatpush1.msra.mxu0 0.0
    %1451 = vmatprep.subr.mxu0 0.0
    %1452 = vmatpush1.msra.mxu0 0.0
    %1453 = vmatprep.subr.mxu0 0.0
    %1454 = vmatpush1.msra.mxu0 0.0
    %1455 = vmatprep.subr.mxu0 0.0
    %1456 = vmatpush1.msra.mxu0 0.0
    %1457 = vmatprep.subr.mxu0 0.0
    %1458 = vmatpush1.msra.mxu0 0.0
    %1459 = vmatprep.subr.mxu0 0.0
    %1460 = vmatpush1.msra.mxu0 0.0
    %1461 = vmatprep.subr.mxu0 0.0
    %1462 = vmatpush1.msra.mxu0 0.0
    %1463 = vmatprep.subr.mxu0 0.0
    %1464 = vmatpush1.msra.mxu0 0.0
    %1465 = vmatprep.subr.mxu0 0.0
    %1466 = vmatpush1.msra.mxu0 0.0
    %1467 = vmatprep.subr.mxu0 0.0
    %1468 = vmatpush1.msra.mxu0 0.0
    %1469 = vmatprep.subr.mxu0 0.0
    %1470 = vmatpush1.msra.mxu0 0.0
    %1471 = vmatprep.subr.mxu0 0.0
    %1472 = vmatpush1.msra.mxu0 0.0
    %1473 = vmatprep.subr.mxu0 0.0
    %1474 = vmatpush1.msra.mxu0 0.0
    %1475 = vmatprep.subr.mxu0 0.0
    %1476 = vmatpush1.msra.mxu0 0.0
    %1477 = vmatprep.subr.mxu0 0.0
    %1478 = vmatpush1.msra.mxu0 0.0
    %1479 = vmatprep.subr.mxu0 0.0
    %1480 = vmatpush1.msra.mxu0 0.0
    %1481 = vmatprep.subr.mxu0 0.0
    %1482 = vmatpush1.msra.mxu0 0.0
    %1483 = vmatprep.subr.mxu0 0.0
    %1484 = vmatpush1.msra.mxu0 0.0
    %1485 = vmatprep.subr.mxu0 0.0
    %1486 = vmatpush1.msra.mxu0 0.0
    %1487 = vmatprep.subr.mxu0 0.0
    %1488 = vmatpush1.msra.mxu0 0.0
    %1489 = vmatprep.subr.mxu0 0.0
    %1490 = vmatpush1.msra.mxu0 0.0
    %1491 = vmatprep.subr.mxu0 0.0
    %1492 = vmatpush1.msra.mxu0 0.0
    %1493 = vmatprep.subr.mxu0 0.0
    %1494 = vmatpush1.msra.mxu0 0.0
    %1495 = vmatprep.mubr.f32.mxu0 0.0
    %1496 = vmatmul.mubr.f32.gmra.mrb[0].mxu0 %v88
    %v1497 = vpop.f32.mrb[0].mxu0
    %v1498 = vadd.f32 0.0, %v1497
    %v1499 = vpop.f32.mrb[0].mxu0
    %v1500 = vadd.f32 0.0, %v1499
    %1501 = vmatprep.mubr.f32.mxu0 0.0
    %1502 = vmatmul.mubr.f32.gmra.mrb[0].mxu0 %v91
    %v1503 = vpop.f32.mrb[0].mxu0
    %v1504 = vadd.f32 0.0, %v1503
    %v1505 = vpop.f32.mrb[0].mxu0
    %v1506 = vadd.f32 0.0, %v1505
    %1507 = vmatprep.mubr.f32.mxu0 0.0
    %1508 = vmatmul.mubr.f32.gmra.mrb[0].mxu0 %v94
    %v1509 = vpop.f32.mrb[0].mxu0
    %v1510 = vadd.f32 0.0, %v1509
    %v1511 = vpop.f32.mrb[0].mxu0
    %v1512 = vadd.f32 0.0, %v1511
    %1513 = vmatprep.mubr.f32.mxu0 0.0
    %1514 = vmatmul.mubr.f32.gmra.mrb[0].mxu0 %v97
    %v1515 = vpop.f32.mrb[0].mxu0
    %v1516 = vadd.f32 0.0, %v1515
    %v1517 = vpop.f32.mrb[0].mxu0
    %v1518 = vadd.f32 0.0, %v1517
    %1519 = vmatprep.mubr.f32.mxu0 0.0
    %1520 = vmatmul.mubr.f32.gmra.mrb[0].mxu0 %v100
    %v1521 = vpop.f32.mrb[0].mxu0
    %v1522 = vadd.f32 0.0, %v1521
    %v1523 = vpop.f32.mrb[0].mxu0
    %v1524 = vadd.f32 0.0, %v1523
    %1525 = vmatprep.mubr.f32.mxu0 0.0
    %1526 = vmatmul.mubr.f32.gmra.mrb[0].mxu0 %v103
    %v1527 = vpop.f32.mrb[0].mxu0
    %v1528 = vadd.f32 0.0, %v1527
    %v1529 = vpop.f32.mrb[0].mxu0
    %v1530 = vadd.f32 0.0, %v1529
    %1531 = vmatprep.mubr.f32.mxu0 0.0
    %1532 = vmatmul.mubr.f32.gmra.mrb[0].mxu0 %v106
    %v1533 = vpop.f32.mrb[0].mxu0
    %v1534 = vadd.f32 0.0, %v1533
    %v1535 = vpop.f32.mrb[0].mxu0
    %v1536 = vadd.f32 0.0, %v1535
    %1537 = vdwg.mxu0
    %v1538 = vmax.f32 %v1417, %v1498
    %v1539 = vmax.f32 %v1418, %v1500
    %v1540 = vmax.f32 %v1419, %v1504
    %v1541 = vmax.f32 %v1420, %v1506
    %v1542 = vmax.f32 %v1421, %v1510
    %v1543 = vmax.f32 %v1422, %v1512
    %v1544 = vmax.f32 %v1423, %v1516
    %v1545 = vmax.f32 %v1424, %v1518
    %v1546 = vmax.f32 %v1425, %v1522
    %v1547 = vmax.f32 %v1426, %v1524
    %v1548 = vmax.f32 %v1427, %v1528
    %v1549 = vmax.f32 %v1428, %v1530
    %v1550 = vmax.f32 %v1429, %v1534
    %v1551 = vmax.f32 %v1430, %v1536
    %v1552 = vadd.s32 %v49, 56
    %v1553 = vadd.s32 %v49, 64
    %v1554 = vadd.s32 %v49, 72
    %v1555 = vadd.s32 %v49, 80
    %v1556 = vadd.s32 %v49, 88
    %v1557 = vadd.s32 %v49, 96
    %v1558 = vadd.s32 %v49, 104
    %v1559 = vadd.s32 %v49, 112
    %v1560 = vadd.s32 %v49, 120
    %v1561 = vadd.s32 %v49, 128
    %v1562 = vadd.s32 %v49, 136
    %v1563 = vadd.s32 %v49, 144
    %v1564 = vadd.s32 %v49, 152
    %v1565 = vadd.s32 %v49, 160
    %v1566 = vadd.s32 %v49, 168
    %v1567 = vadd.s32 %v49, 176
    %v1568 = vadd.s32 %v49, 184
    %v1569 = vadd.s32 %v49, 192
    %v1570 = vadd.s32 %v49, 200
    %v1571 = vadd.s32 %v49, 208
    %v1572 = vadd.s32 %v49, 216
    %v1573 = vadd.s32 %v49, 224
    %v1574 = vadd.s32 %v49, 232
    %v1575 = vadd.s32 %v57, 128
    %v1576 = vadd.s32 %v57, 1
    %v1577 = vadd.s32 %v1575, 1
    %vm1578 = vcmp.eq.s32.totalorder %v49, %v1576
    %vm1579 = vcmp.eq.s32.totalorder %v49, %v1577
    %vm1580 = vcmp.eq.s32.totalorder %v50, %v1576
    %vm1581 = vcmp.eq.s32.totalorder %v50, %v1577
    %vm1582 = vcmp.eq.s32.totalorder %v51, %v1576
    %vm1583 = vcmp.eq.s32.totalorder %v51, %v1577
    %vm1584 = vcmp.eq.s32.totalorder %v52, %v1576
    %vm1585 = vcmp.eq.s32.totalorder %v52, %v1577
    %vm1586 = vcmp.eq.s32.totalorder %v53, %v1576
    %vm1587 = vcmp.eq.s32.totalorder %v53, %v1577
    %vm1588 = vcmp.eq.s32.totalorder %v54, %v1576
    %vm1589 = vcmp.eq.s32.totalorder %v54, %v1577
    %vm1590 = vcmp.eq.s32.totalorder %v55, %v1576
    %vm1591 = vcmp.eq.s32.totalorder %v55, %v1577
    %vm1592 = vcmp.eq.s32.totalorder %v1552, %v1576
    %vm1593 = vcmp.eq.s32.totalorder %v1552, %v1577
    %vm1594 = vcmp.eq.s32.totalorder %v1553, %v1576
    %vm1595 = vcmp.eq.s32.totalorder %v1553, %v1577
    %vm1596 = vcmp.eq.s32.totalorder %v1554, %v1576
    %vm1597 = vcmp.eq.s32.totalorder %v1554, %v1577
    %vm1598 = vcmp.eq.s32.totalorder %v1555, %v1576
    %vm1599 = vcmp.eq.s32.totalorder %v1555, %v1577
    %vm1600 = vcmp.eq.s32.totalorder %v1556, %v1576
    %vm1601 = vcmp.eq.s32.totalorder %v1556, %v1577
    %vm1602 = vcmp.eq.s32.totalorder %v1557, %v1576
    %vm1603 = vcmp.eq.s32.totalorder %v1557, %v1577
    %vm1604 = vcmp.eq.s32.totalorder %v1558, %v1576
    %vm1605 = vcmp.eq.s32.totalorder %v1558, %v1577
    %vm1606 = vcmp.eq.s32.totalorder %v1559, %v1576
    %vm1607 = vcmp.eq.s32.totalorder %v1559, %v1577
    %vm1608 = vcmp.eq.s32.totalorder %v1560, %v1576
    %vm1609 = vcmp.eq.s32.totalorder %v1560, %v1577
    %vm1610 = vcmp.eq.s32.totalorder %v1561, %v1576
    %vm1611 = vcmp.eq.s32.totalorder %v1561, %v1577
    %vm1612 = vcmp.eq.s32.totalorder %v1562, %v1576
    %vm1613 = vcmp.eq.s32.totalorder %v1562, %v1577
    %vm1614 = vcmp.eq.s32.totalorder %v1563, %v1576
    %vm1615 = vcmp.eq.s32.totalorder %v1563, %v1577
    %vm1616 = vcmp.eq.s32.totalorder %v1564, %v1576
    %vm1617 = vcmp.eq.s32.totalorder %v1564, %v1577
    %vm1618 = vcmp.eq.s32.totalorder %v1565, %v1576
    %vm1619 = vcmp.eq.s32.totalorder %v1565, %v1577
    %vm1620 = vcmp.eq.s32.totalorder %v1566, %v1576
    %vm1621 = vcmp.eq.s32.totalorder %v1566, %v1577
    %vm1622 = vcmp.eq.s32.totalorder %v1567, %v1576
    %vm1623 = vcmp.eq.s32.totalorder %v1567, %v1577
    %vm1624 = vcmp.eq.s32.totalorder %v1568, %v1576
    %vm1625 = vcmp.eq.s32.totalorder %v1568, %v1577
    %vm1626 = vcmp.eq.s32.totalorder %v1569, %v1576
    %vm1627 = vcmp.eq.s32.totalorder %v1569, %v1577
    %vm1628 = vcmp.eq.s32.totalorder %v1570, %v1576
    %vm1629 = vcmp.eq.s32.totalorder %v1570, %v1577
    %vm1630 = vcmp.eq.s32.totalorder %v1571, %v1576
    %vm1631 = vcmp.eq.s32.totalorder %v1571, %v1577
    %vm1632 = vcmp.eq.s32.totalorder %v1572, %v1576
    %vm1633 = vcmp.eq.s32.totalorder %v1572, %v1577
    %vm1634 = vcmp.eq.s32.totalorder %v1573, %v1576
    %vm1635 = vcmp.eq.s32.totalorder %v1573, %v1577
    %vm1636 = vcmp.eq.s32.totalorder %v1574, %v1576
    %vm1637 = vcmp.eq.s32.totalorder %v1574, %v1577
    %v1638 = vsel %vm1578, 1, 0
    %v1639 = vsel %vm1579, 1, 0
    %v1640 = vsel %vm1580, 1, 0
    %v1641 = vsel %vm1581, 1, 0
    %v1642 = vsel %vm1582, 1, 0
    %v1643 = vsel %vm1583, 1, 0
    %v1644 = vsel %vm1584, 1, 0
    %v1645 = vsel %vm1585, 1, 0
    %v1646 = vsel %vm1586, 1, 0
    %v1647 = vsel %vm1587, 1, 0
    %v1648 = vsel %vm1588, 1, 0
    %v1649 = vsel %vm1589, 1, 0
    %v1650 = vsel %vm1590, 1, 0
    %v1651 = vsel %vm1591, 1, 0
    %v1652 = vsel %vm1592, 1, 0
    %v1653 = vsel %vm1593, 1, 0
    %v1654 = vsel %vm1594, 1, 0
    %v1655 = vsel %vm1595, 1, 0
    %v1656 = vsel %vm1596, 1, 0
    %v1657 = vsel %vm1597, 1, 0
    %v1658 = vsel %vm1598, 1, 0
    %v1659 = vsel %vm1599, 1, 0
    %v1660 = vsel %vm1600, 1, 0
    %v1661 = vsel %vm1601, 1, 0
    %v1662 = vsel %vm1602, 1, 0
    %v1663 = vsel %vm1603, 1, 0
    %v1664 = vsel %vm1604, 1, 0
    %v1665 = vsel %vm1605, 1, 0
    %v1666 = vsel %vm1606, 1, 0
    %v1667 = vsel %vm1607, 1, 0
    %v1668 = vsel %vm1608, 1, 0
    %v1669 = vsel %vm1609, 1, 0
    %v1670 = vsel %vm1610, 1, 0
    %v1671 = vsel %vm1611, 1, 0
    %v1672 = vsel %vm1612, 1, 0
    %v1673 = vsel %vm1613, 1, 0
    %v1674 = vsel %vm1614, 1, 0
    %v1675 = vsel %vm1615, 1, 0
    %v1676 = vsel %vm1616, 1, 0
    %v1677 = vsel %vm1617, 1, 0
    %v1678 = vsel %vm1618, 1, 0
    %v1679 = vsel %vm1619, 1, 0
    %v1680 = vsel %vm1620, 1, 0
    %v1681 = vsel %vm1621, 1, 0
    %v1682 = vsel %vm1622, 1, 0
    %v1683 = vsel %vm1623, 1, 0
    %v1684 = vsel %vm1624, 1, 0
    %v1685 = vsel %vm1625, 1, 0
    %v1686 = vsel %vm1626, 1, 0
    %v1687 = vsel %vm1627, 1, 0
    %v1688 = vsel %vm1628, 1, 0
    %v1689 = vsel %vm1629, 1, 0
    %v1690 = vsel %vm1630, 1, 0
    %v1691 = vsel %vm1631, 1, 0
    %v1692 = vsel %vm1632, 1, 0
    %v1693 = vsel %vm1633, 1, 0
    %v1694 = vsel %vm1634, 1, 0
    %v1695 = vsel %vm1635, 1, 0
    %v1696 = vsel %vm1636, 1, 0
    %v1697 = vsel %vm1637, 1, 0
    %v1698 = vcvt.s32.f32 %v1638
    %v1699 = vcvt.s32.f32 %v1639
    %v1700 = vcvt.s32.f32 %v1640
    %v1701 = vcvt.s32.f32 %v1641
    %v1702 = vcvt.s32.f32 %v1642
    %v1703 = vcvt.s32.f32 %v1643
    %v1704 = vcvt.s32.f32 %v1644
    %v1705 = vcvt.s32.f32 %v1645
    %v1706 = vcvt.s32.f32 %v1646
    %v1707 = vcvt.s32.f32 %v1647
    %v1708 = vcvt.s32.f32 %v1648
    %v1709 = vcvt.s32.f32 %v1649
    %v1710 = vcvt.s32.f32 %v1650
    %v1711 = vcvt.s32.f32 %v1651
    %v1712 = vcvt.s32.f32 %v1652
    %v1713 = vcvt.s32.f32 %v1653
    %v1714 = vcvt.s32.f32 %v1654
    %v1715 = vcvt.s32.f32 %v1655
    %v1716 = vcvt.s32.f32 %v1656
    %v1717 = vcvt.s32.f32 %v1657
    %v1718 = vcvt.s32.f32 %v1658
    %v1719 = vcvt.s32.f32 %v1659
    %v1720 = vcvt.s32.f32 %v1660
    %v1721 = vcvt.s32.f32 %v1661
    %v1722 = vcvt.s32.f32 %v1662
    %v1723 = vcvt.s32.f32 %v1663
    %v1724 = vcvt.s32.f32 %v1664
    %v1725 = vcvt.s32.f32 %v1665
    %v1726 = vcvt.s32.f32 %v1666
    %v1727 = vcvt.s32.f32 %v1667
    %v1728 = vcvt.s32.f32 %v1668
    %v1729 = vcvt.s32.f32 %v1669
    %v1730 = vcvt.s32.f32 %v1670
    %v1731 = vcvt.s32.f32 %v1671
    %v1732 = vcvt.s32.f32 %v1672
    %v1733 = vcvt.s32.f32 %v1673
    %v1734 = vcvt.s32.f32 %v1674
    %v1735 = vcvt.s32.f32 %v1675
    %v1736 = vcvt.s32.f32 %v1676
    %v1737 = vcvt.s32.f32 %v1677
    %v1738 = vcvt.s32.f32 %v1678
    %v1739 = vcvt.s32.f32 %v1679
    %v1740 = vcvt.s32.f32 %v1680
    %v1741 = vcvt.s32.f32 %v1681
    %v1742 = vcvt.s32.f32 %v1682
    %v1743 = vcvt.s32.f32 %v1683
    %v1744 = vcvt.s32.f32 %v1684
    %v1745 = vcvt.s32.f32 %v1685
    %v1746 = vcvt.s32.f32 %v1686
    %v1747 = vcvt.s32.f32 %v1687
    %v1748 = vcvt.s32.f32 %v1688
    %v1749 = vcvt.s32.f32 %v1689
    %v1750 = vcvt.s32.f32 %v1690
    %v1751 = vcvt.s32.f32 %v1691
    %v1752 = vcvt.s32.f32 %v1692
    %v1753 = vcvt.s32.f32 %v1693
    %v1754 = vcvt.s32.f32 %v1694
    %v1755 = vcvt.s32.f32 %v1695
    %v1756 = vcvt.s32.f32 %v1696
    %v1757 = vcvt.s32.f32 %v1697
    %vm1758 = vcmask 916480
    %v1760 = vsel %vm1758, %v1539, 0
    %v1763 = vsel %vm1758, %v1541, 0
    %v1766 = vsel %vm1758, %v1543, 0
    %v1769 = vsel %vm1758, %v1545, 0
    %v1772 = vsel %vm1758, %v1547, 0
    %v1775 = vsel %vm1758, %v1549, 0
    %v1778 = vsel %vm1758, %v1551, 0
    %1780 = vmatprep.subr.mxu0 %v1699
    %1781 = vmatpush1.msra.mxu0 %v1698
    %1782 = vmatprep.subr.mxu0 %v1701
    %1783 = vmatpush1.msra.mxu0 %v1700
    %1784 = vmatprep.subr.mxu0 %v1703
    %1785 = vmatpush1.msra.mxu0 %v1702
    %1786 = vmatprep.subr.mxu0 %v1705
    %1787 = vmatpush1.msra.mxu0 %v1704
    %1788 = vmatprep.subr.mxu0 %v1707
    %1789 = vmatpush1.msra.mxu0 %v1706
    %1790 = vmatprep.subr.mxu0 %v1709
    %1791 = vmatpush1.msra.mxu0 %v1708
    %1792 = vmatprep.subr.mxu0 %v1711
    %1793 = vmatpush1.msra.mxu0 %v1710
    %1794 = vmatprep.subr.mxu0 %v1713
    %1795 = vmatpush1.msra.mxu0 %v1712
    %1796 = vmatprep.subr.mxu0 %v1715
    %1797 = vmatpush1.msra.mxu0 %v1714
    %1798 = vmatprep.subr.mxu0 %v1717
    %1799 = vmatpush1.msra.mxu0 %v1716
    %1800 = vmatprep.subr.mxu0 %v1719
    %1801 = vmatpush1.msra.mxu0 %v1718
    %1802 = vmatprep.subr.mxu0 %v1721
    %1803 = vmatpush1.msra.mxu0 %v1720
    %1804 = vmatprep.subr.mxu0 %v1723
    %1805 = vmatpush1.msra.mxu0 %v1722
    %1806 = vmatprep.subr.mxu0 %v1725
    %1807 = vmatpush1.msra.mxu0 %v1724
    %1808 = vmatprep.subr.mxu0 %v1727
    %1809 = vmatpush1.msra.mxu0 %v1726
    %1810 = vmatprep.subr.mxu0 %v1729
    %1811 = vmatpush1.msra.mxu0 %v1728
    %1812 = vmatprep.subr.mxu0 %v1731
    %1813 = vmatpush1.msra.mxu0 %v1730
    %1814 = vmatprep.subr.mxu0 %v1733
    %1815 = vmatpush1.msra.mxu0 %v1732
    %1816 = vmatprep.subr.mxu0 %v1735
    %1817 = vmatpush1.msra.mxu0 %v1734
    %1818 = vmatprep.subr.mxu0 %v1737
    %1819 = vmatpush1.msra.mxu0 %v1736
    %1820 = vmatprep.subr.mxu0 %v1739
    %1821 = vmatpush1.msra.mxu0 %v1738
    %1822 = vmatprep.subr.mxu0 %v1741
    %1823 = vmatpush1.msra.mxu0 %v1740
    %1824 = vmatprep.subr.mxu0 %v1743
    %1825 = vmatpush1.msra.mxu0 %v1742
    %1826 = vmatprep.subr.mxu0 %v1745
    %1827 = vmatpush1.msra.mxu0 %v1744
    %1828 = vmatprep.subr.mxu0 %v1747
    %1829 = vmatpush1.msra.mxu0 %v1746
    %1830 = vmatprep.subr.mxu0 %v1749
    %1831 = vmatpush1.msra.mxu0 %v1748
    %1832 = vmatprep.subr.mxu0 %v1751
    %1833 = vmatpush1.msra.mxu0 %v1750
    %1834 = vmatprep.subr.mxu0 %v1753
    %1835 = vmatpush1.msra.mxu0 %v1752
    %1836 = vmatprep.subr.mxu0 %v1755
    %1837 = vmatpush1.msra.mxu0 %v1754
    %1838 = vmatprep.subr.mxu0 %v1757
    %1839 = vmatpush1.msra.mxu0 %v1756
    %1840 = vmatprep.subr.mxu0 0.0
    %1841 = vmatpush1.msra.mxu0 0.0
    %1842 = vmatprep.subr.mxu0 0.0
    %1843 = vmatpush1.msra.mxu0 0.0
    %1844 = vmatprep.mubr.f32.mxu0 %v1760
    %1845 = vmatmul.mubr.f32.gmra.mrb[0].mxu0 %v1538
    %v1846 = vpop.f32.mrb[0].mxu0
    %v1847 = vadd.f32 0.0, %v1846
    %v1848 = vpop.f32.mrb[0].mxu0
    %v1849 = vadd.f32 0.0, %v1848
    %1850 = vmatprep.mubr.f32.mxu0 %v1763
    %1851 = vmatmul.mubr.f32.gmra.mrb[0].mxu0 %v1540
    %v1852 = vpop.f32.mrb[0].mxu0
    %v1853 = vadd.f32 0.0, %v1852
    %v1854 = vpop.f32.mrb[0].mxu0
    %v1855 = vadd.f32 0.0, %v1854
    %1856 = vmatprep.mubr.f32.mxu0 %v1766
    %1857 = vmatmul.mubr.f32.gmra.mrb[0].mxu0 %v1542
    %v1858 = vpop.f32.mrb[0].mxu0
    %v1859 = vadd.f32 0.0, %v1858
    %v1860 = vpop.f32.mrb[0].mxu0
    %v1861 = vadd.f32 0.0, %v1860
    %1862 = vmatprep.mubr.f32.mxu0 %v1769
    %1863 = vmatmul.mubr.f32.gmra.mrb[0].mxu0 %v1544
    %v1864 = vpop.f32.mrb[0].mxu0
    %v1865 = vadd.f32 0.0, %v1864
    %v1866 = vpop.f32.mrb[0].mxu0
    %v1867 = vadd.f32 0.0, %v1866
    %1868 = vmatprep.mubr.f32.mxu0 %v1772
    %1869 = vmatmul.mubr.f32.gmra.mrb[0].mxu0 %v1546
    %v1870 = vpop.f32.mrb[0].mxu0
    %v1871 = vadd.f32 0.0, %v1870
    %v1872 = vpop.f32.mrb[0].mxu0
    %v1873 = vadd.f32 0.0, %v1872
    %1874 = vmatprep.mubr.f32.mxu0 %v1775
    %1875 = vmatmul.mubr.f32.gmra.mrb[0].mxu0 %v1548
    %v1876 = vpop.f32.mrb[0].mxu0
    %v1877 = vadd.f32 0.0, %v1876
    %v1878 = vpop.f32.mrb[0].mxu0
    %v1879 = vadd.f32 0.0, %v1878
    %1880 = vmatprep.mubr.f32.mxu0 %v1778
    %1881 = vmatmul.mubr.f32.gmra.mrb[0].mxu0 %v1550
    %v1882 = vpop.f32.mrb[0].mxu0
    %v1883 = vadd.f32 0.0, %v1882
    %v1884 = vpop.f32.mrb[0].mxu0
    %v1885 = vadd.f32 0.0, %v1884
    %1886 = vdwg.mxu0
    %v1887 = vmax.f32 %v1538, %v1847
    %v1888 = vmax.f32 %v1539, %v1849
    %v1889 = vmax.f32 %v1540, %v1853
    %v1890 = vmax.f32 %v1541, %v1855
    %v1891 = vmax.f32 %v1542, %v1859
    %v1892 = vmax.f32 %v1543, %v1861
    %v1893 = vmax.f32 %v1544, %v1865
    %v1894 = vmax.f32 %v1545, %v1867
    %v1895 = vmax.f32 %v1546, %v1871
    %v1896 = vmax.f32 %v1547, %v1873
    %v1897 = vmax.f32 %v1548, %v1877
    %v1898 = vmax.f32 %v1549, %v1879
    %v1899 = vmax.f32 %v1550, %v1883
    %v1900 = vmax.f32 %v1551, %v1885
    %v1901 = vmax.f32 %v1887, 0.0
    %v1902 = vmax.f32 %v1888, 0.0
    %v1903 = vmax.f32 %v1889, 0.0
    %v1904 = vmax.f32 %v1890, 0.0
    %v1905 = vmax.f32 %v1891, 0.0
    %v1906 = vmax.f32 %v1892, 0.0
    %v1907 = vmax.f32 %v1893, 0.0
    %v1908 = vmax.f32 %v1894, 0.0
    %v1909 = vmax.f32 %v1895, 0.0
    %v1910 = vmax.f32 %v1896, 0.0
    %v1911 = vmax.f32 %v1897, 0.0
    %v1912 = vmax.f32 %v1898, 0.0
    %v1913 = vmax.f32 %v1899, 0.0
    %v1914 = vmax.f32 %v1900, 0.0
    %v1915 = vld [vmem:[%s3] sm:$0xff]
    %v1916 = vld [vmem:[%s3 + $0x8] sm:$0xff]
    %v1917 = vld [vmem:[%s3 + $0x10] sm:$0xff]
    %v1918 = vld [vmem:[%s3 + $0x18] sm:$0xff]
    %v1919 = vld [vmem:[%s3 + $0x20] sm:$0xff]
    %v1920 = vld [vmem:[%s3 + $0x28] sm:$0xff]
    %v1921 = vld [vmem:[%s3 + $0x30] sm:$0xff]
    %v1922 = vld [vmem:[%s3 + $0x38] sm:$0xff]
    %v1923 = vld [vmem:[%s3 + $0x40] sm:$0xff]
    %v1924 = vld [vmem:[%s3 + $0x48] sm:$0xff]
    %v1925 = vld [vmem:[%s3 + $0x50] sm:$0xff]
    %v1926 = vld [vmem:[%s3 + $0x58] sm:$0xff]
    %v1927 = vld [vmem:[%s3 + $0x60] sm:$0xff]
    %v1928 = vld [vmem:[%s3 + $0x68] sm:$0xff]
    %v1929 = vld [vmem:[%s3 + $0x70] sm:$0xff]
    %v1930 = vld [vmem:[%s3 + $0x78] sm:$0xff]
    %v1931 = vld [vmem:[%s3 + $0x80] sm:$0xff]
    %v1932 = vld [vmem:[%s3 + $0x88] sm:$0xff]
    %v1933 = vld [vmem:[%s3 + $0x90] sm:$0xff]
    %v1934 = vld [vmem:[%s3 + $0x98] sm:$0xff]
    %v1935 = vld [vmem:[%s3 + $0xa0] sm:$0xff]
    %v1936 = vld [vmem:[%s3 + $0xa8] sm:$0xff]
    %v1937 = vld [vmem:[%s3 + $0xb0] sm:$0xff]
    %v1938 = vld [vmem:[%s3 + $0xb8] sm:$0xff]
    %v1939 = vld [vmem:[%s3 + $0xc0] sm:$0xff]
    %v1940 = vld [vmem:[%s3 + $0xc8] sm:$0xff]
    %v1941 = vld [vmem:[%s3 + $0xd0] sm:$0xff]
    %v1942 = vld [vmem:[%s3 + $0xd8] sm:$0xff]
    %v1943 = vld [vmem:[%s3 + $0xe0] sm:$0xff]
    %v1944 = vld [vmem:[%s3 + $0xe8] sm:$0xff]
    %v1945 = vld [vmem:[%s3 + $0xf0] sm:$0xff]
    %v1946 = vld [vmem:[%s3 + $0xf8] sm:$0xff]
    %v1947 = vld [vmem:[%s3 + $0x100] sm:$0xff]
    %v1948 = vld [vmem:[%s3 + $0x108] sm:$0xff]
    %v1949 = vld [vmem:[%s3 + $0x110] sm:$0xff]
    %v1950 = vld [vmem:[%s3 + $0x118] sm:$0xff]
    %v1951 = vld [vmem:[%s3 + $0x120] sm:$0xff]
    %v1952 = vld [vmem:[%s3 + $0x128] sm:$0xff]
    %v1953 = vld [vmem:[%s3 + $0x130] sm:$0xff]
    %v1954 = vld [vmem:[%s3 + $0x138] sm:$0xff]
    %v1955 = vld [vmem:[%s3 + $0x140] sm:$0xff]
    %v1956 = vld [vmem:[%s3 + $0x148] sm:$0xff]
    %v1957 = vld [vmem:[%s3 + $0x150] sm:$0xff]
    %v1958 = vld [vmem:[%s3 + $0x158] sm:$0xff]
    %v1959 = vld [vmem:[%s3 + $0x160] sm:$0xff]
    %v1960 = vld [vmem:[%s3 + $0x168] sm:$0xff]
    %v1961 = vld [vmem:[%s3 + $0x170] sm:$0xff]
    %v1962 = vld [vmem:[%s3 + $0x178] sm:$0xff]
    %v1963 = vld [vmem:[%s3 + $0x180] sm:$0xff]
    %v1964 = vld [vmem:[%s3 + $0x188] sm:$0xff]
    %v1965 = vld [vmem:[%s3 + $0x190] sm:$0xff]
    %v1966 = vld [vmem:[%s3 + $0x198] sm:$0xff]
    %v1967 = vld [vmem:[%s3 + $0x1a0] sm:$0xff]
    %v1968 = vld [vmem:[%s3 + $0x1a8] sm:$0xff]
    %v1969 = vld [vmem:[%s3 + $0x1b0] sm:$0xff]
    %v1970 = vld [vmem:[%s3 + $0x1b8] sm:$0xff]
    %v1971 = vld [vmem:[%s3 + $0x1c0] sm:$0xff]
    %v1972 = vld [vmem:[%s3 + $0x1c8] sm:$0xff]
    %v1973 = vld [vmem:[%s3 + $0x1d0] sm:$0xff]
    %v1974 = vld [vmem:[%s3 + $0x1d8] sm:$0xff]
    %1975 = vmatprep.subr.mxu0 %v1902
    %1976 = vmatpush1.msra.mxu0 %v1901
    %1977 = vmatprep.subr.mxu0 %v1904
    %1978 = vmatpush1.msra.mxu0 %v1903
    %1979 = vmatprep.subr.mxu0 %v1906
    %1980 = vmatpush1.msra.mxu0 %v1905
    %1981 = vmatprep.subr.mxu0 %v1908
    %1982 = vmatpush1.msra.mxu0 %v1907
    %1983 = vmatprep.subr.mxu0 %v1910
    %1984 = vmatpush1.msra.mxu0 %v1909
    %1985 = vmatprep.subr.mxu0 %v1912
    %1986 = vmatpush1.msra.mxu0 %v1911
    %1987 = vmatprep.subr.mxu0 %v1914
    %1988 = vmatpush1.msra.mxu0 %v1913
    %1989 = vmatprep.subr.mxu0 0.0
    %1990 = vmatpush1.msra.mxu0 0.0
    %1991 = vmatprep.subr.mxu0 0.0
    %1992 = vmatpush1.msra.mxu0 0.0
    %1993 = vmatprep.subr.mxu0 0.0
    %1994 = vmatpush1.msra.mxu0 0.0
    %1995 = vmatprep.subr.mxu0 0.0
    %1996 = vmatpush1.msra.mxu0 0.0
    %1997 = vmatprep.subr.mxu0 0.0
    %1998 = vmatpush1.msra.mxu0 0.0
    %1999 = vmatprep.subr.mxu0 0.0
    %2000 = vmatpush1.msra.mxu0 0.0
    %2001 = vmatprep.subr.mxu0 0.0
    %2002 = vmatpush1.msra.mxu0 0.0
    %2003 = vmatprep.subr.mxu0 0.0
    %2004 = vmatpush1.msra.mxu0 0.0
    %2005 = vmatprep.subr.mxu0 0.0
    %2006 = vmatpush1.msra.mxu0 0.0
    %2007 = vmatprep.subr.mxu0 0.0
    %2008 = vmatpush1.msra.mxu0 0.0
    %2009 = vmatprep.subr.mxu0 0.0
    %2010 = vmatpush1.msra.mxu0 0.0
    %2011 = vmatprep.subr.mxu0 0.0
    %2012 = vmatpush1.msra.mxu0 0.0
    %2013 = vmatprep.subr.mxu0 0.0
    %2014 = vmatpush1.msra.mxu0 0.0
    %2015 = vmatprep.subr.mxu0 0.0
    %2016 = vmatpush1.msra.mxu0 0.0
    %2017 = vmatprep.subr.mxu0 0.0
    %2018 = vmatpush1.msra.mxu0 0.0
    %2019 = vmatprep.subr.mxu0 0.0
    %2020 = vmatpush1.msra.mxu0 0.0
    %2021 = vmatprep.subr.mxu0 0.0
    %2022 = vmatpush1.msra.mxu0 0.0
    %2023 = vmatprep.subr.mxu0 0.0
    %2024 = vmatpush1.msra.mxu0 0.0
    %2025 = vmatprep.subr.mxu0 0.0
    %2026 = vmatpush1.msra.mxu0 0.0
    %2027 = vmatprep.subr.mxu0 0.0
    %2028 = vmatpush1.msra.mxu0 0.0
    %2029 = vmatprep.subr.mxu0 0.0
    %2030 = vmatpush1.msra.mxu0 0.0
    %2031 = vmatprep.subr.mxu0 0.0
    %2032 = vmatpush1.msra.mxu0 0.0
    %2033 = vmatprep.subr.mxu0 0.0
    %2034 = vmatpush1.msra.mxu0 0.0
    %2035 = vmatprep.subr.mxu0 0.0
    %2036 = vmatpush1.msra.mxu0 0.0
    %2037 = vmatprep.subr.mxu0 0.0
    %2038 = vmatpush1.msra.mxu0 0.0
    %2039 = vmatprep.mubr.f32.mxu0 0.0
    %2040 = vmatmul.mubr.f32.gmra.mrb[0].mxu0 %v516
    %v2041 = vpop.f32.mrb[0].mxu0
    %v2042 = vadd.f32 0.0, %v2041
    %v2043 = vpop.f32.mrb[0].mxu0
    %v2044 = vadd.f32 0.0, %v2043
    %2045 = vmatprep.mubr.f32.mxu0 0.0
    %2046 = vmatmul.mubr.f32.gmra.mrb[0].mxu0 %v519
    %v2047 = vpop.f32.mrb[0].mxu0
    %v2048 = vadd.f32 0.0, %v2047
    %v2049 = vpop.f32.mrb[0].mxu0
    %v2050 = vadd.f32 0.0, %v2049
    %2051 = vmatprep.mubr.f32.mxu0 0.0
    %2052 = vmatmul.mubr.f32.gmra.mrb[0].mxu0 %v522
    %v2053 = vpop.f32.mrb[0].mxu0
    %v2054 = vadd.f32 0.0, %v2053
    %v2055 = vpop.f32.mrb[0].mxu0
    %v2056 = vadd.f32 0.0, %v2055
    %2057 = vmatprep.mubr.f32.mxu0 0.0
    %2058 = vmatmul.mubr.f32.gmra.mrb[0].mxu0 %v525
    %v2059 = vpop.f32.mrb[0].mxu0
    %v2060 = vadd.f32 0.0, %v2059
    %v2061 = vpop.f32.mrb[0].mxu0
    %v2062 = vadd.f32 0.0, %v2061
    %2063 = vmatprep.mubr.f32.mxu0 0.0
    %2064 = vmatmul.mubr.f32.gmra.mrb[0].mxu0 %v528
    %v2065 = vpop.f32.mrb[0].mxu0
    %v2066 = vadd.f32 0.0, %v2065
    %v2067 = vpop.f32.mrb[0].mxu0
    %v2068 = vadd.f32 0.0, %v2067
    %2069 = vmatprep.mubr.f32.mxu0 0.0
    %2070 = vmatmul.mubr.f32.gmra.mrb[0].mxu0 %v531
    %v2071 = vpop.f32.mrb[0].mxu0
    %v2072 = vadd.f32 0.0, %v2071
    %v2073 = vpop.f32.mrb[0].mxu0
    %v2074 = vadd.f32 0.0, %v2073
    %2075 = vmatprep.mubr.f32.mxu0 0.0
    %2076 = vmatmul.mubr.f32.gmra.mrb[0].mxu0 %v534
    %v2077 = vpop.f32.mrb[0].mxu0
    %v2078 = vadd.f32 0.0, %v2077
    %v2079 = vpop.f32.mrb[0].mxu0
    %v2080 = vadd.f32 0.0, %v2079
    %2081 = vdwg.mxu0
    %s2082 = scalar_lea.vmem %s3, 480
    %v2083 = vld [vmem:[%s2082] sm:$0xff]
    %v2084 = vld [vmem:[%s2082 + $0x8] sm:$0xff]
    %v2085 = vld [vmem:[%s2082 + $0x10] sm:$0xff]
    %v2086 = vld [vmem:[%s2082 + $0x18] sm:$0xff]
    %v2087 = vld [vmem:[%s2082 + $0x20] sm:$0xff]
    %v2088 = vld [vmem:[%s2082 + $0x28] sm:$0xff]
    %v2089 = vld [vmem:[%s2082 + $0x30] sm:$0xff]
    %v2090 = vld [vmem:[%s2082 + $0x38] sm:$0xff]
    %v2091 = vld [vmem:[%s2082 + $0x40] sm:$0xff]
    %v2092 = vld [vmem:[%s2082 + $0x48] sm:$0xff]
    %v2093 = vld [vmem:[%s2082 + $0x50] sm:$0xff]
    %v2094 = vld [vmem:[%s2082 + $0x58] sm:$0xff]
    %v2095 = vld [vmem:[%s2082 + $0x60] sm:$0xff]
    %v2096 = vld [vmem:[%s2082 + $0x68] sm:$0xff]
    %v2097 = vld [vmem:[%s2082 + $0x70] sm:$0xff]
    %v2098 = vld [vmem:[%s2082 + $0x78] sm:$0xff]
    %v2099 = vld [vmem:[%s2082 + $0x80] sm:$0xff]
    %v2100 = vld [vmem:[%s2082 + $0x88] sm:$0xff]
    %v2101 = vld [vmem:[%s2082 + $0x90] sm:$0xff]
    %v2102 = vld [vmem:[%s2082 + $0x98] sm:$0xff]
    %v2103 = vld [vmem:[%s2082 + $0xa0] sm:$0xff]
    %v2104 = vld [vmem:[%s2082 + $0xa8] sm:$0xff]
    %v2105 = vld [vmem:[%s2082 + $0xb0] sm:$0xff]
    %v2106 = vld [vmem:[%s2082 + $0xb8] sm:$0xff]
    %v2107 = vld [vmem:[%s2082 + $0xc0] sm:$0xff]
    %v2108 = vld [vmem:[%s2082 + $0xc8] sm:$0xff]
    %v2109 = vld [vmem:[%s2082 + $0xd0] sm:$0xff]
    %v2110 = vld [vmem:[%s2082 + $0xd8] sm:$0xff]
    %v2111 = vld [vmem:[%s2082 + $0xe0] sm:$0xff]
    %v2112 = vld [vmem:[%s2082 + $0xe8] sm:$0xff]
    %v2113 = vld [vmem:[%s2082 + $0xf0] sm:$0xff]
    %v2114 = vld [vmem:[%s2082 + $0xf8] sm:$0xff]
    %v2115 = vld [vmem:[%s2082 + $0x100] sm:$0xff]
    %v2116 = vld [vmem:[%s2082 + $0x108] sm:$0xff]
    %v2117 = vld [vmem:[%s2082 + $0x110] sm:$0xff]
    %v2118 = vld [vmem:[%s2082 + $0x118] sm:$0xff]
    %v2119 = vld [vmem:[%s2082 + $0x120] sm:$0xff]
    %v2120 = vld [vmem:[%s2082 + $0x128] sm:$0xff]
    %v2121 = vld [vmem:[%s2082 + $0x130] sm:$0xff]
    %v2122 = vld [vmem:[%s2082 + $0x138] sm:$0xff]
    %v2123 = vld [vmem:[%s2082 + $0x140] sm:$0xff]
    %v2124 = vld [vmem:[%s2082 + $0x148] sm:$0xff]
    %v2125 = vld [vmem:[%s2082 + $0x150] sm:$0xff]
    %v2126 = vld [vmem:[%s2082 + $0x158] sm:$0xff]
    %v2127 = vld [vmem:[%s2082 + $0x160] sm:$0xff]
    %v2128 = vld [vmem:[%s2082 + $0x168] sm:$0xff]
    %v2129 = vld [vmem:[%s2082 + $0x170] sm:$0xff]
    %v2130 = vld [vmem:[%s2082 + $0x178] sm:$0xff]
    %v2131 = vld [vmem:[%s2082 + $0x180] sm:$0xff]
    %v2132 = vld [vmem:[%s2082 + $0x188] sm:$0xff]
    %v2133 = vld [vmem:[%s2082 + $0x190] sm:$0xff]
    %v2134 = vld [vmem:[%s2082 + $0x198] sm:$0xff]
    %v2135 = vld [vmem:[%s2082 + $0x1a0] sm:$0xff]
    %v2136 = vld [vmem:[%s2082 + $0x1a8] sm:$0xff]
    %v2137 = vld [vmem:[%s2082 + $0x1b0] sm:$0xff]
    %v2138 = vld [vmem:[%s2082 + $0x1b8] sm:$0xff]
    %v2139 = vld [vmem:[%s2082 + $0x1c0] sm:$0xff]
    %v2140 = vld [vmem:[%s2082 + $0x1c8] sm:$0xff]
    %v2141 = vld [vmem:[%s2082 + $0x1d0] sm:$0xff]
    %v2142 = vld [vmem:[%s2082 + $0x1d8] sm:$0xff]
    %v2144 = vsel %vm1758, %v2044, 0
    %v2147 = vsel %vm1758, %v2050, 0
    %v2150 = vsel %vm1758, %v2056, 0
    %v2153 = vsel %vm1758, %v2062, 0
    %v2156 = vsel %vm1758, %v2068, 0
    %v2159 = vsel %vm1758, %v2074, 0
    %v2162 = vsel %vm1758, %v2080, 0
    %2164 = vmatprep.subr.mxu0 %v2084
    %2165 = vmatpush1.msra.mxu0 %v2083
    %2166 = vmatprep.subr.mxu0 %v2086
    %2167 = vmatpush1.msra.mxu0 %v2085
    %2168 = vmatprep.subr.mxu0 %v2088
    %2169 = vmatpush1.msra.mxu0 %v2087
    %2170 = vmatprep.subr.mxu0 %v2090
    %2171 = vmatpush1.msra.mxu0 %v2089
    %2172 = vmatprep.subr.mxu0 %v2092
    %2173 = vmatpush1.msra.mxu0 %v2091
    %2174 = vmatprep.subr.mxu0 %v2094
    %2175 = vmatpush1.msra.mxu0 %v2093
    %2176 = vmatprep.subr.mxu0 %v2096
    %2177 = vmatpush1.msra.mxu0 %v2095
    %2178 = vmatprep.subr.mxu0 %v2098
    %2179 = vmatpush1.msra.mxu0 %v2097
    %2180 = vmatprep.subr.mxu0 %v2100
    %2181 = vmatpush1.msra.mxu0 %v2099
    %2182 = vmatprep.subr.mxu0 %v2102
    %2183 = vmatpush1.msra.mxu0 %v2101
    %2184 = vmatprep.subr.mxu0 %v2104
    %2185 = vmatpush1.msra.mxu0 %v2103
    %2186 = vmatprep.subr.mxu0 %v2106
    %2187 = vmatpush1.msra.mxu0 %v2105
    %2188 = vmatprep.subr.mxu0 %v2108
    %2189 = vmatpush1.msra.mxu0 %v2107
    %2190 = vmatprep.subr.mxu0 %v2110
    %2191 = vmatpush1.msra.mxu0 %v2109
    %2192 = vmatprep.subr.mxu0 %v2112
    %2193 = vmatpush1.msra.mxu0 %v2111
    %2194 = vmatprep.subr.mxu0 %v2114
    %2195 = vmatpush1.msra.mxu0 %v2113
    %2196 = vmatprep.subr.mxu0 %v2116
    %2197 = vmatpush1.msra.mxu0 %v2115
    %2198 = vmatprep.subr.mxu0 %v2118
    %2199 = vmatpush1.msra.mxu0 %v2117
    %2200 = vmatprep.subr.mxu0 %v2120
    %2201 = vmatpush1.msra.mxu0 %v2119
    %2202 = vmatprep.subr.mxu0 %v2122
    %2203 = vmatpush1.msra.mxu0 %v2121
    %2204 = vmatprep.subr.mxu0 %v2124
    %2205 = vmatpush1.msra.mxu0 %v2123
    %2206 = vmatprep.subr.mxu0 %v2126
    %2207 = vmatpush1.msra.mxu0 %v2125
    %2208 = vmatprep.subr.mxu0 %v2128
    %2209 = vmatpush1.msra.mxu0 %v2127
    %2210 = vmatprep.subr.mxu0 %v2130
    %2211 = vmatpush1.msra.mxu0 %v2129
    %2212 = vmatprep.subr.mxu0 %v2132
    %2213 = vmatpush1.msra.mxu0 %v2131
    %2214 = vmatprep.subr.mxu0 %v2134
    %2215 = vmatpush1.msra.mxu0 %v2133
    %2216 = vmatprep.subr.mxu0 %v2136
    %2217 = vmatpush1.msra.mxu0 %v2135
    %2218 = vmatprep.subr.mxu0 %v2138
    %2219 = vmatpush1.msra.mxu0 %v2137
    %2220 = vmatprep.subr.mxu0 %v2140
    %2221 = vmatpush1.msra.mxu0 %v2139
    %2222 = vmatprep.subr.mxu0 %v2142
    %2223 = vmatpush1.msra.mxu0 %v2141
    %2224 = vmatprep.subr.mxu0 0.0
    %2225 = vmatpush1.msra.mxu0 0.0
    %2226 = vmatprep.subr.mxu0 0.0
    %2227 = vmatpush1.msra.mxu0 0.0
    %2228 = vmatprep.mubr.f32.mxu0 %v2144
    %2229 = vmatmul.mubr.f32.gmra.mrb[0].mxu0 %v2042
    %v2230 = vpop.f32.mrb[0].mxu0
    %v2231 = vadd.f32 0.0, %v2230
    %v2232 = vpop.f32.mrb[0].mxu0
    %v2233 = vadd.f32 0.0, %v2232
    %2234 = vmatprep.mubr.f32.mxu0 %v2147
    %2235 = vmatmul.mubr.f32.gmra.mrb[0].mxu0 %v2048
    %v2236 = vpop.f32.mrb[0].mxu0
    %v2237 = vadd.f32 0.0, %v2236
    %v2238 = vpop.f32.mrb[0].mxu0
    %v2239 = vadd.f32 0.0, %v2238
    %2240 = vmatprep.mubr.f32.mxu0 %v2150
    %2241 = vmatmul.mubr.f32.gmra.mrb[0].mxu0 %v2054
    %v2242 = vpop.f32.mrb[0].mxu0
    %v2243 = vadd.f32 0.0, %v2242
    %v2244 = vpop.f32.mrb[0].mxu0
    %v2245 = vadd.f32 0.0, %v2244
    %2246 = vmatprep.mubr.f32.mxu0 %v2153
    %2247 = vmatmul.mubr.f32.gmra.mrb[0].mxu0 %v2060
    %v2248 = vpop.f32.mrb[0].mxu0
    %v2249 = vadd.f32 0.0, %v2248
    %v2250 = vpop.f32.mrb[0].mxu0
    %v2251 = vadd.f32 0.0, %v2250
    %2252 = vmatprep.mubr.f32.mxu0 %v2156
    %2253 = vmatmul.mubr.f32.gmra.mrb[0].mxu0 %v2066
    %v2254 = vpop.f32.mrb[0].mxu0
    %v2255 = vadd.f32 0.0, %v2254
    %v2256 = vpop.f32.mrb[0].mxu0
    %v2257 = vadd.f32 0.0, %v2256
    %2258 = vmatprep.mubr.f32.mxu0 %v2159
    %2259 = vmatmul.mubr.f32.gmra.mrb[0].mxu0 %v2072
    %v2260 = vpop.f32.mrb[0].mxu0
    %v2261 = vadd.f32 0.0, %v2260
    %v2262 = vpop.f32.mrb[0].mxu0
    %v2263 = vadd.f32 0.0, %v2262
    %2264 = vmatprep.mubr.f32.mxu0 %v2162
    %2265 = vmatmul.mubr.f32.gmra.mrb[0].mxu0 %v2078
    %v2266 = vpop.f32.mrb[0].mxu0
    %v2267 = vadd.f32 0.0, %v2266
    %v2268 = vpop.f32.mrb[0].mxu0
    %v2269 = vadd.f32 0.0, %v2268
    %2270 = vdwg.mxu0
    %v2272 = vsel %vm1758, %v1902, 0
    %v2275 = vsel %vm1758, %v1904, 0
    %v2278 = vsel %vm1758, %v1906, 0
    %v2281 = vsel %vm1758, %v1908, 0
    %v2284 = vsel %vm1758, %v1910, 0
    %v2287 = vsel %vm1758, %v1912, 0
    %v2290 = vsel %vm1758, %v1914, 0
    %2292 = vmatprep.subr.mxu0 %v1916
    %2293 = vmatpush1.msra.mxu0 %v1915
    %2294 = vmatprep.subr.mxu0 %v1918
    %2295 = vmatpush1.msra.mxu0 %v1917
    %2296 = vmatprep.subr.mxu0 %v1920
    %2297 = vmatpush1.msra.mxu0 %v1919
    %2298 = vmatprep.subr.mxu0 %v1922
    %2299 = vmatpush1.msra.mxu0 %v1921
    %2300 = vmatprep.subr.mxu0 %v1924
    %2301 = vmatpush1.msra.mxu0 %v1923
    %2302 = vmatprep.subr.mxu0 %v1926
    %2303 = vmatpush1.msra.mxu0 %v1925
    %2304 = vmatprep.subr.mxu0 %v1928
    %2305 = vmatpush1.msra.mxu0 %v1927
    %2306 = vmatprep.subr.mxu0 %v1930
    %2307 = vmatpush1.msra.mxu0 %v1929
    %2308 = vmatprep.subr.mxu0 %v1932
    %2309 = vmatpush1.msra.mxu0 %v1931
    %2310 = vmatprep.subr.mxu0 %v1934
    %2311 = vmatpush1.msra.mxu0 %v1933
    %2312 = vmatprep.subr.mxu0 %v1936
    %2313 = vmatpush1.msra.mxu0 %v1935
    %2314 = vmatprep.subr.mxu0 %v1938
    %2315 = vmatpush1.msra.mxu0 %v1937
    %2316 = vmatprep.subr.mxu0 %v1940
    %2317 = vmatpush1.msra.mxu0 %v1939
    %2318 = vmatprep.subr.mxu0 %v1942
    %2319 = vmatpush1.msra.mxu0 %v1941
    %2320 = vmatprep.subr.mxu0 %v1944
    %2321 = vmatpush1.msra.mxu0 %v1943
    %2322 = vmatprep.subr.mxu0 %v1946
    %2323 = vmatpush1.msra.mxu0 %v1945
    %2324 = vmatprep.subr.mxu0 %v1948
    %2325 = vmatpush1.msra.mxu0 %v1947
    %2326 = vmatprep.subr.mxu0 %v1950
    %2327 = vmatpush1.msra.mxu0 %v1949
    %2328 = vmatprep.subr.mxu0 %v1952
    %2329 = vmatpush1.msra.mxu0 %v1951
    %2330 = vmatprep.subr.mxu0 %v1954
    %2331 = vmatpush1.msra.mxu0 %v1953
    %2332 = vmatprep.subr.mxu0 %v1956
    %2333 = vmatpush1.msra.mxu0 %v1955
    %2334 = vmatprep.subr.mxu0 %v1958
    %2335 = vmatpush1.msra.mxu0 %v1957
    %2336 = vmatprep.subr.mxu0 %v1960
    %2337 = vmatpush1.msra.mxu0 %v1959
    %2338 = vmatprep.subr.mxu0 %v1962
    %2339 = vmatpush1.msra.mxu0 %v1961
    %2340 = vmatprep.subr.mxu0 %v1964
    %2341 = vmatpush1.msra.mxu0 %v1963
    %2342 = vmatprep.subr.mxu0 %v1966
    %2343 = vmatpush1.msra.mxu0 %v1965
    %2344 = vmatprep.subr.mxu0 %v1968
    %2345 = vmatpush1.msra.mxu0 %v1967
    %2346 = vmatprep.subr.mxu0 %v1970
    %2347 = vmatpush1.msra.mxu0 %v1969
    %2348 = vmatprep.subr.mxu0 %v1972
    %2349 = vmatpush1.msra.mxu0 %v1971
    %2350 = vmatprep.subr.mxu0 %v1974
    %2351 = vmatpush1.msra.mxu0 %v1973
    %2352 = vmatprep.subr.mxu0 0.0
    %2353 = vmatpush1.msra.mxu0 0.0
    %2354 = vmatprep.subr.mxu0 0.0
    %2355 = vmatpush1.msra.mxu0 0.0
    %2356 = vmatprep.mubr.f32.mxu0 %v2272
    %2357 = vmatmul.mubr.f32.gmra.mrb[0].mxu0 %v1901
    %v2358 = vpop.f32.mrb[0].mxu0
    %v2359 = vadd.f32 %v2231, %v2358
    %v2360 = vpop.f32.mrb[0].mxu0
    %v2361 = vadd.f32 %v2233, %v2360
    %2362 = vmatprep.mubr.f32.mxu0 %v2275
    %2363 = vmatmul.mubr.f32.gmra.mrb[0].mxu0 %v1903
    %v2364 = vpop.f32.mrb[0].mxu0
    %v2365 = vadd.f32 %v2237, %v2364
    %v2366 = vpop.f32.mrb[0].mxu0
    %v2367 = vadd.f32 %v2239, %v2366
    %2368 = vmatprep.mubr.f32.mxu0 %v2278
    %2369 = vmatmul.mubr.f32.gmra.mrb[0].mxu0 %v1905
    %v2370 = vpop.f32.mrb[0].mxu0
    %v2371 = vadd.f32 %v2243, %v2370
    %v2372 = vpop.f32.mrb[0].mxu0
    %v2373 = vadd.f32 %v2245, %v2372
    %2374 = vmatprep.mubr.f32.mxu0 %v2281
    %2375 = vmatmul.mubr.f32.gmra.mrb[0].mxu0 %v1907
    %v2376 = vpop.f32.mrb[0].mxu0
    %v2377 = vadd.f32 %v2249, %v2376
    %v2378 = vpop.f32.mrb[0].mxu0
    %v2379 = vadd.f32 %v2251, %v2378
    %2380 = vmatprep.mubr.f32.mxu0 %v2284
    %2381 = vmatmul.mubr.f32.gmra.mrb[0].mxu0 %v1909
    %v2382 = vpop.f32.mrb[0].mxu0
    %v2383 = vadd.f32 %v2255, %v2382
    %v2384 = vpop.f32.mrb[0].mxu0
    %v2385 = vadd.f32 %v2257, %v2384
    %2386 = vmatprep.mubr.f32.mxu0 %v2287
    %2387 = vmatmul.mubr.f32.gmra.mrb[0].mxu0 %v1911
    %v2388 = vpop.f32.mrb[0].mxu0
    %v2389 = vadd.f32 %v2261, %v2388
    %v2390 = vpop.f32.mrb[0].mxu0
    %v2391 = vadd.f32 %v2263, %v2390
    %2392 = vmatprep.mubr.f32.mxu0 %v2290
    %2393 = vmatmul.mubr.f32.gmra.mrb[0].mxu0 %v1913
    %v2394 = vpop.f32.mrb[0].mxu0
    %v2395 = vadd.f32 %v2267, %v2394
    %v2396 = vpop.f32.mrb[0].mxu0
    %v2397 = vadd.f32 %v2269, %v2396
    %2398 = vdwg.mxu0
    %2399 = vmatprep.subr.mxu0 %v1902
    %2400 = vmatpush1.msra.mxu0 %v1901
    %2401 = vmatprep.subr.mxu0 %v1904
    %2402 = vmatpush1.msra.mxu0 %v1903
    %2403 = vmatprep.subr.mxu0 %v1906
    %2404 = vmatpush1.msra.mxu0 %v1905
    %2405 = vmatprep.subr.mxu0 %v1908
    %2406 = vmatpush1.msra.mxu0 %v1907
    %2407 = vmatprep.subr.mxu0 %v1910
    %2408 = vmatpush1.msra.mxu0 %v1909
    %2409 = vmatprep.subr.mxu0 %v1912
    %2410 = vmatpush1.msra.mxu0 %v1911
    %2411 = vmatprep.subr.mxu0 %v1914
    %2412 = vmatpush1.msra.mxu0 %v1913
    %2413 = vmatprep.subr.mxu0 0.0
    %2414 = vmatpush1.msra.mxu0 0.0
    %2415 = vmatprep.subr.mxu0 0.0
    %2416 = vmatpush1.msra.mxu0 0.0
    %2417 = vmatprep.subr.mxu0 0.0
    %2418 = vmatpush1.msra.mxu0 0.0
    %2419 = vmatprep.subr.mxu0 0.0
    %2420 = vmatpush1.msra.mxu0 0.0
    %2421 = vmatprep.subr.mxu0 0.0
    %2422 = vmatpush1.msra.mxu0 0.0
    %2423 = vmatprep.subr.mxu0 0.0
    %2424 = vmatpush1.msra.mxu0 0.0
    %2425 = vmatprep.subr.mxu0 0.0
    %2426 = vmatpush1.msra.mxu0 0.0
    %2427 = vmatprep.subr.mxu0 0.0
    %2428 = vmatpush1.msra.mxu0 0.0
    %2429 = vmatprep.subr.mxu0 0.0
    %2430 = vmatpush1.msra.mxu0 0.0
    %2431 = vmatprep.subr.mxu0 0.0
    %2432 = vmatpush1.msra.mxu0 0.0
    %2433 = vmatprep.subr.mxu0 0.0
    %2434 = vmatpush1.msra.mxu0 0.0
    %2435 = vmatprep.subr.mxu0 0.0
    %2436 = vmatpush1.msra.mxu0 0.0
    %2437 = vmatprep.subr.mxu0 0.0
    %2438 = vmatpush1.msra.mxu0 0.0
    %2439 = vmatprep.subr.mxu0 0.0
    %2440 = vmatpush1.msra.mxu0 0.0
    %2441 = vmatprep.subr.mxu0 0.0
    %2442 = vmatpush1.msra.mxu0 0.0
    %2443 = vmatprep.subr.mxu0 0.0
    %2444 = vmatpush1.msra.mxu0 0.0
    %2445 = vmatprep.subr.mxu0 0.0
    %2446 = vmatpush1.msra.mxu0 0.0
    %2447 = vmatprep.subr.mxu0 0.0
    %2448 = vmatpush1.msra.mxu0 0.0
    %2449 = vmatprep.subr.mxu0 0.0
    %2450 = vmatpush1.msra.mxu0 0.0
    %2451 = vmatprep.subr.mxu0 0.0
    %2452 = vmatpush1.msra.mxu0 0.0
    %2453 = vmatprep.subr.mxu0 0.0
    %2454 = vmatpush1.msra.mxu0 0.0
    %2455 = vmatprep.subr.mxu0 0.0
    %2456 = vmatpush1.msra.mxu0 0.0
    %2457 = vmatprep.subr.mxu0 0.0
    %2458 = vmatpush1.msra.mxu0 0.0
    %2459 = vmatprep.subr.mxu0 0.0
    %2460 = vmatpush1.msra.mxu0 0.0
    %2461 = vmatprep.subr.mxu0 0.0
    %2462 = vmatpush1.msra.mxu0 0.0
    %2463 = vmatprep.mubr.f32.mxu0 0.0
    %2464 = vmatmul.mubr.f32.gmra.mrb[0].mxu0 %v1128
    %v2465 = vpop.f32.mrb[0].mxu0
    %v2466 = vadd.f32 0.0, %v2465
    %v2467 = vpop.f32.mrb[0].mxu0
    %v2468 = vadd.f32 0.0, %v2467
    %2469 = vmatprep.mubr.f32.mxu0 0.0
    %2470 = vmatmul.mubr.f32.gmra.mrb[0].mxu0 %v1131
    %v2471 = vpop.f32.mrb[0].mxu0
    %v2472 = vadd.f32 0.0, %v2471
    %v2473 = vpop.f32.mrb[0].mxu0
    %v2474 = vadd.f32 0.0, %v2473
    %2475 = vmatprep.mubr.f32.mxu0 0.0
    %2476 = vmatmul.mubr.f32.gmra.mrb[0].mxu0 %v1134
    %v2477 = vpop.f32.mrb[0].mxu0
    %v2478 = vadd.f32 0.0, %v2477
    %v2479 = vpop.f32.mrb[0].mxu0
    %v2480 = vadd.f32 0.0, %v2479
    %2481 = vmatprep.mubr.f32.mxu0 0.0
    %2482 = vmatmul.mubr.f32.gmra.mrb[0].mxu0 %v1137
    %v2483 = vpop.f32.mrb[0].mxu0
    %v2484 = vadd.f32 0.0, %v2483
    %v2485 = vpop.f32.mrb[0].mxu0
    %v2486 = vadd.f32 0.0, %v2485
    %2487 = vmatprep.mubr.f32.mxu0 0.0
    %2488 = vmatmul.mubr.f32.gmra.mrb[0].mxu0 %v1140
    %v2489 = vpop.f32.mrb[0].mxu0
    %v2490 = vadd.f32 0.0, %v2489
    %v2491 = vpop.f32.mrb[0].mxu0
    %v2492 = vadd.f32 0.0, %v2491
    %2493 = vmatprep.mubr.f32.mxu0 0.0
    %2494 = vmatmul.mubr.f32.gmra.mrb[0].mxu0 %v1143
    %v2495 = vpop.f32.mrb[0].mxu0
    %v2496 = vadd.f32 0.0, %v2495
    %v2497 = vpop.f32.mrb[0].mxu0
    %v2498 = vadd.f32 0.0, %v2497
    %2499 = vmatprep.mubr.f32.mxu0 0.0
    %2500 = vmatmul.mubr.f32.gmra.mrb[0].mxu0 %v1146
    %v2501 = vpop.f32.mrb[0].mxu0
    %v2502 = vadd.f32 0.0, %v2501
    %v2503 = vpop.f32.mrb[0].mxu0
    %v2504 = vadd.f32 0.0, %v2503
    %2505 = vdwg.mxu0
    %s2506 = scalar_lea.vmem %s3, 960
    %v2507 = vld [vmem:[%s2506] sm:$0xff]
    %v2508 = vld [vmem:[%s2506 + $0x8] sm:$0xff]
    %v2509 = vld [vmem:[%s2506 + $0x10] sm:$0xff]
    %v2510 = vld [vmem:[%s2506 + $0x18] sm:$0xff]
    %v2511 = vld [vmem:[%s2506 + $0x20] sm:$0xff]
    %v2512 = vld [vmem:[%s2506 + $0x28] sm:$0xff]
    %v2513 = vld [vmem:[%s2506 + $0x30] sm:$0xff]
    %v2514 = vld [vmem:[%s2506 + $0x38] sm:$0xff]
    %v2515 = vld [vmem:[%s2506 + $0x40] sm:$0xff]
    %v2516 = vld [vmem:[%s2506 + $0x48] sm:$0xff]
    %v2517 = vld [vmem:[%s2506 + $0x50] sm:$0xff]
    %v2518 = vld [vmem:[%s2506 + $0x58] sm:$0xff]
    %v2519 = vld [vmem:[%s2506 + $0x60] sm:$0xff]
    %v2520 = vld [vmem:[%s2506 + $0x68] sm:$0xff]
    %v2521 = vld [vmem:[%s2506 + $0x70] sm:$0xff]
    %v2522 = vld [vmem:[%s2506 + $0x78] sm:$0xff]
    %v2523 = vld [vmem:[%s2506 + $0x80] sm:$0xff]
    %v2524 = vld [vmem:[%s2506 + $0x88] sm:$0xff]
    %v2525 = vld [vmem:[%s2506 + $0x90] sm:$0xff]
    %v2526 = vld [vmem:[%s2506 + $0x98] sm:$0xff]
    %v2527 = vld [vmem:[%s2506 + $0xa0] sm:$0xff]
    %v2528 = vld [vmem:[%s2506 + $0xa8] sm:$0xff]
    %v2529 = vld [vmem:[%s2506 + $0xb0] sm:$0xff]
    %v2530 = vld [vmem:[%s2506 + $0xb8] sm:$0xff]
    %v2531 = vld [vmem:[%s2506 + $0xc0] sm:$0xff]
    %v2532 = vld [vmem:[%s2506 + $0xc8] sm:$0xff]
    %v2533 = vld [vmem:[%s2506 + $0xd0] sm:$0xff]
    %v2534 = vld [vmem:[%s2506 + $0xd8] sm:$0xff]
    %v2535 = vld [vmem:[%s2506 + $0xe0] sm:$0xff]
    %v2536 = vld [vmem:[%s2506 + $0xe8] sm:$0xff]
    %v2537 = vld [vmem:[%s2506 + $0xf0] sm:$0xff]
    %v2538 = vld [vmem:[%s2506 + $0xf8] sm:$0xff]
    %v2539 = vld [vmem:[%s2506 + $0x100] sm:$0xff]
    %v2540 = vld [vmem:[%s2506 + $0x108] sm:$0xff]
    %v2541 = vld [vmem:[%s2506 + $0x110] sm:$0xff]
    %v2542 = vld [vmem:[%s2506 + $0x118] sm:$0xff]
    %v2543 = vld [vmem:[%s2506 + $0x120] sm:$0xff]
    %v2544 = vld [vmem:[%s2506 + $0x128] sm:$0xff]
    %v2545 = vld [vmem:[%s2506 + $0x130] sm:$0xff]
    %v2546 = vld [vmem:[%s2506 + $0x138] sm:$0xff]
    %v2547 = vld [vmem:[%s2506 + $0x140] sm:$0xff]
    %v2548 = vld [vmem:[%s2506 + $0x148] sm:$0xff]
    %v2549 = vld [vmem:[%s2506 + $0x150] sm:$0xff]
    %v2550 = vld [vmem:[%s2506 + $0x158] sm:$0xff]
    %v2551 = vld [vmem:[%s2506 + $0x160] sm:$0xff]
    %v2552 = vld [vmem:[%s2506 + $0x168] sm:$0xff]
    %v2553 = vld [vmem:[%s2506 + $0x170] sm:$0xff]
    %v2554 = vld [vmem:[%s2506 + $0x178] sm:$0xff]
    %v2555 = vld [vmem:[%s2506 + $0x180] sm:$0xff]
    %v2556 = vld [vmem:[%s2506 + $0x188] sm:$0xff]
    %v2557 = vld [vmem:[%s2506 + $0x190] sm:$0xff]
    %v2558 = vld [vmem:[%s2506 + $0x198] sm:$0xff]
    %v2559 = vld [vmem:[%s2506 + $0x1a0] sm:$0xff]
    %v2560 = vld [vmem:[%s2506 + $0x1a8] sm:$0xff]
    %v2561 = vld [vmem:[%s2506 + $0x1b0] sm:$0xff]
    %v2562 = vld [vmem:[%s2506 + $0x1b8] sm:$0xff]
    %v2563 = vld [vmem:[%s2506 + $0x1c0] sm:$0xff]
    %v2564 = vld [vmem:[%s2506 + $0x1c8] sm:$0xff]
    %v2565 = vld [vmem:[%s2506 + $0x1d0] sm:$0xff]
    %v2566 = vld [vmem:[%s2506 + $0x1d8] sm:$0xff]
    %v2568 = vsel %vm1758, %v2468, 0
    %v2571 = vsel %vm1758, %v2474, 0
    %v2574 = vsel %vm1758, %v2480, 0
    %v2577 = vsel %vm1758, %v2486, 0
    %v2580 = vsel %vm1758, %v2492, 0
    %v2583 = vsel %vm1758, %v2498, 0
    %v2586 = vsel %vm1758, %v2504, 0
    %2588 = vmatprep.subr.mxu0 %v2508
    %2589 = vmatpush1.msra.mxu0 %v2507
    %2590 = vmatprep.subr.mxu0 %v2510
    %2591 = vmatpush1.msra.mxu0 %v2509
    %2592 = vmatprep.subr.mxu0 %v2512
    %2593 = vmatpush1.msra.mxu0 %v2511
    %2594 = vmatprep.subr.mxu0 %v2514
    %2595 = vmatpush1.msra.mxu0 %v2513
    %2596 = vmatprep.subr.mxu0 %v2516
    %2597 = vmatpush1.msra.mxu0 %v2515
    %2598 = vmatprep.subr.mxu0 %v2518
    %2599 = vmatpush1.msra.mxu0 %v2517
    %2600 = vmatprep.subr.mxu0 %v2520
    %2601 = vmatpush1.msra.mxu0 %v2519
    %2602 = vmatprep.subr.mxu0 %v2522
    %2603 = vmatpush1.msra.mxu0 %v2521
    %2604 = vmatprep.subr.mxu0 %v2524
    %2605 = vmatpush1.msra.mxu0 %v2523
    %2606 = vmatprep.subr.mxu0 %v2526
    %2607 = vmatpush1.msra.mxu0 %v2525
    %2608 = vmatprep.subr.mxu0 %v2528
    %2609 = vmatpush1.msra.mxu0 %v2527
    %2610 = vmatprep.subr.mxu0 %v2530
    %2611 = vmatpush1.msra.mxu0 %v2529
    %2612 = vmatprep.subr.mxu0 %v2532
    %2613 = vmatpush1.msra.mxu0 %v2531
    %2614 = vmatprep.subr.mxu0 %v2534
    %2615 = vmatpush1.msra.mxu0 %v2533
    %2616 = vmatprep.subr.mxu0 %v2536
    %2617 = vmatpush1.msra.mxu0 %v2535
    %2618 = vmatprep.subr.mxu0 %v2538
    %2619 = vmatpush1.msra.mxu0 %v2537
    %2620 = vmatprep.subr.mxu0 %v2540
    %2621 = vmatpush1.msra.mxu0 %v2539
    %2622 = vmatprep.subr.mxu0 %v2542
    %2623 = vmatpush1.msra.mxu0 %v2541
    %2624 = vmatprep.subr.mxu0 %v2544
    %2625 = vmatpush1.msra.mxu0 %v2543
    %2626 = vmatprep.subr.mxu0 %v2546
    %2627 = vmatpush1.msra.mxu0 %v2545
    %2628 = vmatprep.subr.mxu0 %v2548
    %2629 = vmatpush1.msra.mxu0 %v2547
    %2630 = vmatprep.subr.mxu0 %v2550
    %2631 = vmatpush1.msra.mxu0 %v2549
    %2632 = vmatprep.subr.mxu0 %v2552
    %2633 = vmatpush1.msra.mxu0 %v2551
    %2634 = vmatprep.subr.mxu0 %v2554
    %2635 = vmatpush1.msra.mxu0 %v2553
    %2636 = vmatprep.subr.mxu0 %v2556
    %2637 = vmatpush1.msra.mxu0 %v2555
    %2638 = vmatprep.subr.mxu0 %v2558
    %2639 = vmatpush1.msra.mxu0 %v2557
    %2640 = vmatprep.subr.mxu0 %v2560
    %2641 = vmatpush1.msra.mxu0 %v2559
    %2642 = vmatprep.subr.mxu0 %v2562
    %2643 = vmatpush1.msra.mxu0 %v2561
    %2644 = vmatprep.subr.mxu0 %v2564
    %2645 = vmatpush1.msra.mxu0 %v2563
    %2646 = vmatprep.subr.mxu0 %v2566
    %2647 = vmatpush1.msra.mxu0 %v2565
    %2648 = vmatprep.subr.mxu0 0.0
    %2649 = vmatpush1.msra.mxu0 0.0
    %2650 = vmatprep.subr.mxu0 0.0
    %2651 = vmatpush1.msra.mxu0 0.0
    %2652 = vmatprep.mubr.f32.mxu0 %v2568
    %2653 = vmatmul.mubr.f32.gmra.mrb[0].mxu0 %v2466
    %v2654 = vpop.f32.mrb[0].mxu0
    %v2655 = vadd.f32 0.0, %v2654
    %v2656 = vpop.f32.mrb[0].mxu0
    %v2657 = vadd.f32 0.0, %v2656
    %2658 = vmatprep.mubr.f32.mxu0 %v2571
    %2659 = vmatmul.mubr.f32.gmra.mrb[0].mxu0 %v2472
    %v2660 = vpop.f32.mrb[0].mxu0
    %v2661 = vadd.f32 0.0, %v2660
    %v2662 = vpop.f32.mrb[0].mxu0
    %v2663 = vadd.f32 0.0, %v2662
    %2664 = vmatprep.mubr.f32.mxu0 %v2574
    %2665 = vmatmul.mubr.f32.gmra.mrb[0].mxu0 %v2478
    %v2666 = vpop.f32.mrb[0].mxu0
    %v2667 = vadd.f32 0.0, %v2666
    %v2668 = vpop.f32.mrb[0].mxu0
    %v2669 = vadd.f32 0.0, %v2668
    %2670 = vmatprep.mubr.f32.mxu0 %v2577
    %2671 = vmatmul.mubr.f32.gmra.mrb[0].mxu0 %v2484
    %v2672 = vpop.f32.mrb[0].mxu0
    %v2673 = vadd.f32 0.0, %v2672
    %v2674 = vpop.f32.mrb[0].mxu0
    %v2675 = vadd.f32 0.0, %v2674
    %2676 = vmatprep.mubr.f32.mxu0 %v2580
    %2677 = vmatmul.mubr.f32.gmra.mrb[0].mxu0 %v2490
    %v2678 = vpop.f32.mrb[0].mxu0
    %v2679 = vadd.f32 0.0, %v2678
    %v2680 = vpop.f32.mrb[0].mxu0
    %v2681 = vadd.f32 0.0, %v2680
    %2682 = vmatprep.mubr.f32.mxu0 %v2583
    %2683 = vmatmul.mubr.f32.gmra.mrb[0].mxu0 %v2496
    %v2684 = vpop.f32.mrb[0].mxu0
    %v2685 = vadd.f32 0.0, %v2684
    %v2686 = vpop.f32.mrb[0].mxu0
    %v2687 = vadd.f32 0.0, %v2686
    %2688 = vmatprep.mubr.f32.mxu0 %v2586
    %2689 = vmatmul.mubr.f32.gmra.mrb[0].mxu0 %v2502
    %v2690 = vpop.f32.mrb[0].mxu0
    %v2691 = vadd.f32 0.0, %v2690
    %v2692 = vpop.f32.mrb[0].mxu0
    %v2693 = vadd.f32 0.0, %v2692
    %2694 = vdwg.mxu0
    %v2695 = vadd.f32 %v2359, %v2655
    %v2696 = vadd.f32 %v2361, %v2657
    %v2697 = vadd.f32 %v2365, %v2661
    %v2698 = vadd.f32 %v2367, %v2663
    %v2699 = vadd.f32 %v2371, %v2667
    %v2700 = vadd.f32 %v2373, %v2669
    %v2701 = vadd.f32 %v2377, %v2673
    %v2702 = vadd.f32 %v2379, %v2675
    %v2703 = vadd.f32 %v2383, %v2679
    %v2704 = vadd.f32 %v2385, %v2681
    %v2705 = vadd.f32 %v2389, %v2685
    %v2706 = vadd.f32 %v2391, %v2687
    %v2707 = vadd.f32 %v2395, %v2691
    %v2708 = vadd.f32 %v2397, %v2693
    %v2709 = vadd.s32 %v49, 6
    %v2710 = vadd.s32 %v50, 6
    %v2711 = vadd.s32 %v51, 6
    %v2712 = vadd.s32 %v52, 6
    %v2713 = vadd.s32 %v53, 6
    %v2714 = vadd.s32 %v54, 6
    %v2715 = vadd.s32 %v55, 6
    %vm2716 = vcmp.eq.s32.totalorder %v57, %v2709
    %vm2717 = vcmp.eq.s32.totalorder %v57, %v2710
    %vm2718 = vcmp.eq.s32.totalorder %v57, %v2711
    %vm2719 = vcmp.eq.s32.totalorder %v57, %v2712
    %vm2720 = vcmp.eq.s32.totalorder %v57, %v2713
    %vm2721 = vcmp.eq.s32.totalorder %v57, %v2714
    %vm2722 = vcmp.eq.s32.totalorder %v57, %v2715
    %v2723 = vsel %vm2716, 1, 0
    %v2724 = vsel %vm2717, 1, 0
    %v2725 = vsel %vm2718, 1, 0
    %v2726 = vsel %vm2719, 1, 0
    %v2727 = vsel %vm2720, 1, 0
    %v2728 = vsel %vm2721, 1, 0
    %v2729 = vsel %vm2722, 1, 0
    %v2730 = vcvt.s32.f32 %v2723
    %v2731 = vcvt.s32.f32 %v2724
    %v2732 = vcvt.s32.f32 %v2725
    %v2733 = vcvt.s32.f32 %v2726
    %v2734 = vcvt.s32.f32 %v2727
    %v2735 = vcvt.s32.f32 %v2728
    %v2736 = vcvt.s32.f32 %v2729
    %v2738 = vsel %vm86, %v2730, 0
    %v2741 = vsel %vm86, %v2731, 0
    %v2744 = vsel %vm86, %v2732, 0
    %v2747 = vsel %vm86, %v2733, 0
    %v2750 = vsel %vm86, %v2734, 0
    %v2753 = vsel %vm86, %v2735, 0
    %v2756 = vsel %vm86, %v2736, 0
    %2758 = vmatprep.subr.mxu0 %v1902
    %2759 = vmatpush1.msra.mxu0 %v1901
    %2760 = vmatprep.subr.mxu0 %v1904
    %2761 = vmatpush1.msra.mxu0 %v1903
    %2762 = vmatprep.subr.mxu0 %v1906
    %2763 = vmatpush1.msra.mxu0 %v1905
    %2764 = vmatprep.subr.mxu0 %v1908
    %2765 = vmatpush1.msra.mxu0 %v1907
    %2766 = vmatprep.subr.mxu0 %v1910
    %2767 = vmatpush1.msra.mxu0 %v1909
    %2768 = vmatprep.subr.mxu0 %v1912
    %2769 = vmatpush1.msra.mxu0 %v1911
    %2770 = vmatprep.subr.mxu0 %v1914
    %2771 = vmatpush1.msra.mxu0 %v1913
    %2772 = vmatprep.subr.mxu0 0.0
    %2773 = vmatpush1.msra.mxu0 0.0
    %2774 = vmatprep.subr.mxu0 0.0
    %2775 = vmatpush1.msra.mxu0 0.0
    %2776 = vmatprep.subr.mxu0 0.0
    %2777 = vmatpush1.msra.mxu0 0.0
    %2778 = vmatprep.subr.mxu0 0.0
    %2779 = vmatpush1.msra.mxu0 0.0
    %2780 = vmatprep.subr.mxu0 0.0
    %2781 = vmatpush1.msra.mxu0 0.0
    %2782 = vmatprep.subr.mxu0 0.0
    %2783 = vmatpush1.msra.mxu0 0.0
    %2784 = vmatprep.subr.mxu0 0.0
    %2785 = vmatpush1.msra.mxu0 0.0
    %2786 = vmatprep.subr.mxu0 0.0
    %2787 = vmatpush1.msra.mxu0 0.0
    %2788 = vmatprep.subr.mxu0 0.0
    %2789 = vmatpush1.msra.mxu0 0.0
    %2790 = vmatprep.subr.mxu0 0.0
    %2791 = vmatpush1.msra.mxu0 0.0
    %2792 = vmatprep.subr.mxu0 0.0
    %2793 = vmatpush1.msra.mxu0 0.0
    %2794 = vmatprep.subr.mxu0 0.0
    %2795 = vmatpush1.msra.mxu0 0.0
    %2796 = vmatprep.subr.mxu0 0.0
    %2797 = vmatpush1.msra.mxu0 0.0
    %2798 = vmatprep.subr.mxu0 0.0
    %2799 = vmatpush1.msra.mxu0 0.0
    %2800 = vmatprep.subr.mxu0 0.0
    %2801 = vmatpush1.msra.mxu0 0.0
    %2802 = vmatprep.subr.mxu0 0.0
    %2803 = vmatpush1.msra.mxu0 0.0
    %2804 = vmatprep.subr.mxu0 0.0
    %2805 = vmatpush1.msra.mxu0 0.0
    %2806 = vmatprep.subr.mxu0 0.0
    %2807 = vmatpush1.msra.mxu0 0.0
    %2808 = vmatprep.subr.mxu0 0.0
    %2809 = vmatpush1.msra.mxu0 0.0
    %2810 = vmatprep.subr.mxu0 0.0
    %2811 = vmatpush1.msra.mxu0 0.0
    %2812 = vmatprep.subr.mxu0 0.0
    %2813 = vmatpush1.msra.mxu0 0.0
    %2814 = vmatprep.subr.mxu0 0.0
    %2815 = vmatpush1.msra.mxu0 0.0
    %2816 = vmatprep.subr.mxu0 0.0
    %2817 = vmatpush1.msra.mxu0 0.0
    %2818 = vmatprep.subr.mxu0 0.0
    %2819 = vmatpush1.msra.mxu0 0.0
    %2820 = vmatprep.subr.mxu0 0.0
    %2821 = vmatpush1.msra.mxu0 0.0
    %2822 = vmatprep.mubr.f32.mxu0 0.0
    %2823 = vmatmul.mubr.f32.gmra.mrb[0].mxu0 %v2738
    %v2824 = vpop.f32.mrb[0].mxu0
    %v2825 = vadd.f32 0.0, %v2824
    %v2826 = vpop.f32.mrb[0].mxu0
    %v2827 = vadd.f32 0.0, %v2826
    %2828 = vmatprep.mubr.f32.mxu0 0.0
    %2829 = vmatmul.mubr.f32.gmra.mrb[0].mxu0 %v2741
    %v2830 = vpop.f32.mrb[0].mxu0
    %v2831 = vadd.f32 0.0, %v2830
    %v2832 = vpop.f32.mrb[0].mxu0
    %v2833 = vadd.f32 0.0, %v2832
    %2834 = vmatprep.mubr.f32.mxu0 0.0
    %2835 = vmatmul.mubr.f32.gmra.mrb[0].mxu0 %v2744
    %v2836 = vpop.f32.mrb[0].mxu0
    %v2837 = vadd.f32 0.0, %v2836
    %v2838 = vpop.f32.mrb[0].mxu0
    %v2839 = vadd.f32 0.0, %v2838
    %2840 = vmatprep.mubr.f32.mxu0 0.0
    %2841 = vmatmul.mubr.f32.gmra.mrb[0].mxu0 %v2747
    %v2842 = vpop.f32.mrb[0].mxu0
    %v2843 = vadd.f32 0.0, %v2842
    %v2844 = vpop.f32.mrb[0].mxu0
    %v2845 = vadd.f32 0.0, %v2844
    %2846 = vmatprep.mubr.f32.mxu0 0.0
    %2847 = vmatmul.mubr.f32.gmra.mrb[0].mxu0 %v2750
    %v2848 = vpop.f32.mrb[0].mxu0
    %v2849 = vadd.f32 0.0, %v2848
    %v2850 = vpop.f32.mrb[0].mxu0
    %v2851 = vadd.f32 0.0, %v2850
    %2852 = vmatprep.mubr.f32.mxu0 0.0
    %2853 = vmatmul.mubr.f32.gmra.mrb[0].mxu0 %v2753
    %v2854 = vpop.f32.mrb[0].mxu0
    %v2855 = vadd.f32 0.0, %v2854
    %v2856 = vpop.f32.mrb[0].mxu0
    %v2857 = vadd.f32 0.0, %v2856
    %2858 = vmatprep.mubr.f32.mxu0 0.0
    %2859 = vmatmul.mubr.f32.gmra.mrb[0].mxu0 %v2756
    %v2860 = vpop.f32.mrb[0].mxu0
    %v2861 = vadd.f32 0.0, %v2860
    %v2862 = vpop.f32.mrb[0].mxu0
    %v2863 = vadd.f32 0.0, %v2862
    %2864 = vdwg.mxu0
    %s2865 = scalar_lea.vmem %s3, 1440
    %v2866 = vld [vmem:[%s2865] sm:$0xff]
    %v2867 = vld [vmem:[%s2865 + $0x8] sm:$0xff]
    %v2868 = vld [vmem:[%s2865 + $0x10] sm:$0xff]
    %v2869 = vld [vmem:[%s2865 + $0x18] sm:$0xff]
    %v2870 = vld [vmem:[%s2865 + $0x20] sm:$0xff]
    %v2871 = vld [vmem:[%s2865 + $0x28] sm:$0xff]
    %v2872 = vld [vmem:[%s2865 + $0x30] sm:$0xff]
    %v2873 = vld [vmem:[%s2865 + $0x38] sm:$0xff]
    %v2874 = vld [vmem:[%s2865 + $0x40] sm:$0xff]
    %v2875 = vld [vmem:[%s2865 + $0x48] sm:$0xff]
    %v2876 = vld [vmem:[%s2865 + $0x50] sm:$0xff]
    %v2877 = vld [vmem:[%s2865 + $0x58] sm:$0xff]
    %v2878 = vld [vmem:[%s2865 + $0x60] sm:$0xff]
    %v2879 = vld [vmem:[%s2865 + $0x68] sm:$0xff]
    %v2880 = vld [vmem:[%s2865 + $0x70] sm:$0xff]
    %v2881 = vld [vmem:[%s2865 + $0x78] sm:$0xff]
    %v2882 = vld [vmem:[%s2865 + $0x80] sm:$0xff]
    %v2883 = vld [vmem:[%s2865 + $0x88] sm:$0xff]
    %v2884 = vld [vmem:[%s2865 + $0x90] sm:$0xff]
    %v2885 = vld [vmem:[%s2865 + $0x98] sm:$0xff]
    %v2886 = vld [vmem:[%s2865 + $0xa0] sm:$0xff]
    %v2887 = vld [vmem:[%s2865 + $0xa8] sm:$0xff]
    %v2888 = vld [vmem:[%s2865 + $0xb0] sm:$0xff]
    %v2889 = vld [vmem:[%s2865 + $0xb8] sm:$0xff]
    %v2890 = vld [vmem:[%s2865 + $0xc0] sm:$0xff]
    %v2891 = vld [vmem:[%s2865 + $0xc8] sm:$0xff]
    %v2892 = vld [vmem:[%s2865 + $0xd0] sm:$0xff]
    %v2893 = vld [vmem:[%s2865 + $0xd8] sm:$0xff]
    %v2894 = vld [vmem:[%s2865 + $0xe0] sm:$0xff]
    %v2895 = vld [vmem:[%s2865 + $0xe8] sm:$0xff]
    %v2896 = vld [vmem:[%s2865 + $0xf0] sm:$0xff]
    %v2897 = vld [vmem:[%s2865 + $0xf8] sm:$0xff]
    %v2898 = vld [vmem:[%s2865 + $0x100] sm:$0xff]
    %v2899 = vld [vmem:[%s2865 + $0x108] sm:$0xff]
    %v2900 = vld [vmem:[%s2865 + $0x110] sm:$0xff]
    %v2901 = vld [vmem:[%s2865 + $0x118] sm:$0xff]
    %v2902 = vld [vmem:[%s2865 + $0x120] sm:$0xff]
    %v2903 = vld [vmem:[%s2865 + $0x128] sm:$0xff]
    %v2904 = vld [vmem:[%s2865 + $0x130] sm:$0xff]
    %v2905 = vld [vmem:[%s2865 + $0x138] sm:$0xff]
    %v2906 = vld [vmem:[%s2865 + $0x140] sm:$0xff]
    %v2907 = vld [vmem:[%s2865 + $0x148] sm:$0xff]
    %v2908 = vld [vmem:[%s2865 + $0x150] sm:$0xff]
    %v2909 = vld [vmem:[%s2865 + $0x158] sm:$0xff]
    %v2910 = vld [vmem:[%s2865 + $0x160] sm:$0xff]
    %v2911 = vld [vmem:[%s2865 + $0x168] sm:$0xff]
    %v2912 = vld [vmem:[%s2865 + $0x170] sm:$0xff]
    %v2913 = vld [vmem:[%s2865 + $0x178] sm:$0xff]
    %v2914 = vld [vmem:[%s2865 + $0x180] sm:$0xff]
    %v2915 = vld [vmem:[%s2865 + $0x188] sm:$0xff]
    %v2916 = vld [vmem:[%s2865 + $0x190] sm:$0xff]
    %v2917 = vld [vmem:[%s2865 + $0x198] sm:$0xff]
    %v2918 = vld [vmem:[%s2865 + $0x1a0] sm:$0xff]
    %v2919 = vld [vmem:[%s2865 + $0x1a8] sm:$0xff]
    %v2920 = vld [vmem:[%s2865 + $0x1b0] sm:$0xff]
    %v2921 = vld [vmem:[%s2865 + $0x1b8] sm:$0xff]
    %v2922 = vld [vmem:[%s2865 + $0x1c0] sm:$0xff]
    %v2923 = vld [vmem:[%s2865 + $0x1c8] sm:$0xff]
    %v2924 = vld [vmem:[%s2865 + $0x1d0] sm:$0xff]
    %v2925 = vld [vmem:[%s2865 + $0x1d8] sm:$0xff]
    %v2927 = vsel %vm1758, %v2827, 0
    %v2930 = vsel %vm1758, %v2833, 0
    %v2933 = vsel %vm1758, %v2839, 0
    %v2936 = vsel %vm1758, %v2845, 0
    %v2939 = vsel %vm1758, %v2851, 0
    %v2942 = vsel %vm1758, %v2857, 0
    %v2945 = vsel %vm1758, %v2863, 0
    %2947 = vmatprep.subr.mxu0 %v2867
    %2948 = vmatpush1.msra.mxu0 %v2866
    %2949 = vmatprep.subr.mxu0 %v2869
    %2950 = vmatpush1.msra.mxu0 %v2868
    %2951 = vmatprep.subr.mxu0 %v2871
    %2952 = vmatpush1.msra.mxu0 %v2870
    %2953 = vmatprep.subr.mxu0 %v2873
    %2954 = vmatpush1.msra.mxu0 %v2872
    %2955 = vmatprep.subr.mxu0 %v2875
    %2956 = vmatpush1.msra.mxu0 %v2874
    %2957 = vmatprep.subr.mxu0 %v2877
    %2958 = vmatpush1.msra.mxu0 %v2876
    %2959 = vmatprep.subr.mxu0 %v2879
    %2960 = vmatpush1.msra.mxu0 %v2878
    %2961 = vmatprep.subr.mxu0 %v2881
    %2962 = vmatpush1.msra.mxu0 %v2880
    %2963 = vmatprep.subr.mxu0 %v2883
    %2964 = vmatpush1.msra.mxu0 %v2882
    %2965 = vmatprep.subr.mxu0 %v2885
    %2966 = vmatpush1.msra.mxu0 %v2884
    %2967 = vmatprep.subr.mxu0 %v2887
    %2968 = vmatpush1.msra.mxu0 %v2886
    %2969 = vmatprep.subr.mxu0 %v2889
    %2970 = vmatpush1.msra.mxu0 %v2888
    %2971 = vmatprep.subr.mxu0 %v2891
    %2972 = vmatpush1.msra.mxu0 %v2890
    %2973 = vmatprep.subr.mxu0 %v2893
    %2974 = vmatpush1.msra.mxu0 %v2892
    %2975 = vmatprep.subr.mxu0 %v2895
    %2976 = vmatpush1.msra.mxu0 %v2894
    %2977 = vmatprep.subr.mxu0 %v2897
    %2978 = vmatpush1.msra.mxu0 %v2896
    %2979 = vmatprep.subr.mxu0 %v2899
    %2980 = vmatpush1.msra.mxu0 %v2898
    %2981 = vmatprep.subr.mxu0 %v2901
    %2982 = vmatpush1.msra.mxu0 %v2900
    %2983 = vmatprep.subr.mxu0 %v2903
    %2984 = vmatpush1.msra.mxu0 %v2902
    %2985 = vmatprep.subr.mxu0 %v2905
    %2986 = vmatpush1.msra.mxu0 %v2904
    %2987 = vmatprep.subr.mxu0 %v2907
    %2988 = vmatpush1.msra.mxu0 %v2906
    %2989 = vmatprep.subr.mxu0 %v2909
    %2990 = vmatpush1.msra.mxu0 %v2908
    %2991 = vmatprep.subr.mxu0 %v2911
    %2992 = vmatpush1.msra.mxu0 %v2910
    %2993 = vmatprep.subr.mxu0 %v2913
    %2994 = vmatpush1.msra.mxu0 %v2912
    %2995 = vmatprep.subr.mxu0 %v2915
    %2996 = vmatpush1.msra.mxu0 %v2914
    %2997 = vmatprep.subr.mxu0 %v2917
    %2998 = vmatpush1.msra.mxu0 %v2916
    %2999 = vmatprep.subr.mxu0 %v2919
    %3000 = vmatpush1.msra.mxu0 %v2918
    %3001 = vmatprep.subr.mxu0 %v2921
    %3002 = vmatpush1.msra.mxu0 %v2920
    %3003 = vmatprep.subr.mxu0 %v2923
    %3004 = vmatpush1.msra.mxu0 %v2922
    %3005 = vmatprep.subr.mxu0 %v2925
    %3006 = vmatpush1.msra.mxu0 %v2924
    %3007 = vmatprep.subr.mxu0 0.0
    %3008 = vmatpush1.msra.mxu0 0.0
    %3009 = vmatprep.subr.mxu0 0.0
    %3010 = vmatpush1.msra.mxu0 0.0
    %3011 = vmatprep.mubr.f32.mxu0 %v2927
    %3012 = vmatmul.mubr.f32.gmra.mrb[0].mxu0 %v2825
    %v3013 = vpop.f32.mrb[0].mxu0
    %v3014 = vadd.f32 0.0, %v3013
    %v3015 = vpop.f32.mrb[0].mxu0
    %v3016 = vadd.f32 0.0, %v3015
    %3017 = vmatprep.mubr.f32.mxu0 %v2930
    %3018 = vmatmul.mubr.f32.gmra.mrb[0].mxu0 %v2831
    %v3019 = vpop.f32.mrb[0].mxu0
    %v3020 = vadd.f32 0.0, %v3019
    %v3021 = vpop.f32.mrb[0].mxu0
    %v3022 = vadd.f32 0.0, %v3021
    %3023 = vmatprep.mubr.f32.mxu0 %v2933
    %3024 = vmatmul.mubr.f32.gmra.mrb[0].mxu0 %v2837
    %v3025 = vpop.f32.mrb[0].mxu0
    %v3026 = vadd.f32 0.0, %v3025
    %v3027 = vpop.f32.mrb[0].mxu0
    %v3028 = vadd.f32 0.0, %v3027
    %3029 = vmatprep.mubr.f32.mxu0 %v2936
    %3030 = vmatmul.mubr.f32.gmra.mrb[0].mxu0 %v2843
    %v3031 = vpop.f32.mrb[0].mxu0
    %v3032 = vadd.f32 0.0, %v3031
    %v3033 = vpop.f32.mrb[0].mxu0
    %v3034 = vadd.f32 0.0, %v3033
    %3035 = vmatprep.mubr.f32.mxu0 %v2939
    %3036 = vmatmul.mubr.f32.gmra.mrb[0].mxu0 %v2849
    %v3037 = vpop.f32.mrb[0].mxu0
    %v3038 = vadd.f32 0.0, %v3037
    %v3039 = vpop.f32.mrb[0].mxu0
    %v3040 = vadd.f32 0.0, %v3039
    %3041 = vmatprep.mubr.f32.mxu0 %v2942
    %3042 = vmatmul.mubr.f32.gmra.mrb[0].mxu0 %v2855
    %v3043 = vpop.f32.mrb[0].mxu0
    %v3044 = vadd.f32 0.0, %v3043
    %v3045 = vpop.f32.mrb[0].mxu0
    %v3046 = vadd.f32 0.0, %v3045
    %3047 = vmatprep.mubr.f32.mxu0 %v2945
    %3048 = vmatmul.mubr.f32.gmra.mrb[0].mxu0 %v2861
    %v3049 = vpop.f32.mrb[0].mxu0
    %v3050 = vadd.f32 0.0, %v3049
    %v3051 = vpop.f32.mrb[0].mxu0
    %v3052 = vadd.f32 0.0, %v3051
    %3053 = vdwg.mxu0
    %v3054 = vadd.f32 %v2695, %v3014
    %v3055 = vadd.f32 %v2696, %v3016
    %v3056 = vadd.f32 %v2697, %v3020
    %v3057 = vadd.f32 %v2698, %v3022
    %v3058 = vadd.f32 %v2699, %v3026
    %v3059 = vadd.f32 %v2700, %v3028
    %v3060 = vadd.f32 %v2701, %v3032
    %v3061 = vadd.f32 %v2702, %v3034
    %v3062 = vadd.f32 %v2703, %v3038
    %v3063 = vadd.f32 %v2704, %v3040
    %v3064 = vadd.f32 %v2705, %v3044
    %v3065 = vadd.f32 %v2706, %v3046
    %v3066 = vadd.f32 %v2707, %v3050
    %v3067 = vadd.f32 %v2708, %v3052
    %v3068 = vadd.s32 %v50, 8
    %v3069 = vadd.s32 %v51, 8
    %v3070 = vadd.s32 %v52, 8
    %v3071 = vadd.s32 %v53, 8
    %v3072 = vadd.s32 %v54, 8
    %v3073 = vadd.s32 %v55, 8
    %vm3074 = vcmp.eq.s32.totalorder %v57, %v50
    %vm3075 = vcmp.eq.s32.totalorder %v57, %v3068
    %vm3076 = vcmp.eq.s32.totalorder %v57, %v3069
    %vm3077 = vcmp.eq.s32.totalorder %v57, %v3070
    %vm3078 = vcmp.eq.s32.totalorder %v57, %v3071
    %vm3079 = vcmp.eq.s32.totalorder %v57, %v3072
    %vm3080 = vcmp.eq.s32.totalorder %v57, %v3073
    %v3081 = vsel %vm3074, 1, 0
    %v3082 = vsel %vm3075, 1, 0
    %v3083 = vsel %vm3076, 1, 0
    %v3084 = vsel %vm3077, 1, 0
    %v3085 = vsel %vm3078, 1, 0
    %v3086 = vsel %vm3079, 1, 0
    %v3087 = vsel %vm3080, 1, 0
    %v3088 = vcvt.s32.f32 %v3081
    %v3089 = vcvt.s32.f32 %v3082
    %v3090 = vcvt.s32.f32 %v3083
    %v3091 = vcvt.s32.f32 %v3084
    %v3092 = vcvt.s32.f32 %v3085
    %v3093 = vcvt.s32.f32 %v3086
    %v3094 = vcvt.s32.f32 %v3087
    %v3096 = vsel %vm86, %v3088, 0
    %v3099 = vsel %vm86, %v3089, 0
    %v3102 = vsel %vm86, %v3090, 0
    %v3105 = vsel %vm86, %v3091, 0
    %v3108 = vsel %vm86, %v3092, 0
    %v3111 = vsel %vm86, %v3093, 0
    %v3114 = vsel %vm86, %v3094, 0
    %3116 = vmatprep.subr.mxu0 %v1902
    %3117 = vmatpush1.msra.mxu0 %v1901
    %3118 = vmatprep.subr.mxu0 %v1904
    %3119 = vmatpush1.msra.mxu0 %v1903
    %3120 = vmatprep.subr.mxu0 %v1906
    %3121 = vmatpush1.msra.mxu0 %v1905
    %3122 = vmatprep.subr.mxu0 %v1908
    %3123 = vmatpush1.msra.mxu0 %v1907
    %3124 = vmatprep.subr.mxu0 %v1910
    %3125 = vmatpush1.msra.mxu0 %v1909
    %3126 = vmatprep.subr.mxu0 %v1912
    %3127 = vmatpush1.msra.mxu0 %v1911
    %3128 = vmatprep.subr.mxu0 %v1914
    %3129 = vmatpush1.msra.mxu0 %v1913
    %3130 = vmatprep.subr.mxu0 0.0
    %3131 = vmatpush1.msra.mxu0 0.0
    %3132 = vmatprep.subr.mxu0 0.0
    %3133 = vmatpush1.msra.mxu0 0.0
    %3134 = vmatprep.subr.mxu0 0.0
    %3135 = vmatpush1.msra.mxu0 0.0
    %3136 = vmatprep.subr.mxu0 0.0
    %3137 = vmatpush1.msra.mxu0 0.0
    %3138 = vmatprep.subr.mxu0 0.0
    %3139 = vmatpush1.msra.mxu0 0.0
    %3140 = vmatprep.subr.mxu0 0.0
    %3141 = vmatpush1.msra.mxu0 0.0
    %3142 = vmatprep.subr.mxu0 0.0
    %3143 = vmatpush1.msra.mxu0 0.0
    %3144 = vmatprep.subr.mxu0 0.0
    %3145 = vmatpush1.msra.mxu0 0.0
    %3146 = vmatprep.subr.mxu0 0.0
    %3147 = vmatpush1.msra.mxu0 0.0
    %3148 = vmatprep.subr.mxu0 0.0
    %3149 = vmatpush1.msra.mxu0 0.0
    %3150 = vmatprep.subr.mxu0 0.0
    %3151 = vmatpush1.msra.mxu0 0.0
    %3152 = vmatprep.subr.mxu0 0.0
    %3153 = vmatpush1.msra.mxu0 0.0
    %3154 = vmatprep.subr.mxu0 0.0
    %3155 = vmatpush1.msra.mxu0 0.0
    %3156 = vmatprep.subr.mxu0 0.0
    %3157 = vmatpush1.msra.mxu0 0.0
    %3158 = vmatprep.subr.mxu0 0.0
    %3159 = vmatpush1.msra.mxu0 0.0
    %3160 = vmatprep.subr.mxu0 0.0
    %3161 = vmatpush1.msra.mxu0 0.0
    %3162 = vmatprep.subr.mxu0 0.0
    %3163 = vmatpush1.msra.mxu0 0.0
    %3164 = vmatprep.subr.mxu0 0.0
    %3165 = vmatpush1.msra.mxu0 0.0
    %3166 = vmatprep.subr.mxu0 0.0
    %3167 = vmatpush1.msra.mxu0 0.0
    %3168 = vmatprep.subr.mxu0 0.0
    %3169 = vmatpush1.msra.mxu0 0.0
    %3170 = vmatprep.subr.mxu0 0.0
    %3171 = vmatpush1.msra.mxu0 0.0
    %3172 = vmatprep.subr.mxu0 0.0
    %3173 = vmatpush1.msra.mxu0 0.0
    %3174 = vmatprep.subr.mxu0 0.0
    %3175 = vmatpush1.msra.mxu0 0.0
    %3176 = vmatprep.subr.mxu0 0.0
    %3177 = vmatpush1.msra.mxu0 0.0
    %3178 = vmatprep.subr.mxu0 0.0
    %3179 = vmatpush1.msra.mxu0 0.0
    %3180 = vmatprep.mubr.f32.mxu0 0.0
    %3181 = vmatmul.mubr.f32.gmra.mrb[0].mxu0 %v3096
    %v3182 = vpop.f32.mrb[0].mxu0
    %v3183 = vadd.f32 0.0, %v3182
    %v3184 = vpop.f32.mrb[0].mxu0
    %v3185 = vadd.f32 0.0, %v3184
    %3186 = vmatprep.mubr.f32.mxu0 0.0
    %3187 = vmatmul.mubr.f32.gmra.mrb[0].mxu0 %v3099
    %v3188 = vpop.f32.mrb[0].mxu0
    %v3189 = vadd.f32 0.0, %v3188
    %v3190 = vpop.f32.mrb[0].mxu0
    %v3191 = vadd.f32 0.0, %v3190
    %3192 = vmatprep.mubr.f32.mxu0 0.0
    %3193 = vmatmul.mubr.f32.gmra.mrb[0].mxu0 %v3102
    %v3194 = vpop.f32.mrb[0].mxu0
    %v3195 = vadd.f32 0.0, %v3194
    %v3196 = vpop.f32.mrb[0].mxu0
    %v3197 = vadd.f32 0.0, %v3196
    %3198 = vmatprep.mubr.f32.mxu0 0.0
    %3199 = vmatmul.mubr.f32.gmra.mrb[0].mxu0 %v3105
    %v3200 = vpop.f32.mrb[0].mxu0
    %v3201 = vadd.f32 0.0, %v3200
    %v3202 = vpop.f32.mrb[0].mxu0
    %v3203 = vadd.f32 0.0, %v3202
    %3204 = vmatprep.mubr.f32.mxu0 0.0
    %3205 = vmatmul.mubr.f32.gmra.mrb[0].mxu0 %v3108
    %v3206 = vpop.f32.mrb[0].mxu0
    %v3207 = vadd.f32 0.0, %v3206
    %v3208 = vpop.f32.mrb[0].mxu0
    %v3209 = vadd.f32 0.0, %v3208
    %3210 = vmatprep.mubr.f32.mxu0 0.0
    %3211 = vmatmul.mubr.f32.gmra.mrb[0].mxu0 %v3111
    %v3212 = vpop.f32.mrb[0].mxu0
    %v3213 = vadd.f32 0.0, %v3212
    %v3214 = vpop.f32.mrb[0].mxu0
    %v3215 = vadd.f32 0.0, %v3214
    %3216 = vmatprep.mubr.f32.mxu0 0.0
    %3217 = vmatmul.mubr.f32.gmra.mrb[0].mxu0 %v3114
    %v3218 = vpop.f32.mrb[0].mxu0
    %v3219 = vadd.f32 0.0, %v3218
    %v3220 = vpop.f32.mrb[0].mxu0
    %v3221 = vadd.f32 0.0, %v3220
    %3222 = vdwg.mxu0
    %s3223 = scalar_lea.vmem %s3, 1920
    %v3224 = vld [vmem:[%s3223] sm:$0xff]
    %v3225 = vld [vmem:[%s3223 + $0x8] sm:$0xff]
    %v3226 = vld [vmem:[%s3223 + $0x10] sm:$0xff]
    %v3227 = vld [vmem:[%s3223 + $0x18] sm:$0xff]
    %v3228 = vld [vmem:[%s3223 + $0x20] sm:$0xff]
    %v3229 = vld [vmem:[%s3223 + $0x28] sm:$0xff]
    %v3230 = vld [vmem:[%s3223 + $0x30] sm:$0xff]
    %v3231 = vld [vmem:[%s3223 + $0x38] sm:$0xff]
    %v3232 = vld [vmem:[%s3223 + $0x40] sm:$0xff]
    %v3233 = vld [vmem:[%s3223 + $0x48] sm:$0xff]
    %v3234 = vld [vmem:[%s3223 + $0x50] sm:$0xff]
    %v3235 = vld [vmem:[%s3223 + $0x58] sm:$0xff]
    %v3236 = vld [vmem:[%s3223 + $0x60] sm:$0xff]
    %v3237 = vld [vmem:[%s3223 + $0x68] sm:$0xff]
    %v3238 = vld [vmem:[%s3223 + $0x70] sm:$0xff]
    %v3239 = vld [vmem:[%s3223 + $0x78] sm:$0xff]
    %v3240 = vld [vmem:[%s3223 + $0x80] sm:$0xff]
    %v3241 = vld [vmem:[%s3223 + $0x88] sm:$0xff]
    %v3242 = vld [vmem:[%s3223 + $0x90] sm:$0xff]
    %v3243 = vld [vmem:[%s3223 + $0x98] sm:$0xff]
    %v3244 = vld [vmem:[%s3223 + $0xa0] sm:$0xff]
    %v3245 = vld [vmem:[%s3223 + $0xa8] sm:$0xff]
    %v3246 = vld [vmem:[%s3223 + $0xb0] sm:$0xff]
    %v3247 = vld [vmem:[%s3223 + $0xb8] sm:$0xff]
    %v3248 = vld [vmem:[%s3223 + $0xc0] sm:$0xff]
    %v3249 = vld [vmem:[%s3223 + $0xc8] sm:$0xff]
    %v3250 = vld [vmem:[%s3223 + $0xd0] sm:$0xff]
    %v3251 = vld [vmem:[%s3223 + $0xd8] sm:$0xff]
    %v3252 = vld [vmem:[%s3223 + $0xe0] sm:$0xff]
    %v3253 = vld [vmem:[%s3223 + $0xe8] sm:$0xff]
    %v3254 = vld [vmem:[%s3223 + $0xf0] sm:$0xff]
    %v3255 = vld [vmem:[%s3223 + $0xf8] sm:$0xff]
    %v3256 = vld [vmem:[%s3223 + $0x100] sm:$0xff]
    %v3257 = vld [vmem:[%s3223 + $0x108] sm:$0xff]
    %v3258 = vld [vmem:[%s3223 + $0x110] sm:$0xff]
    %v3259 = vld [vmem:[%s3223 + $0x118] sm:$0xff]
    %v3260 = vld [vmem:[%s3223 + $0x120] sm:$0xff]
    %v3261 = vld [vmem:[%s3223 + $0x128] sm:$0xff]
    %v3262 = vld [vmem:[%s3223 + $0x130] sm:$0xff]
    %v3263 = vld [vmem:[%s3223 + $0x138] sm:$0xff]
    %v3264 = vld [vmem:[%s3223 + $0x140] sm:$0xff]
    %v3265 = vld [vmem:[%s3223 + $0x148] sm:$0xff]
    %v3266 = vld [vmem:[%s3223 + $0x150] sm:$0xff]
    %v3267 = vld [vmem:[%s3223 + $0x158] sm:$0xff]
    %v3268 = vld [vmem:[%s3223 + $0x160] sm:$0xff]
    %v3269 = vld [vmem:[%s3223 + $0x168] sm:$0xff]
    %v3270 = vld [vmem:[%s3223 + $0x170] sm:$0xff]
    %v3271 = vld [vmem:[%s3223 + $0x178] sm:$0xff]
    %v3272 = vld [vmem:[%s3223 + $0x180] sm:$0xff]
    %v3273 = vld [vmem:[%s3223 + $0x188] sm:$0xff]
    %v3274 = vld [vmem:[%s3223 + $0x190] sm:$0xff]
    %v3275 = vld [vmem:[%s3223 + $0x198] sm:$0xff]
    %v3276 = vld [vmem:[%s3223 + $0x1a0] sm:$0xff]
    %v3277 = vld [vmem:[%s3223 + $0x1a8] sm:$0xff]
    %v3278 = vld [vmem:[%s3223 + $0x1b0] sm:$0xff]
    %v3279 = vld [vmem:[%s3223 + $0x1b8] sm:$0xff]
    %v3280 = vld [vmem:[%s3223 + $0x1c0] sm:$0xff]
    %v3281 = vld [vmem:[%s3223 + $0x1c8] sm:$0xff]
    %v3282 = vld [vmem:[%s3223 + $0x1d0] sm:$0xff]
    %v3283 = vld [vmem:[%s3223 + $0x1d8] sm:$0xff]
    %v3285 = vsel %vm1758, %v3185, 0
    %v3288 = vsel %vm1758, %v3191, 0
    %v3291 = vsel %vm1758, %v3197, 0
    %v3294 = vsel %vm1758, %v3203, 0
    %v3297 = vsel %vm1758, %v3209, 0
    %v3300 = vsel %vm1758, %v3215, 0
    %v3303 = vsel %vm1758, %v3221, 0
    %3305 = vmatprep.subr.mxu0 %v3225
    %3306 = vmatpush1.msra.mxu0 %v3224
    %3307 = vmatprep.subr.mxu0 %v3227
    %3308 = vmatpush1.msra.mxu0 %v3226
    %3309 = vmatprep.subr.mxu0 %v3229
    %3310 = vmatpush1.msra.mxu0 %v3228
    %3311 = vmatprep.subr.mxu0 %v3231
    %3312 = vmatpush1.msra.mxu0 %v3230
    %3313 = vmatprep.subr.mxu0 %v3233
    %3314 = vmatpush1.msra.mxu0 %v3232
    %3315 = vmatprep.subr.mxu0 %v3235
    %3316 = vmatpush1.msra.mxu0 %v3234
    %3317 = vmatprep.subr.mxu0 %v3237
    %3318 = vmatpush1.msra.mxu0 %v3236
    %3319 = vmatprep.subr.mxu0 %v3239
    %3320 = vmatpush1.msra.mxu0 %v3238
    %3321 = vmatprep.subr.mxu0 %v3241
    %3322 = vmatpush1.msra.mxu0 %v3240
    %3323 = vmatprep.subr.mxu0 %v3243
    %3324 = vmatpush1.msra.mxu0 %v3242
    %3325 = vmatprep.subr.mxu0 %v3245
    %3326 = vmatpush1.msra.mxu0 %v3244
    %3327 = vmatprep.subr.mxu0 %v3247
    %3328 = vmatpush1.msra.mxu0 %v3246
    %3329 = vmatprep.subr.mxu0 %v3249
    %3330 = vmatpush1.msra.mxu0 %v3248
    %3331 = vmatprep.subr.mxu0 %v3251
    %3332 = vmatpush1.msra.mxu0 %v3250
    %3333 = vmatprep.subr.mxu0 %v3253
    %3334 = vmatpush1.msra.mxu0 %v3252
    %3335 = vmatprep.subr.mxu0 %v3255
    %3336 = vmatpush1.msra.mxu0 %v3254
    %3337 = vmatprep.subr.mxu0 %v3257
    %3338 = vmatpush1.msra.mxu0 %v3256
    %3339 = vmatprep.subr.mxu0 %v3259
    %3340 = vmatpush1.msra.mxu0 %v3258
    %3341 = vmatprep.subr.mxu0 %v3261
    %3342 = vmatpush1.msra.mxu0 %v3260
    %3343 = vmatprep.subr.mxu0 %v3263
    %3344 = vmatpush1.msra.mxu0 %v3262
    %3345 = vmatprep.subr.mxu0 %v3265
    %3346 = vmatpush1.msra.mxu0 %v3264
    %3347 = vmatprep.subr.mxu0 %v3267
    %3348 = vmatpush1.msra.mxu0 %v3266
    %3349 = vmatprep.subr.mxu0 %v3269
    %3350 = vmatpush1.msra.mxu0 %v3268
    %3351 = vmatprep.subr.mxu0 %v3271
    %3352 = vmatpush1.msra.mxu0 %v3270
    %3353 = vmatprep.subr.mxu0 %v3273
    %3354 = vmatpush1.msra.mxu0 %v3272
    %3355 = vmatprep.subr.mxu0 %v3275
    %3356 = vmatpush1.msra.mxu0 %v3274
    %3357 = vmatprep.subr.mxu0 %v3277
    %3358 = vmatpush1.msra.mxu0 %v3276
    %3359 = vmatprep.subr.mxu0 %v3279
    %3360 = vmatpush1.msra.mxu0 %v3278
    %3361 = vmatprep.subr.mxu0 %v3281
    %3362 = vmatpush1.msra.mxu0 %v3280
    %3363 = vmatprep.subr.mxu0 %v3283
    %3364 = vmatpush1.msra.mxu0 %v3282
    %3365 = vmatprep.subr.mxu0 0.0
    %3366 = vmatpush1.msra.mxu0 0.0
    %3367 = vmatprep.subr.mxu0 0.0
    %3368 = vmatpush1.msra.mxu0 0.0
    %3369 = vmatprep.mubr.f32.mxu0 %v3285
    %3370 = vmatmul.mubr.f32.gmra.mrb[0].mxu0 %v3183
    %v3371 = vpop.f32.mrb[0].mxu0
    %v3372 = vadd.f32 0.0, %v3371
    %v3373 = vpop.f32.mrb[0].mxu0
    %v3374 = vadd.f32 0.0, %v3373
    %3375 = vmatprep.mubr.f32.mxu0 %v3288
    %3376 = vmatmul.mubr.f32.gmra.mrb[0].mxu0 %v3189
    %v3377 = vpop.f32.mrb[0].mxu0
    %v3378 = vadd.f32 0.0, %v3377
    %v3379 = vpop.f32.mrb[0].mxu0
    %v3380 = vadd.f32 0.0, %v3379
    %3381 = vmatprep.mubr.f32.mxu0 %v3291
    %3382 = vmatmul.mubr.f32.gmra.mrb[0].mxu0 %v3195
    %v3383 = vpop.f32.mrb[0].mxu0
    %v3384 = vadd.f32 0.0, %v3383
    %v3385 = vpop.f32.mrb[0].mxu0
    %v3386 = vadd.f32 0.0, %v3385
    %3387 = vmatprep.mubr.f32.mxu0 %v3294
    %3388 = vmatmul.mubr.f32.gmra.mrb[0].mxu0 %v3201
    %v3389 = vpop.f32.mrb[0].mxu0
    %v3390 = vadd.f32 0.0, %v3389
    %v3391 = vpop.f32.mrb[0].mxu0
    %v3392 = vadd.f32 0.0, %v3391
    %3393 = vmatprep.mubr.f32.mxu0 %v3297
    %3394 = vmatmul.mubr.f32.gmra.mrb[0].mxu0 %v3207
    %v3395 = vpop.f32.mrb[0].mxu0
    %v3396 = vadd.f32 0.0, %v3395
    %v3397 = vpop.f32.mrb[0].mxu0
    %v3398 = vadd.f32 0.0, %v3397
    %3399 = vmatprep.mubr.f32.mxu0 %v3300
    %3400 = vmatmul.mubr.f32.gmra.mrb[0].mxu0 %v3213
    %v3401 = vpop.f32.mrb[0].mxu0
    %v3402 = vadd.f32 0.0, %v3401
    %v3403 = vpop.f32.mrb[0].mxu0
    %v3404 = vadd.f32 0.0, %v3403
    %3405 = vmatprep.mubr.f32.mxu0 %v3303
    %3406 = vmatmul.mubr.f32.gmra.mrb[0].mxu0 %v3219
    %v3407 = vpop.f32.mrb[0].mxu0
    %v3408 = vadd.f32 0.0, %v3407
    %v3409 = vpop.f32.mrb[0].mxu0
    %v3410 = vadd.f32 0.0, %v3409
    %3411 = vdwg.mxu0
    %v3412 = vadd.f32 %v3054, %v3372
    %v3413 = vadd.f32 %v3055, %v3374
    %v3414 = vadd.f32 %v3056, %v3378
    %v3415 = vadd.f32 %v3057, %v3380
    %v3416 = vadd.f32 %v3058, %v3384
    %v3417 = vadd.f32 %v3059, %v3386
    %v3418 = vadd.f32 %v3060, %v3390
    %v3419 = vadd.f32 %v3061, %v3392
    %v3420 = vadd.f32 %v3062, %v3396
    %v3421 = vadd.f32 %v3063, %v3398
    %v3422 = vadd.f32 %v3064, %v3402
    %v3423 = vadd.f32 %v3065, %v3404
    %v3424 = vadd.f32 %v3066, %v3408
    %v3425 = vadd.f32 %v3067, %v3410
    %v3426 = vld [vmem:[%s4] sm:$0x3]
    %v3428 = vlaneseq
    %v3429 = vshrl.u32 %v3428, 7
    %v3430 = vsub.s32 0, %v3429
    %v3431 = vrot.slane %v3426, %v3430
    %v3432 = vlaneseq
    %v3433 = vshrl.u32 %v3432, 7
    %v3434 = vsub.s32 1, %v3433
    %v3435 = vrot.slane %v3426, %v3434
    %v3438 = vadd.f32 %v3412, %v3431
    %v3439 = vadd.f32 %v3413, %v3435
    %v3440 = vadd.f32 %v3414, %v3431
    %v3441 = vadd.f32 %v3415, %v3435
    %v3442 = vadd.f32 %v3416, %v3431
    %v3443 = vadd.f32 %v3417, %v3435
    %v3444 = vadd.f32 %v3418, %v3431
    %v3445 = vadd.f32 %v3419, %v3435
    %v3446 = vadd.f32 %v3420, %v3431
    %v3447 = vadd.f32 %v3421, %v3435
    %v3448 = vadd.f32 %v3422, %v3431
    %v3449 = vadd.f32 %v3423, %v3435
    %v3450 = vadd.f32 %v3424, %v3431
    %v3451 = vadd.f32 %v3425, %v3435
    %3452 = vmatprep.subr.mxu0 %v3439
    %3453 = vmatpush1.msra.mxu0 %v3438
    %3454 = vmatprep.subr.mxu0 %v3441
    %3455 = vmatpush1.msra.mxu0 %v3440
    %3456 = vmatprep.subr.mxu0 %v3443
    %3457 = vmatpush1.msra.mxu0 %v3442
    %3458 = vmatprep.subr.mxu0 %v3445
    %3459 = vmatpush1.msra.mxu0 %v3444
    %3460 = vmatprep.subr.mxu0 %v3447
    %3461 = vmatpush1.msra.mxu0 %v3446
    %3462 = vmatprep.subr.mxu0 %v3449
    %3463 = vmatpush1.msra.mxu0 %v3448
    %3464 = vmatprep.subr.mxu0 %v3451
    %3465 = vmatpush1.msra.mxu0 %v3450
    %3466 = vmatprep.subr.mxu0 0.0
    %3467 = vmatpush1.msra.mxu0 0.0
    %3468 = vmatprep.subr.mxu0 0.0
    %3469 = vmatpush1.msra.mxu0 0.0
    %3470 = vmatprep.subr.mxu0 0.0
    %3471 = vmatpush1.msra.mxu0 0.0
    %3472 = vmatprep.subr.mxu0 0.0
    %3473 = vmatpush1.msra.mxu0 0.0
    %3474 = vmatprep.subr.mxu0 0.0
    %3475 = vmatpush1.msra.mxu0 0.0
    %3476 = vmatprep.subr.mxu0 0.0
    %3477 = vmatpush1.msra.mxu0 0.0
    %3478 = vmatprep.subr.mxu0 0.0
    %3479 = vmatpush1.msra.mxu0 0.0
    %3480 = vmatprep.subr.mxu0 0.0
    %3481 = vmatpush1.msra.mxu0 0.0
    %3482 = vmatprep.subr.mxu0 0.0
    %3483 = vmatpush1.msra.mxu0 0.0
    %3484 = vmatprep.subr.mxu0 0.0
    %3485 = vmatpush1.msra.mxu0 0.0
    %3486 = vmatprep.subr.mxu0 0.0
    %3487 = vmatpush1.msra.mxu0 0.0
    %3488 = vmatprep.subr.mxu0 0.0
    %3489 = vmatpush1.msra.mxu0 0.0
    %3490 = vmatprep.subr.mxu0 0.0
    %3491 = vmatpush1.msra.mxu0 0.0
    %3492 = vmatprep.subr.mxu0 0.0
    %3493 = vmatpush1.msra.mxu0 0.0
    %3494 = vmatprep.subr.mxu0 0.0
    %3495 = vmatpush1.msra.mxu0 0.0
    %3496 = vmatprep.subr.mxu0 0.0
    %3497 = vmatpush1.msra.mxu0 0.0
    %3498 = vmatprep.subr.mxu0 0.0
    %3499 = vmatpush1.msra.mxu0 0.0
    %3500 = vmatprep.subr.mxu0 0.0
    %3501 = vmatpush1.msra.mxu0 0.0
    %3502 = vmatprep.subr.mxu0 0.0
    %3503 = vmatpush1.msra.mxu0 0.0
    %3504 = vmatprep.subr.mxu0 0.0
    %3505 = vmatpush1.msra.mxu0 0.0
    %3506 = vmatprep.subr.mxu0 0.0
    %3507 = vmatpush1.msra.mxu0 0.0
    %3508 = vmatprep.subr.mxu0 0.0
    %3509 = vmatpush1.msra.mxu0 0.0
    %3510 = vmatprep.subr.mxu0 0.0
    %3511 = vmatpush1.msra.mxu0 0.0
    %3512 = vmatprep.subr.mxu0 0.0
    %3513 = vmatpush1.msra.mxu0 0.0
    %3514 = vmatprep.subr.mxu0 0.0
    %3515 = vmatpush1.msra.mxu0 0.0
    %3516 = vmatprep.mubr.f32.mxu0 0.0
    %3517 = vmatmul.mubr.f32.gmra.mrb[0].mxu0 %v516
    %v3518 = vpop.f32.mrb[0].mxu0
    %v3519 = vadd.f32 0.0, %v3518
    %v3520 = vpop.f32.mrb[0].mxu0
    %v3521 = vadd.f32 0.0, %v3520
    %3522 = vmatprep.mubr.f32.mxu0 0.0
    %3523 = vmatmul.mubr.f32.gmra.mrb[0].mxu0 %v519
    %v3524 = vpop.f32.mrb[0].mxu0
    %v3525 = vadd.f32 0.0, %v3524
    %v3526 = vpop.f32.mrb[0].mxu0
    %v3527 = vadd.f32 0.0, %v3526
    %3528 = vmatprep.mubr.f32.mxu0 0.0
    %3529 = vmatmul.mubr.f32.gmra.mrb[0].mxu0 %v522
    %v3530 = vpop.f32.mrb[0].mxu0
    %v3531 = vadd.f32 0.0, %v3530
    %v3532 = vpop.f32.mrb[0].mxu0
    %v3533 = vadd.f32 0.0, %v3532
    %3534 = vmatprep.mubr.f32.mxu0 0.0
    %3535 = vmatmul.mubr.f32.gmra.mrb[0].mxu0 %v525
    %v3536 = vpop.f32.mrb[0].mxu0
    %v3537 = vadd.f32 0.0, %v3536
    %v3538 = vpop.f32.mrb[0].mxu0
    %v3539 = vadd.f32 0.0, %v3538
    %3540 = vmatprep.mubr.f32.mxu0 0.0
    %3541 = vmatmul.mubr.f32.gmra.mrb[0].mxu0 %v528
    %v3542 = vpop.f32.mrb[0].mxu0
    %v3543 = vadd.f32 0.0, %v3542
    %v3544 = vpop.f32.mrb[0].mxu0
    %v3545 = vadd.f32 0.0, %v3544
    %3546 = vmatprep.mubr.f32.mxu0 0.0
    %3547 = vmatmul.mubr.f32.gmra.mrb[0].mxu0 %v531
    %v3548 = vpop.f32.mrb[0].mxu0
    %v3549 = vadd.f32 0.0, %v3548
    %v3550 = vpop.f32.mrb[0].mxu0
    %v3551 = vadd.f32 0.0, %v3550
    %3552 = vmatprep.mubr.f32.mxu0 0.0
    %3553 = vmatmul.mubr.f32.gmra.mrb[0].mxu0 %v534
    %v3554 = vpop.f32.mrb[0].mxu0
    %v3555 = vadd.f32 0.0, %v3554
    %v3556 = vpop.f32.mrb[0].mxu0
    %v3557 = vadd.f32 0.0, %v3556
    %3558 = vdwg.mxu0
    %v3559 = vmax.f32 %v3438, %v3519
    %v3560 = vmax.f32 %v3439, %v3521
    %v3561 = vmax.f32 %v3440, %v3525
    %v3562 = vmax.f32 %v3441, %v3527
    %v3563 = vmax.f32 %v3442, %v3531
    %v3564 = vmax.f32 %v3443, %v3533
    %v3565 = vmax.f32 %v3444, %v3537
    %v3566 = vmax.f32 %v3445, %v3539
    %v3567 = vmax.f32 %v3446, %v3543
    %v3568 = vmax.f32 %v3447, %v3545
    %v3569 = vmax.f32 %v3448, %v3549
    %v3570 = vmax.f32 %v3449, %v3551
    %v3571 = vmax.f32 %v3450, %v3555
    %v3572 = vmax.f32 %v3451, %v3557
    %vm3573 = vcmask 261120
    %v3575 = vsel %vm3573, %v3560, 0
    %v3578 = vsel %vm3573, %v3562, 0
    %v3581 = vsel %vm3573, %v3564, 0
    %v3584 = vsel %vm3573, %v3566, 0
    %v3587 = vsel %vm3573, %v3568, 0
    %v3590 = vsel %vm3573, %v3570, 0
    %v3593 = vsel %vm3573, %v3572, 0
    %3595 = vmatprep.subr.mxu0 %v1699
    %3596 = vmatpush1.msra.mxu0 %v1698
    %3597 = vmatprep.subr.mxu0 %v1701
    %3598 = vmatpush1.msra.mxu0 %v1700
    %3599 = vmatprep.subr.mxu0 %v1703
    %3600 = vmatpush1.msra.mxu0 %v1702
    %3601 = vmatprep.subr.mxu0 %v1705
    %3602 = vmatpush1.msra.mxu0 %v1704
    %3603 = vmatprep.subr.mxu0 %v1707
    %3604 = vmatpush1.msra.mxu0 %v1706
    %3605 = vmatprep.subr.mxu0 %v1709
    %3606 = vmatpush1.msra.mxu0 %v1708
    %3607 = vmatprep.subr.mxu0 %v1711
    %3608 = vmatpush1.msra.mxu0 %v1710
    %3609 = vmatprep.subr.mxu0 %v1713
    %3610 = vmatpush1.msra.mxu0 %v1712
    %3611 = vmatprep.subr.mxu0 %v1715
    %3612 = vmatpush1.msra.mxu0 %v1714
    %3613 = vmatprep.subr.mxu0 %v1717
    %3614 = vmatpush1.msra.mxu0 %v1716
    %3615 = vmatprep.subr.mxu0 %v1719
    %3616 = vmatpush1.msra.mxu0 %v1718
    %3617 = vmatprep.subr.mxu0 %v1721
    %3618 = vmatpush1.msra.mxu0 %v1720
    %3619 = vmatprep.subr.mxu0 %v1723
    %3620 = vmatpush1.msra.mxu0 %v1722
    %3621 = vmatprep.subr.mxu0 %v1725
    %3622 = vmatpush1.msra.mxu0 %v1724
    %3623 = vmatprep.subr.mxu0 %v1727
    %3624 = vmatpush1.msra.mxu0 %v1726
    %3625 = vmatprep.subr.mxu0 %v1729
    %3626 = vmatpush1.msra.mxu0 %v1728
    %3627 = vmatprep.subr.mxu0 %v1731
    %3628 = vmatpush1.msra.mxu0 %v1730
    %3629 = vmatprep.subr.mxu0 %v1733
    %3630 = vmatpush1.msra.mxu0 %v1732
    %3631 = vmatprep.subr.mxu0 %v1735
    %3632 = vmatpush1.msra.mxu0 %v1734
    %3633 = vmatprep.subr.mxu0 %v1737
    %3634 = vmatpush1.msra.mxu0 %v1736
    %3635 = vmatprep.subr.mxu0 0.0
    %3636 = vmatpush1.msra.mxu0 0.0
    %3637 = vmatprep.subr.mxu0 0.0
    %3638 = vmatpush1.msra.mxu0 0.0
    %3639 = vmatprep.subr.mxu0 0.0
    %3640 = vmatpush1.msra.mxu0 0.0
    %3641 = vmatprep.subr.mxu0 0.0
    %3642 = vmatpush1.msra.mxu0 0.0
    %3643 = vmatprep.subr.mxu0 0.0
    %3644 = vmatpush1.msra.mxu0 0.0
    %3645 = vmatprep.subr.mxu0 0.0
    %3646 = vmatpush1.msra.mxu0 0.0
    %3647 = vmatprep.subr.mxu0 0.0
    %3648 = vmatpush1.msra.mxu0 0.0
    %3649 = vmatprep.subr.mxu0 0.0
    %3650 = vmatpush1.msra.mxu0 0.0
    %3651 = vmatprep.subr.mxu0 0.0
    %3652 = vmatpush1.msra.mxu0 0.0
    %3653 = vmatprep.subr.mxu0 0.0
    %3654 = vmatpush1.msra.mxu0 0.0
    %3655 = vmatprep.subr.mxu0 0.0
    %3656 = vmatpush1.msra.mxu0 0.0
    %3657 = vmatprep.subr.mxu0 0.0
    %3658 = vmatpush1.msra.mxu0 0.0
    %3659 = vmatprep.mubr.f32.mxu0 %v3575
    %3660 = vmatmul.mubr.f32.gmra.mrb[0].mxu0 %v3559
    %v3661 = vpop.f32.mrb[0].mxu0
    %v3662 = vadd.f32 0.0, %v3661
    %v3663 = vpop.f32.mrb[0].mxu0
    %v3664 = vadd.f32 0.0, %v3663
    %3665 = vmatprep.mubr.f32.mxu0 %v3578
    %3666 = vmatmul.mubr.f32.gmra.mrb[0].mxu0 %v3561
    %v3667 = vpop.f32.mrb[0].mxu0
    %v3668 = vadd.f32 0.0, %v3667
    %v3669 = vpop.f32.mrb[0].mxu0
    %v3670 = vadd.f32 0.0, %v3669
    %3671 = vmatprep.mubr.f32.mxu0 %v3581
    %3672 = vmatmul.mubr.f32.gmra.mrb[0].mxu0 %v3563
    %v3673 = vpop.f32.mrb[0].mxu0
    %v3674 = vadd.f32 0.0, %v3673
    %v3675 = vpop.f32.mrb[0].mxu0
    %v3676 = vadd.f32 0.0, %v3675
    %3677 = vmatprep.mubr.f32.mxu0 %v3584
    %3678 = vmatmul.mubr.f32.gmra.mrb[0].mxu0 %v3565
    %v3679 = vpop.f32.mrb[0].mxu0
    %v3680 = vadd.f32 0.0, %v3679
    %v3681 = vpop.f32.mrb[0].mxu0
    %v3682 = vadd.f32 0.0, %v3681
    %3683 = vmatprep.mubr.f32.mxu0 %v3587
    %3684 = vmatmul.mubr.f32.gmra.mrb[0].mxu0 %v3567
    %v3685 = vpop.f32.mrb[0].mxu0
    %v3686 = vadd.f32 0.0, %v3685
    %v3687 = vpop.f32.mrb[0].mxu0
    %v3688 = vadd.f32 0.0, %v3687
    %3689 = vmatprep.mubr.f32.mxu0 %v3590
    %3690 = vmatmul.mubr.f32.gmra.mrb[0].mxu0 %v3569
    %v3691 = vpop.f32.mrb[0].mxu0
    %v3692 = vadd.f32 0.0, %v3691
    %v3693 = vpop.f32.mrb[0].mxu0
    %v3694 = vadd.f32 0.0, %v3693
    %3695 = vmatprep.mubr.f32.mxu0 %v3593
    %3696 = vmatmul.mubr.f32.gmra.mrb[0].mxu0 %v3571
    %v3697 = vpop.f32.mrb[0].mxu0
    %v3698 = vadd.f32 0.0, %v3697
    %v3699 = vpop.f32.mrb[0].mxu0
    %v3700 = vadd.f32 0.0, %v3699
    %3701 = vdwg.mxu0
    %v3702 = vmax.f32 %v3559, %v3662
    %v3703 = vmax.f32 %v3560, %v3664
    %v3704 = vmax.f32 %v3561, %v3668
    %v3705 = vmax.f32 %v3562, %v3670
    %v3706 = vmax.f32 %v3563, %v3674
    %v3707 = vmax.f32 %v3564, %v3676
    %v3708 = vmax.f32 %v3565, %v3680
    %v3709 = vmax.f32 %v3566, %v3682
    %v3710 = vmax.f32 %v3567, %v3686
    %v3711 = vmax.f32 %v3568, %v3688
    %v3712 = vmax.f32 %v3569, %v3692
    %v3713 = vmax.f32 %v3570, %v3694
    %v3714 = vmax.f32 %v3571, %v3698
    %v3715 = vmax.f32 %v3572, %v3700
    %v3716 = vmax.f32 %v3702, 0.0
    %v3717 = vmax.f32 %v3703, 0.0
    %v3718 = vmax.f32 %v3704, 0.0
    %v3719 = vmax.f32 %v3705, 0.0
    %v3720 = vmax.f32 %v3706, 0.0
    %v3721 = vmax.f32 %v3707, 0.0
    %v3722 = vmax.f32 %v3708, 0.0
    %v3723 = vmax.f32 %v3709, 0.0
    %v3724 = vmax.f32 %v3710, 0.0
    %v3725 = vmax.f32 %v3711, 0.0
    %v3726 = vmax.f32 %v3712, 0.0
    %v3727 = vmax.f32 %v3713, 0.0
    %v3728 = vmax.f32 %v3714, 0.0
    %v3729 = vmax.f32 %v3715, 0.0
    %v3730 = vmul.u32 %v49, 28
    %vm3731 = vcmp.eq.s32.totalorder %v57, %v3730
    %v3732 = vsel %vm3731, 1, 0
    %v3733 = vcvt.s32.f32 %v3732
    %v3735 = vsel %vm86, %v3733, 0
    %3737 = vmatprep.subr.mxu0 %v3717
    %3738 = vmatpush1.msra.mxu0 %v3716
    %3739 = vmatprep.subr.mxu0 %v3719
    %3740 = vmatpush1.msra.mxu0 %v3718
    %3741 = vmatprep.subr.mxu0 %v3721
    %3742 = vmatpush1.msra.mxu0 %v3720
    %3743 = vmatprep.subr.mxu0 %v3723
    %3744 = vmatpush1.msra.mxu0 %v3722
    %3745 = vmatprep.subr.mxu0 %v3725
    %3746 = vmatpush1.msra.mxu0 %v3724
    %3747 = vmatprep.subr.mxu0 %v3727
    %3748 = vmatpush1.msra.mxu0 %v3726
    %3749 = vmatprep.subr.mxu0 %v3729
    %3750 = vmatpush1.msra.mxu0 %v3728
    %3751 = vmatprep.subr.mxu0 0.0
    %3752 = vmatpush1.msra.mxu0 0.0
    %3753 = vmatprep.subr.mxu0 0.0
    %3754 = vmatpush1.msra.mxu0 0.0
    %3755 = vmatprep.subr.mxu0 0.0
    %3756 = vmatpush1.msra.mxu0 0.0
    %3757 = vmatprep.subr.mxu0 0.0
    %3758 = vmatpush1.msra.mxu0 0.0
    %3759 = vmatprep.subr.mxu0 0.0
    %3760 = vmatpush1.msra.mxu0 0.0
    %3761 = vmatprep.subr.mxu0 0.0
    %3762 = vmatpush1.msra.mxu0 0.0
    %3763 = vmatprep.subr.mxu0 0.0
    %3764 = vmatpush1.msra.mxu0 0.0
    %3765 = vmatprep.subr.mxu0 0.0
    %3766 = vmatpush1.msra.mxu0 0.0
    %3767 = vmatprep.subr.mxu0 0.0
    %3768 = vmatpush1.msra.mxu0 0.0
    %3769 = vmatprep.subr.mxu0 0.0
    %3770 = vmatpush1.msra.mxu0 0.0
    %3771 = vmatprep.subr.mxu0 0.0
    %3772 = vmatpush1.msra.mxu0 0.0
    %3773 = vmatprep.subr.mxu0 0.0
    %3774 = vmatpush1.msra.mxu0 0.0
    %3775 = vmatprep.subr.mxu0 0.0
    %3776 = vmatpush1.msra.mxu0 0.0
    %3777 = vmatprep.subr.mxu0 0.0
    %3778 = vmatpush1.msra.mxu0 0.0
    %3779 = vmatprep.subr.mxu0 0.0
    %3780 = vmatpush1.msra.mxu0 0.0
    %3781 = vmatprep.subr.mxu0 0.0
    %3782 = vmatpush1.msra.mxu0 0.0
    %3783 = vmatprep.subr.mxu0 0.0
    %3784 = vmatpush1.msra.mxu0 0.0
    %3785 = vmatprep.subr.mxu0 0.0
    %3786 = vmatpush1.msra.mxu0 0.0
    %3787 = vmatprep.subr.mxu0 0.0
    %3788 = vmatpush1.msra.mxu0 0.0
    %3789 = vmatprep.subr.mxu0 0.0
    %3790 = vmatpush1.msra.mxu0 0.0
    %3791 = vmatprep.subr.mxu0 0.0
    %3792 = vmatpush1.msra.mxu0 0.0
    %3793 = vmatprep.subr.mxu0 0.0
    %3794 = vmatpush1.msra.mxu0 0.0
    %3795 = vmatprep.subr.mxu0 0.0
    %3796 = vmatpush1.msra.mxu0 0.0
    %3797 = vmatprep.subr.mxu0 0.0
    %3798 = vmatpush1.msra.mxu0 0.0
    %3799 = vmatprep.subr.mxu0 0.0
    %3800 = vmatpush1.msra.mxu0 0.0
    %3801 = vmatprep.mubr.f32.mxu0 0.0
    %3802 = vmatmul.mubr.f32.gmra.mrb[0].mxu0 %v3735
    %v3803 = vpop.f32.mrb[0].mxu0
    %v3804 = vadd.f32 0.0, %v3803
    %v3805 = vpop.f32.mrb[0].mxu0
    %v3806 = vadd.f32 0.0, %v3805
    %3807 = vdwg.mxu0
    %v3808 = vld [vmem:[%s5] sm:$0xff]
    %v3809 = vld [vmem:[%s5 + $0x8] sm:$0xff]
    %v3810 = vld [vmem:[%s5 + $0x10] sm:$0xff]
    %v3811 = vld [vmem:[%s5 + $0x18] sm:$0xff]
    %v3812 = vld [vmem:[%s5 + $0x20] sm:$0xff]
    %v3813 = vld [vmem:[%s5 + $0x28] sm:$0xff]
    %v3814 = vld [vmem:[%s5 + $0x30] sm:$0xff]
    %v3815 = vld [vmem:[%s5 + $0x38] sm:$0xff]
    %v3816 = vld [vmem:[%s5 + $0x40] sm:$0xff]
    %v3817 = vld [vmem:[%s5 + $0x48] sm:$0xff]
    %v3818 = vld [vmem:[%s5 + $0x50] sm:$0xff]
    %v3819 = vld [vmem:[%s5 + $0x58] sm:$0xff]
    %v3820 = vld [vmem:[%s5 + $0x60] sm:$0xff]
    %v3821 = vld [vmem:[%s5 + $0x68] sm:$0xff]
    %v3822 = vld [vmem:[%s5 + $0x70] sm:$0xff]
    %v3823 = vld [vmem:[%s5 + $0x78] sm:$0xff]
    %v3824 = vld [vmem:[%s5 + $0x80] sm:$0xff]
    %v3825 = vld [vmem:[%s5 + $0x88] sm:$0xff]
    %v3826 = vld [vmem:[%s5 + $0x90] sm:$0xff]
    %v3827 = vld [vmem:[%s5 + $0x98] sm:$0xff]
    %v3828 = vadd.s32 %v3730, 4
    %vm3829 = vcmp.eq.s32.totalorder %v57, %v3828
    %v3830 = vsel %vm3829, 1, 0
    %v3831 = vcvt.s32.f32 %v3830
    %v3833 = vsel %vm86, %v3831, 0
    %3835 = vmatprep.subr.mxu0 %v3717
    %3836 = vmatpush1.msra.mxu0 %v3716
    %3837 = vmatprep.subr.mxu0 %v3719
    %3838 = vmatpush1.msra.mxu0 %v3718
    %3839 = vmatprep.subr.mxu0 %v3721
    %3840 = vmatpush1.msra.mxu0 %v3720
    %3841 = vmatprep.subr.mxu0 %v3723
    %3842 = vmatpush1.msra.mxu0 %v3722
    %3843 = vmatprep.subr.mxu0 %v3725
    %3844 = vmatpush1.msra.mxu0 %v3724
    %3845 = vmatprep.subr.mxu0 %v3727
    %3846 = vmatpush1.msra.mxu0 %v3726
    %3847 = vmatprep.subr.mxu0 %v3729
    %3848 = vmatpush1.msra.mxu0 %v3728
    %3849 = vmatprep.subr.mxu0 0.0
    %3850 = vmatpush1.msra.mxu0 0.0
    %3851 = vmatprep.subr.mxu0 0.0
    %3852 = vmatpush1.msra.mxu0 0.0
    %3853 = vmatprep.subr.mxu0 0.0
    %3854 = vmatpush1.msra.mxu0 0.0
    %3855 = vmatprep.subr.mxu0 0.0
    %3856 = vmatpush1.msra.mxu0 0.0
    %3857 = vmatprep.subr.mxu0 0.0
    %3858 = vmatpush1.msra.mxu0 0.0
    %3859 = vmatprep.subr.mxu0 0.0
    %3860 = vmatpush1.msra.mxu0 0.0
    %3861 = vmatprep.subr.mxu0 0.0
    %3862 = vmatpush1.msra.mxu0 0.0
    %3863 = vmatprep.subr.mxu0 0.0
    %3864 = vmatpush1.msra.mxu0 0.0
    %3865 = vmatprep.subr.mxu0 0.0
    %3866 = vmatpush1.msra.mxu0 0.0
    %3867 = vmatprep.subr.mxu0 0.0
    %3868 = vmatpush1.msra.mxu0 0.0
    %3869 = vmatprep.subr.mxu0 0.0
    %3870 = vmatpush1.msra.mxu0 0.0
    %3871 = vmatprep.subr.mxu0 0.0
    %3872 = vmatpush1.msra.mxu0 0.0
    %3873 = vmatprep.subr.mxu0 0.0
    %3874 = vmatpush1.msra.mxu0 0.0
    %3875 = vmatprep.subr.mxu0 0.0
    %3876 = vmatpush1.msra.mxu0 0.0
    %3877 = vmatprep.subr.mxu0 0.0
    %3878 = vmatpush1.msra.mxu0 0.0
    %3879 = vmatprep.subr.mxu0 0.0
    %3880 = vmatpush1.msra.mxu0 0.0
    %3881 = vmatprep.subr.mxu0 0.0
    %3882 = vmatpush1.msra.mxu0 0.0
    %3883 = vmatprep.subr.mxu0 0.0
    %3884 = vmatpush1.msra.mxu0 0.0
    %3885 = vmatprep.subr.mxu0 0.0
    %3886 = vmatpush1.msra.mxu0 0.0
    %3887 = vmatprep.subr.mxu0 0.0
    %3888 = vmatpush1.msra.mxu0 0.0
    %3889 = vmatprep.subr.mxu0 0.0
    %3890 = vmatpush1.msra.mxu0 0.0
    %3891 = vmatprep.subr.mxu0 0.0
    %3892 = vmatpush1.msra.mxu0 0.0
    %3893 = vmatprep.subr.mxu0 0.0
    %3894 = vmatpush1.msra.mxu0 0.0
    %3895 = vmatprep.subr.mxu0 0.0
    %3896 = vmatpush1.msra.mxu0 0.0
    %3897 = vmatprep.subr.mxu0 0.0
    %3898 = vmatpush1.msra.mxu0 0.0
    %3899 = vmatprep.mubr.f32.mxu0 0.0
    %3900 = vmatmul.mubr.f32.gmra.mrb[0].mxu0 %v3833
    %v3901 = vpop.f32.mrb[0].mxu0
    %v3902 = vadd.f32 0.0, %v3901
    %v3903 = vpop.f32.mrb[0].mxu0
    %v3904 = vadd.f32 0.0, %v3903
    %3905 = vdwg.mxu0
    %s3906 = scalar_lea.vmem %s5, 160
    %v3907 = vld [vmem:[%s3906] sm:$0xff]
    %v3908 = vld [vmem:[%s3906 + $0x8] sm:$0xff]
    %v3909 = vld [vmem:[%s3906 + $0x10] sm:$0xff]
    %v3910 = vld [vmem:[%s3906 + $0x18] sm:$0xff]
    %v3911 = vld [vmem:[%s3906 + $0x20] sm:$0xff]
    %v3912 = vld [vmem:[%s3906 + $0x28] sm:$0xff]
    %v3913 = vld [vmem:[%s3906 + $0x30] sm:$0xff]
    %v3914 = vld [vmem:[%s3906 + $0x38] sm:$0xff]
    %v3915 = vld [vmem:[%s3906 + $0x40] sm:$0xff]
    %v3916 = vld [vmem:[%s3906 + $0x48] sm:$0xff]
    %v3917 = vld [vmem:[%s3906 + $0x50] sm:$0xff]
    %v3918 = vld [vmem:[%s3906 + $0x58] sm:$0xff]
    %v3919 = vld [vmem:[%s3906 + $0x60] sm:$0xff]
    %v3920 = vld [vmem:[%s3906 + $0x68] sm:$0xff]
    %v3921 = vld [vmem:[%s3906 + $0x70] sm:$0xff]
    %v3922 = vld [vmem:[%s3906 + $0x78] sm:$0xff]
    %v3923 = vld [vmem:[%s3906 + $0x80] sm:$0xff]
    %v3924 = vld [vmem:[%s3906 + $0x88] sm:$0xff]
    %v3925 = vld [vmem:[%s3906 + $0x90] sm:$0xff]
    %v3926 = vld [vmem:[%s3906 + $0x98] sm:$0xff]
    %v3928 = vsel %vm3573, %v3904, 0
    %3930 = vmatprep.subr.mxu0 0.0
    %3931 = vmatpush1.msra.mxu0 %v3907
    %3932 = vmatprep.subr.mxu0 0.0
    %3933 = vmatpush1.msra.mxu0 %v3908
    %3934 = vmatprep.subr.mxu0 0.0
    %3935 = vmatpush1.msra.mxu0 %v3909
    %3936 = vmatprep.subr.mxu0 0.0
    %3937 = vmatpush1.msra.mxu0 %v3910
    %3938 = vmatprep.subr.mxu0 0.0
    %3939 = vmatpush1.msra.mxu0 %v3911
    %3940 = vmatprep.subr.mxu0 0.0
    %3941 = vmatpush1.msra.mxu0 %v3912
    %3942 = vmatprep.subr.mxu0 0.0
    %3943 = vmatpush1.msra.mxu0 %v3913
    %3944 = vmatprep.subr.mxu0 0.0
    %3945 = vmatpush1.msra.mxu0 %v3914
    %3946 = vmatprep.subr.mxu0 0.0
    %3947 = vmatpush1.msra.mxu0 %v3915
    %3948 = vmatprep.subr.mxu0 0.0
    %3949 = vmatpush1.msra.mxu0 %v3916
    %3950 = vmatprep.subr.mxu0 0.0
    %3951 = vmatpush1.msra.mxu0 %v3917
    %3952 = vmatprep.subr.mxu0 0.0
    %3953 = vmatpush1.msra.mxu0 %v3918
    %3954 = vmatprep.subr.mxu0 0.0
    %3955 = vmatpush1.msra.mxu0 %v3919
    %3956 = vmatprep.subr.mxu0 0.0
    %3957 = vmatpush1.msra.mxu0 %v3920
    %3958 = vmatprep.subr.mxu0 0.0
    %3959 = vmatpush1.msra.mxu0 %v3921
    %3960 = vmatprep.subr.mxu0 0.0
    %3961 = vmatpush1.msra.mxu0 %v3922
    %3962 = vmatprep.subr.mxu0 0.0
    %3963 = vmatpush1.msra.mxu0 %v3923
    %3964 = vmatprep.subr.mxu0 0.0
    %3965 = vmatpush1.msra.mxu0 %v3924
    %3966 = vmatprep.subr.mxu0 0.0
    %3967 = vmatpush1.msra.mxu0 %v3925
    %3968 = vmatprep.subr.mxu0 0.0
    %3969 = vmatpush1.msra.mxu0 %v3926
    %3970 = vmatprep.subr.mxu0 0.0
    %3971 = vmatpush1.msra.mxu0 0.0
    %3972 = vmatprep.subr.mxu0 0.0
    %3973 = vmatpush1.msra.mxu0 0.0
    %3974 = vmatprep.subr.mxu0 0.0
    %3975 = vmatpush1.msra.mxu0 0.0
    %3976 = vmatprep.subr.mxu0 0.0
    %3977 = vmatpush1.msra.mxu0 0.0
    %3978 = vmatprep.subr.mxu0 0.0
    %3979 = vmatpush1.msra.mxu0 0.0
    %3980 = vmatprep.subr.mxu0 0.0
    %3981 = vmatpush1.msra.mxu0 0.0
    %3982 = vmatprep.subr.mxu0 0.0
    %3983 = vmatpush1.msra.mxu0 0.0
    %3984 = vmatprep.subr.mxu0 0.0
    %3985 = vmatpush1.msra.mxu0 0.0
    %3986 = vmatprep.subr.mxu0 0.0
    %3987 = vmatpush1.msra.mxu0 0.0
    %3988 = vmatprep.subr.mxu0 0.0
    %3989 = vmatpush1.msra.mxu0 0.0
    %3990 = vmatprep.subr.mxu0 0.0
    %3991 = vmatpush1.msra.mxu0 0.0
    %3992 = vmatprep.subr.mxu0 0.0
    %3993 = vmatpush1.msra.mxu0 0.0
    %3994 = vmatprep.mubr.f32.mxu0 %v3928
    %3995 = vmatmul.mubr.f32.gmra.mrb[0].mxu0 %v3902
    %v3996 = vpop.f32.mrb[0].mxu0
    %v3997 = vadd.f32 0.0, %v3996
    %v3998 = vpop.f32.mrb[0].mxu0
    %3999 = vdwg.mxu0
    %v4001 = vsel %vm3573, %v3806, 0
    %4003 = vmatprep.subr.mxu0 0.0
    %4004 = vmatpush1.msra.mxu0 %v3808
    %4005 = vmatprep.subr.mxu0 0.0
    %4006 = vmatpush1.msra.mxu0 %v3809
    %4007 = vmatprep.subr.mxu0 0.0
    %4008 = vmatpush1.msra.mxu0 %v3810
    %4009 = vmatprep.subr.mxu0 0.0
    %4010 = vmatpush1.msra.mxu0 %v3811
    %4011 = vmatprep.subr.mxu0 0.0
    %4012 = vmatpush1.msra.mxu0 %v3812
    %4013 = vmatprep.subr.mxu0 0.0
    %4014 = vmatpush1.msra.mxu0 %v3813
    %4015 = vmatprep.subr.mxu0 0.0
    %4016 = vmatpush1.msra.mxu0 %v3814
    %4017 = vmatprep.subr.mxu0 0.0
    %4018 = vmatpush1.msra.mxu0 %v3815
    %4019 = vmatprep.subr.mxu0 0.0
    %4020 = vmatpush1.msra.mxu0 %v3816
    %4021 = vmatprep.subr.mxu0 0.0
    %4022 = vmatpush1.msra.mxu0 %v3817
    %4023 = vmatprep.subr.mxu0 0.0
    %4024 = vmatpush1.msra.mxu0 %v3818
    %4025 = vmatprep.subr.mxu0 0.0
    %4026 = vmatpush1.msra.mxu0 %v3819
    %4027 = vmatprep.subr.mxu0 0.0
    %4028 = vmatpush1.msra.mxu0 %v3820
    %4029 = vmatprep.subr.mxu0 0.0
    %4030 = vmatpush1.msra.mxu0 %v3821
    %4031 = vmatprep.subr.mxu0 0.0
    %4032 = vmatpush1.msra.mxu0 %v3822
    %4033 = vmatprep.subr.mxu0 0.0
    %4034 = vmatpush1.msra.mxu0 %v3823
    %4035 = vmatprep.subr.mxu0 0.0
    %4036 = vmatpush1.msra.mxu0 %v3824
    %4037 = vmatprep.subr.mxu0 0.0
    %4038 = vmatpush1.msra.mxu0 %v3825
    %4039 = vmatprep.subr.mxu0 0.0
    %4040 = vmatpush1.msra.mxu0 %v3826
    %4041 = vmatprep.subr.mxu0 0.0
    %4042 = vmatpush1.msra.mxu0 %v3827
    %4043 = vmatprep.subr.mxu0 0.0
    %4044 = vmatpush1.msra.mxu0 0.0
    %4045 = vmatprep.subr.mxu0 0.0
    %4046 = vmatpush1.msra.mxu0 0.0
    %4047 = vmatprep.subr.mxu0 0.0
    %4048 = vmatpush1.msra.mxu0 0.0
    %4049 = vmatprep.subr.mxu0 0.0
    %4050 = vmatpush1.msra.mxu0 0.0
    %4051 = vmatprep.subr.mxu0 0.0
    %4052 = vmatpush1.msra.mxu0 0.0
    %4053 = vmatprep.subr.mxu0 0.0
    %4054 = vmatpush1.msra.mxu0 0.0
    %4055 = vmatprep.subr.mxu0 0.0
    %4056 = vmatpush1.msra.mxu0 0.0
    %4057 = vmatprep.subr.mxu0 0.0
    %4058 = vmatpush1.msra.mxu0 0.0
    %4059 = vmatprep.subr.mxu0 0.0
    %4060 = vmatpush1.msra.mxu0 0.0
    %4061 = vmatprep.subr.mxu0 0.0
    %4062 = vmatpush1.msra.mxu0 0.0
    %4063 = vmatprep.subr.mxu0 0.0
    %4064 = vmatpush1.msra.mxu0 0.0
    %4065 = vmatprep.subr.mxu0 0.0
    %4066 = vmatpush1.msra.mxu0 0.0
    %4067 = vmatprep.mubr.f32.mxu0 %v4001
    %4068 = vmatmul.mubr.f32.gmra.mrb[0].mxu0 %v3804
    %v4069 = vpop.f32.mrb[0].mxu0
    %v4070 = vadd.f32 %v3997, %v4069
    %v4071 = vpop.f32.mrb[0].mxu0
    %4072 = vdwg.mxu0
    %v4073 = vadd.s32 %v3730, 8
    %vm4074 = vcmp.eq.s32.totalorder %v57, %v4073
    %v4075 = vsel %vm4074, 1, 0
    %v4076 = vcvt.s32.f32 %v4075
    %v4078 = vsel %vm86, %v4076, 0
    %4080 = vmatprep.subr.mxu0 %v3717
    %4081 = vmatpush1.msra.mxu0 %v3716
    %4082 = vmatprep.subr.mxu0 %v3719
    %4083 = vmatpush1.msra.mxu0 %v3718
    %4084 = vmatprep.subr.mxu0 %v3721
    %4085 = vmatpush1.msra.mxu0 %v3720
    %4086 = vmatprep.subr.mxu0 %v3723
    %4087 = vmatpush1.msra.mxu0 %v3722
    %4088 = vmatprep.subr.mxu0 %v3725
    %4089 = vmatpush1.msra.mxu0 %v3724
    %4090 = vmatprep.subr.mxu0 %v3727
    %4091 = vmatpush1.msra.mxu0 %v3726
    %4092 = vmatprep.subr.mxu0 %v3729
    %4093 = vmatpush1.msra.mxu0 %v3728
    %4094 = vmatprep.subr.mxu0 0.0
    %4095 = vmatpush1.msra.mxu0 0.0
    %4096 = vmatprep.subr.mxu0 0.0
    %4097 = vmatpush1.msra.mxu0 0.0
    %4098 = vmatprep.subr.mxu0 0.0
    %4099 = vmatpush1.msra.mxu0 0.0
    %4100 = vmatprep.subr.mxu0 0.0
    %4101 = vmatpush1.msra.mxu0 0.0
    %4102 = vmatprep.subr.mxu0 0.0
    %4103 = vmatpush1.msra.mxu0 0.0
    %4104 = vmatprep.subr.mxu0 0.0
    %4105 = vmatpush1.msra.mxu0 0.0
    %4106 = vmatprep.subr.mxu0 0.0
    %4107 = vmatpush1.msra.mxu0 0.0
    %4108 = vmatprep.subr.mxu0 0.0
    %4109 = vmatpush1.msra.mxu0 0.0
    %4110 = vmatprep.subr.mxu0 0.0
    %4111 = vmatpush1.msra.mxu0 0.0
    %4112 = vmatprep.subr.mxu0 0.0
    %4113 = vmatpush1.msra.mxu0 0.0
    %4114 = vmatprep.subr.mxu0 0.0
    %4115 = vmatpush1.msra.mxu0 0.0
    %4116 = vmatprep.subr.mxu0 0.0
    %4117 = vmatpush1.msra.mxu0 0.0
    %4118 = vmatprep.subr.mxu0 0.0
    %4119 = vmatpush1.msra.mxu0 0.0
    %4120 = vmatprep.subr.mxu0 0.0
    %4121 = vmatpush1.msra.mxu0 0.0
    %4122 = vmatprep.subr.mxu0 0.0
    %4123 = vmatpush1.msra.mxu0 0.0
    %4124 = vmatprep.subr.mxu0 0.0
    %4125 = vmatpush1.msra.mxu0 0.0
    %4126 = vmatprep.subr.mxu0 0.0
    %4127 = vmatpush1.msra.mxu0 0.0
    %4128 = vmatprep.subr.mxu0 0.0
    %4129 = vmatpush1.msra.mxu0 0.0
    %4130 = vmatprep.subr.mxu0 0.0
    %4131 = vmatpush1.msra.mxu0 0.0
    %4132 = vmatprep.subr.mxu0 0.0
    %4133 = vmatpush1.msra.mxu0 0.0
    %4134 = vmatprep.subr.mxu0 0.0
    %4135 = vmatpush1.msra.mxu0 0.0
    %4136 = vmatprep.subr.mxu0 0.0
    %4137 = vmatpush1.msra.mxu0 0.0
    %4138 = vmatprep.subr.mxu0 0.0
    %4139 = vmatpush1.msra.mxu0 0.0
    %4140 = vmatprep.subr.mxu0 0.0
    %4141 = vmatpush1.msra.mxu0 0.0
    %4142 = vmatprep.subr.mxu0 0.0
    %4143 = vmatpush1.msra.mxu0 0.0
    %4144 = vmatprep.mubr.f32.mxu0 0.0
    %4145 = vmatmul.mubr.f32.gmra.mrb[0].mxu0 %v4078
    %v4146 = vpop.f32.mrb[0].mxu0
    %v4147 = vadd.f32 0.0, %v4146
    %v4148 = vpop.f32.mrb[0].mxu0
    %v4149 = vadd.f32 0.0, %v4148
    %4150 = vdwg.mxu0
    %s4151 = scalar_lea.vmem %s5, 320
    %v4152 = vld [vmem:[%s4151] sm:$0xff]
    %v4153 = vld [vmem:[%s4151 + $0x8] sm:$0xff]
    %v4154 = vld [vmem:[%s4151 + $0x10] sm:$0xff]
    %v4155 = vld [vmem:[%s4151 + $0x18] sm:$0xff]
    %v4156 = vld [vmem:[%s4151 + $0x20] sm:$0xff]
    %v4157 = vld [vmem:[%s4151 + $0x28] sm:$0xff]
    %v4158 = vld [vmem:[%s4151 + $0x30] sm:$0xff]
    %v4159 = vld [vmem:[%s4151 + $0x38] sm:$0xff]
    %v4160 = vld [vmem:[%s4151 + $0x40] sm:$0xff]
    %v4161 = vld [vmem:[%s4151 + $0x48] sm:$0xff]
    %v4162 = vld [vmem:[%s4151 + $0x50] sm:$0xff]
    %v4163 = vld [vmem:[%s4151 + $0x58] sm:$0xff]
    %v4164 = vld [vmem:[%s4151 + $0x60] sm:$0xff]
    %v4165 = vld [vmem:[%s4151 + $0x68] sm:$0xff]
    %v4166 = vld [vmem:[%s4151 + $0x70] sm:$0xff]
    %v4167 = vld [vmem:[%s4151 + $0x78] sm:$0xff]
    %v4168 = vld [vmem:[%s4151 + $0x80] sm:$0xff]
    %v4169 = vld [vmem:[%s4151 + $0x88] sm:$0xff]
    %v4170 = vld [vmem:[%s4151 + $0x90] sm:$0xff]
    %v4171 = vld [vmem:[%s4151 + $0x98] sm:$0xff]
    %v4173 = vsel %vm3573, %v4149, 0
    %4175 = vmatprep.subr.mxu0 0.0
    %4176 = vmatpush1.msra.mxu0 %v4152
    %4177 = vmatprep.subr.mxu0 0.0
    %4178 = vmatpush1.msra.mxu0 %v4153
    %4179 = vmatprep.subr.mxu0 0.0
    %4180 = vmatpush1.msra.mxu0 %v4154
    %4181 = vmatprep.subr.mxu0 0.0
    %4182 = vmatpush1.msra.mxu0 %v4155
    %4183 = vmatprep.subr.mxu0 0.0
    %4184 = vmatpush1.msra.mxu0 %v4156
    %4185 = vmatprep.subr.mxu0 0.0
    %4186 = vmatpush1.msra.mxu0 %v4157
    %4187 = vmatprep.subr.mxu0 0.0
    %4188 = vmatpush1.msra.mxu0 %v4158
    %4189 = vmatprep.subr.mxu0 0.0
    %4190 = vmatpush1.msra.mxu0 %v4159
    %4191 = vmatprep.subr.mxu0 0.0
    %4192 = vmatpush1.msra.mxu0 %v4160
    %4193 = vmatprep.subr.mxu0 0.0
    %4194 = vmatpush1.msra.mxu0 %v4161
    %4195 = vmatprep.subr.mxu0 0.0
    %4196 = vmatpush1.msra.mxu0 %v4162
    %4197 = vmatprep.subr.mxu0 0.0
    %4198 = vmatpush1.msra.mxu0 %v4163
    %4199 = vmatprep.subr.mxu0 0.0
    %4200 = vmatpush1.msra.mxu0 %v4164
    %4201 = vmatprep.subr.mxu0 0.0
    %4202 = vmatpush1.msra.mxu0 %v4165
    %4203 = vmatprep.subr.mxu0 0.0
    %4204 = vmatpush1.msra.mxu0 %v4166
    %4205 = vmatprep.subr.mxu0 0.0
    %4206 = vmatpush1.msra.mxu0 %v4167
    %4207 = vmatprep.subr.mxu0 0.0
    %4208 = vmatpush1.msra.mxu0 %v4168
    %4209 = vmatprep.subr.mxu0 0.0
    %4210 = vmatpush1.msra.mxu0 %v4169
    %4211 = vmatprep.subr.mxu0 0.0
    %4212 = vmatpush1.msra.mxu0 %v4170
    %4213 = vmatprep.subr.mxu0 0.0
    %4214 = vmatpush1.msra.mxu0 %v4171
    %4215 = vmatprep.subr.mxu0 0.0
    %4216 = vmatpush1.msra.mxu0 0.0
    %4217 = vmatprep.subr.mxu0 0.0
    %4218 = vmatpush1.msra.mxu0 0.0
    %4219 = vmatprep.subr.mxu0 0.0
    %4220 = vmatpush1.msra.mxu0 0.0
    %4221 = vmatprep.subr.mxu0 0.0
    %4222 = vmatpush1.msra.mxu0 0.0
    %4223 = vmatprep.subr.mxu0 0.0
    %4224 = vmatpush1.msra.mxu0 0.0
    %4225 = vmatprep.subr.mxu0 0.0
    %4226 = vmatpush1.msra.mxu0 0.0
    %4227 = vmatprep.subr.mxu0 0.0
    %4228 = vmatpush1.msra.mxu0 0.0
    %4229 = vmatprep.subr.mxu0 0.0
    %4230 = vmatpush1.msra.mxu0 0.0
    %4231 = vmatprep.subr.mxu0 0.0
    %4232 = vmatpush1.msra.mxu0 0.0
    %4233 = vmatprep.subr.mxu0 0.0
    %4234 = vmatpush1.msra.mxu0 0.0
    %4235 = vmatprep.subr.mxu0 0.0
    %4236 = vmatpush1.msra.mxu0 0.0
    %4237 = vmatprep.subr.mxu0 0.0
    %4238 = vmatpush1.msra.mxu0 0.0
    %4239 = vmatprep.mubr.f32.mxu0 %v4173
    %4240 = vmatmul.mubr.f32.gmra.mrb[0].mxu0 %v4147
    %v4241 = vpop.f32.mrb[0].mxu0
    %v4242 = vadd.f32 0.0, %v4241
    %v4243 = vpop.f32.mrb[0].mxu0
    %4244 = vdwg.mxu0
    %v4245 = vadd.f32 %v4070, %v4242
    %v4246 = vadd.s32 %v3730, 12
    %vm4247 = vcmp.eq.s32.totalorder %v57, %v4246
    %v4248 = vsel %vm4247, 1, 0
    %v4249 = vcvt.s32.f32 %v4248
    %v4251 = vsel %vm86, %v4249, 0
    %4253 = vmatprep.subr.mxu0 %v3717
    %4254 = vmatpush1.msra.mxu0 %v3716
    %4255 = vmatprep.subr.mxu0 %v3719
    %4256 = vmatpush1.msra.mxu0 %v3718
    %4257 = vmatprep.subr.mxu0 %v3721
    %4258 = vmatpush1.msra.mxu0 %v3720
    %4259 = vmatprep.subr.mxu0 %v3723
    %4260 = vmatpush1.msra.mxu0 %v3722
    %4261 = vmatprep.subr.mxu0 %v3725
    %4262 = vmatpush1.msra.mxu0 %v3724
    %4263 = vmatprep.subr.mxu0 %v3727
    %4264 = vmatpush1.msra.mxu0 %v3726
    %4265 = vmatprep.subr.mxu0 %v3729
    %4266 = vmatpush1.msra.mxu0 %v3728
    %4267 = vmatprep.subr.mxu0 0.0
    %4268 = vmatpush1.msra.mxu0 0.0
    %4269 = vmatprep.subr.mxu0 0.0
    %4270 = vmatpush1.msra.mxu0 0.0
    %4271 = vmatprep.subr.mxu0 0.0
    %4272 = vmatpush1.msra.mxu0 0.0
    %4273 = vmatprep.subr.mxu0 0.0
    %4274 = vmatpush1.msra.mxu0 0.0
    %4275 = vmatprep.subr.mxu0 0.0
    %4276 = vmatpush1.msra.mxu0 0.0
    %4277 = vmatprep.subr.mxu0 0.0
    %4278 = vmatpush1.msra.mxu0 0.0
    %4279 = vmatprep.subr.mxu0 0.0
    %4280 = vmatpush1.msra.mxu0 0.0
    %4281 = vmatprep.subr.mxu0 0.0
    %4282 = vmatpush1.msra.mxu0 0.0
    %4283 = vmatprep.subr.mxu0 0.0
    %4284 = vmatpush1.msra.mxu0 0.0
    %4285 = vmatprep.subr.mxu0 0.0
    %4286 = vmatpush1.msra.mxu0 0.0
    %4287 = vmatprep.subr.mxu0 0.0
    %4288 = vmatpush1.msra.mxu0 0.0
    %4289 = vmatprep.subr.mxu0 0.0
    %4290 = vmatpush1.msra.mxu0 0.0
    %4291 = vmatprep.subr.mxu0 0.0
    %4292 = vmatpush1.msra.mxu0 0.0
    %4293 = vmatprep.subr.mxu0 0.0
    %4294 = vmatpush1.msra.mxu0 0.0
    %4295 = vmatprep.subr.mxu0 0.0
    %4296 = vmatpush1.msra.mxu0 0.0
    %4297 = vmatprep.subr.mxu0 0.0
    %4298 = vmatpush1.msra.mxu0 0.0
    %4299 = vmatprep.subr.mxu0 0.0
    %4300 = vmatpush1.msra.mxu0 0.0
    %4301 = vmatprep.subr.mxu0 0.0
    %4302 = vmatpush1.msra.mxu0 0.0
    %4303 = vmatprep.subr.mxu0 0.0
    %4304 = vmatpush1.msra.mxu0 0.0
    %4305 = vmatprep.subr.mxu0 0.0
    %4306 = vmatpush1.msra.mxu0 0.0
    %4307 = vmatprep.subr.mxu0 0.0
    %4308 = vmatpush1.msra.mxu0 0.0
    %4309 = vmatprep.subr.mxu0 0.0
    %4310 = vmatpush1.msra.mxu0 0.0
    %4311 = vmatprep.subr.mxu0 0.0
    %4312 = vmatpush1.msra.mxu0 0.0
    %4313 = vmatprep.subr.mxu0 0.0
    %4314 = vmatpush1.msra.mxu0 0.0
    %4315 = vmatprep.subr.mxu0 0.0
    %4316 = vmatpush1.msra.mxu0 0.0
    %4317 = vmatprep.mubr.f32.mxu0 0.0
    %4318 = vmatmul.mubr.f32.gmra.mrb[0].mxu0 %v4251
    %v4319 = vpop.f32.mrb[0].mxu0
    %v4320 = vadd.f32 0.0, %v4319
    %v4321 = vpop.f32.mrb[0].mxu0
    %v4322 = vadd.f32 0.0, %v4321
    %4323 = vdwg.mxu0
    %s4324 = scalar_lea.vmem %s5, 480
    %v4325 = vld [vmem:[%s4324] sm:$0xff]
    %v4326 = vld [vmem:[%s4324 + $0x8] sm:$0xff]
    %v4327 = vld [vmem:[%s4324 + $0x10] sm:$0xff]
    %v4328 = vld [vmem:[%s4324 + $0x18] sm:$0xff]
    %v4329 = vld [vmem:[%s4324 + $0x20] sm:$0xff]
    %v4330 = vld [vmem:[%s4324 + $0x28] sm:$0xff]
    %v4331 = vld [vmem:[%s4324 + $0x30] sm:$0xff]
    %v4332 = vld [vmem:[%s4324 + $0x38] sm:$0xff]
    %v4333 = vld [vmem:[%s4324 + $0x40] sm:$0xff]
    %v4334 = vld [vmem:[%s4324 + $0x48] sm:$0xff]
    %v4335 = vld [vmem:[%s4324 + $0x50] sm:$0xff]
    %v4336 = vld [vmem:[%s4324 + $0x58] sm:$0xff]
    %v4337 = vld [vmem:[%s4324 + $0x60] sm:$0xff]
    %v4338 = vld [vmem:[%s4324 + $0x68] sm:$0xff]
    %v4339 = vld [vmem:[%s4324 + $0x70] sm:$0xff]
    %v4340 = vld [vmem:[%s4324 + $0x78] sm:$0xff]
    %v4341 = vld [vmem:[%s4324 + $0x80] sm:$0xff]
    %v4342 = vld [vmem:[%s4324 + $0x88] sm:$0xff]
    %v4343 = vld [vmem:[%s4324 + $0x90] sm:$0xff]
    %v4344 = vld [vmem:[%s4324 + $0x98] sm:$0xff]
    %v4346 = vsel %vm3573, %v4322, 0
    %4348 = vmatprep.subr.mxu0 0.0
    %4349 = vmatpush1.msra.mxu0 %v4325
    %4350 = vmatprep.subr.mxu0 0.0
    %4351 = vmatpush1.msra.mxu0 %v4326
    %4352 = vmatprep.subr.mxu0 0.0
    %4353 = vmatpush1.msra.mxu0 %v4327
    %4354 = vmatprep.subr.mxu0 0.0
    %4355 = vmatpush1.msra.mxu0 %v4328
    %4356 = vmatprep.subr.mxu0 0.0
    %4357 = vmatpush1.msra.mxu0 %v4329
    %4358 = vmatprep.subr.mxu0 0.0
    %4359 = vmatpush1.msra.mxu0 %v4330
    %4360 = vmatprep.subr.mxu0 0.0
    %4361 = vmatpush1.msra.mxu0 %v4331
    %4362 = vmatprep.subr.mxu0 0.0
    %4363 = vmatpush1.msra.mxu0 %v4332
    %4364 = vmatprep.subr.mxu0 0.0
    %4365 = vmatpush1.msra.mxu0 %v4333
    %4366 = vmatprep.subr.mxu0 0.0
    %4367 = vmatpush1.msra.mxu0 %v4334
    %4368 = vmatprep.subr.mxu0 0.0
    %4369 = vmatpush1.msra.mxu0 %v4335
    %4370 = vmatprep.subr.mxu0 0.0
    %4371 = vmatpush1.msra.mxu0 %v4336
    %4372 = vmatprep.subr.mxu0 0.0
    %4373 = vmatpush1.msra.mxu0 %v4337
    %4374 = vmatprep.subr.mxu0 0.0
    %4375 = vmatpush1.msra.mxu0 %v4338
    %4376 = vmatprep.subr.mxu0 0.0
    %4377 = vmatpush1.msra.mxu0 %v4339
    %4378 = vmatprep.subr.mxu0 0.0
    %4379 = vmatpush1.msra.mxu0 %v4340
    %4380 = vmatprep.subr.mxu0 0.0
    %4381 = vmatpush1.msra.mxu0 %v4341
    %4382 = vmatprep.subr.mxu0 0.0
    %4383 = vmatpush1.msra.mxu0 %v4342
    %4384 = vmatprep.subr.mxu0 0.0
    %4385 = vmatpush1.msra.mxu0 %v4343
    %4386 = vmatprep.subr.mxu0 0.0
    %4387 = vmatpush1.msra.mxu0 %v4344
    %4388 = vmatprep.subr.mxu0 0.0
    %4389 = vmatpush1.msra.mxu0 0.0
    %4390 = vmatprep.subr.mxu0 0.0
    %4391 = vmatpush1.msra.mxu0 0.0
    %4392 = vmatprep.subr.mxu0 0.0
    %4393 = vmatpush1.msra.mxu0 0.0
    %4394 = vmatprep.subr.mxu0 0.0
    %4395 = vmatpush1.msra.mxu0 0.0
    %4396 = vmatprep.subr.mxu0 0.0
    %4397 = vmatpush1.msra.mxu0 0.0
    %4398 = vmatprep.subr.mxu0 0.0
    %4399 = vmatpush1.msra.mxu0 0.0
    %4400 = vmatprep.subr.mxu0 0.0
    %4401 = vmatpush1.msra.mxu0 0.0
    %4402 = vmatprep.subr.mxu0 0.0
    %4403 = vmatpush1.msra.mxu0 0.0
    %4404 = vmatprep.subr.mxu0 0.0
    %4405 = vmatpush1.msra.mxu0 0.0
    %4406 = vmatprep.subr.mxu0 0.0
    %4407 = vmatpush1.msra.mxu0 0.0
    %4408 = vmatprep.subr.mxu0 0.0
    %4409 = vmatpush1.msra.mxu0 0.0
    %4410 = vmatprep.subr.mxu0 0.0
    %4411 = vmatpush1.msra.mxu0 0.0
    %4412 = vmatprep.mubr.f32.mxu0 %v4346
    %4413 = vmatmul.mubr.f32.gmra.mrb[0].mxu0 %v4320
    %v4414 = vpop.f32.mrb[0].mxu0
    %v4415 = vadd.f32 0.0, %v4414
    %v4416 = vpop.f32.mrb[0].mxu0
    %4417 = vdwg.mxu0
    %v4418 = vadd.f32 %v4245, %v4415
    %v4419 = vld [vmem:[%s6] sm:$0x1]
    %v4421 = vlaneseq
    %v4422 = vshrl.u32 %v4421, 7
    %v4423 = vsub.s32 0, %v4422
    %v4424 = vrot.slane %v4419, %v4423
    %v4426 = vadd.f32 %v4418, %v4424
    %v4427 = vmax.f32 %v4426, 0.0
    %v4428 = vld [vmem:[%s7] sm:$0xff]
    %v4429 = vld [vmem:[%s7 + $0x8] sm:$0xff]
    %v4430 = vld [vmem:[%s7 + $0x10] sm:$0xff]
    %v4431 = vld [vmem:[%s7 + $0x18] sm:$0xff]
    %v4432 = vld [vmem:[%s7 + $0x20] sm:$0xff]
    %v4433 = vld [vmem:[%s7 + $0x28] sm:$0xff]
    %v4434 = vld [vmem:[%s7 + $0x30] sm:$0x3]
    %v4435 = vld [vmem:[%s8] sm:$0x1]
    %v4437 = vlaneseq
    %v4438 = vshrl.u32 %v4437, 7
    %v4439 = vsub.s32 0, %v4438
    %v4440 = vrot.slane %v4435, %v4439
    %vm4442 = vcmask 408576
    %v4444 = vsel %vm4442, %v4427, 0
    %vm4446 = vcmask 1041408
    %v4448 = vsel %vm4446, %v4434, 0
    %4450 = vmatprep.subr.mxu0 0.0
    %4451 = vmatpush1.msra.mxu0 %v4428
    %4452 = vmatprep.subr.mxu0 0.0
    %4453 = vmatpush1.msra.mxu0 %v4429
    %4454 = vmatprep.subr.mxu0 0.0
    %4455 = vmatpush1.msra.mxu0 %v4430
    %4456 = vmatprep.subr.mxu0 0.0
    %4457 = vmatpush1.msra.mxu0 %v4431
    %4458 = vmatprep.subr.mxu0 0.0
    %4459 = vmatpush1.msra.mxu0 %v4432
    %4460 = vmatprep.subr.mxu0 0.0
    %4461 = vmatpush1.msra.mxu0 %v4433
    %4462 = vmatprep.subr.mxu0 0.0
    %4463 = vmatpush1.msra.mxu0 %v4448
    %4464 = vmatprep.subr.mxu0 0.0
    %4465 = vmatpush1.msra.mxu0 0.0
    %4466 = vmatprep.subr.mxu0 0.0
    %4467 = vmatpush1.msra.mxu0 0.0
    %4468 = vmatprep.subr.mxu0 0.0
    %4469 = vmatpush1.msra.mxu0 0.0
    %4470 = vmatprep.subr.mxu0 0.0
    %4471 = vmatpush1.msra.mxu0 0.0
    %4472 = vmatprep.subr.mxu0 0.0
    %4473 = vmatpush1.msra.mxu0 0.0
    %4474 = vmatprep.subr.mxu0 0.0
    %4475 = vmatpush1.msra.mxu0 0.0
    %4476 = vmatprep.subr.mxu0 0.0
    %4477 = vmatpush1.msra.mxu0 0.0
    %4478 = vmatprep.subr.mxu0 0.0
    %4479 = vmatpush1.msra.mxu0 0.0
    %4480 = vmatprep.subr.mxu0 0.0
    %4481 = vmatpush1.msra.mxu0 0.0
    %4482 = vmatprep.subr.mxu0 0.0
    %4483 = vmatpush1.msra.mxu0 0.0
    %4484 = vmatprep.subr.mxu0 0.0
    %4485 = vmatpush1.msra.mxu0 0.0
    %4486 = vmatprep.subr.mxu0 0.0
    %4487 = vmatpush1.msra.mxu0 0.0
    %4488 = vmatprep.subr.mxu0 0.0
    %4489 = vmatpush1.msra.mxu0 0.0
    %4490 = vmatprep.subr.mxu0 0.0
    %4491 = vmatpush1.msra.mxu0 0.0
    %4492 = vmatprep.subr.mxu0 0.0
    %4493 = vmatpush1.msra.mxu0 0.0
    %4494 = vmatprep.subr.mxu0 0.0
    %4495 = vmatpush1.msra.mxu0 0.0
    %4496 = vmatprep.subr.mxu0 0.0
    %4497 = vmatpush1.msra.mxu0 0.0
    %4498 = vmatprep.subr.mxu0 0.0
    %4499 = vmatpush1.msra.mxu0 0.0
    %4500 = vmatprep.subr.mxu0 0.0
    %4501 = vmatpush1.msra.mxu0 0.0
    %4502 = vmatprep.subr.mxu0 0.0
    %4503 = vmatpush1.msra.mxu0 0.0
    %4504 = vmatprep.subr.mxu0 0.0
    %4505 = vmatpush1.msra.mxu0 0.0
    %4506 = vmatprep.subr.mxu0 0.0
    %4507 = vmatpush1.msra.mxu0 0.0
    %4508 = vmatprep.subr.mxu0 0.0
    %4509 = vmatpush1.msra.mxu0 0.0
    %4510 = vmatprep.subr.mxu0 0.0
    %4511 = vmatpush1.msra.mxu0 0.0
    %4512 = vmatprep.subr.mxu0 0.0
    %4513 = vmatpush1.msra.mxu0 0.0
    %4514 = vmatprep.mubr.f32.mxu0 0.0
    %4515 = vmatmul.mubr.f32.gmra.mrb[0].mxu0 %v4444
    %v4516 = vpop.f32.mrb[0].mxu0
    %v4517 = vadd.f32 %v4440, %v4516
    %v4518 = vpop.f32.mrb[0].mxu0
    %4519 = vdwg.mxu0
    %v4520 = vmax.f32 %v4517, 0.0
    %vm4521 = vcmask 74752
    %v4522 = vsel %vm4521, %v4520, -inf
    %4523 = vmax.xlane.f32.xlu0 %v4522
    %v4524 = vpop.xlane.xlu0 %4523
    %v4525 = vsub.f32 %v4520, %v4524
    %v4526 = vmul.f32 %v4525, 1.442695
    %v4527 = vpow.pop %v4526
    %v4528 = vsel %vm4521, %v4527, 0.0
    %4529 = vadd.xlane.f32.xlu0 %v4528
    %v4530 = vpop.xlane.xlu0 %4529
    %v4531 = vlog2.pop %v4530
    %v4532 = vmul.f32 %v4531, 0.6931472
    %v4533 = vsub.f32 %v4525, %v4532
    %4534 = vst.msk [vmem:[#allocation2] sm:$0x3] %vm4521, %v4533
    // Predicated region
    $region38: #{vanilla_forward.1} parent=1 // pred_check
      _
    $region39: #{vanilla_forward.1} parent=1 // pred_check_branch
      %4536 = sbr.rel (0) target = $region41
    $region40: #{vanilla_forward.1} parent=1 // pred_region
      %s4538 = ssub.s32 32, 32
      %4539 = vsyncadd [#allocation3], %s4538
      %s4541 = sshll.u32 [#allocation2], 4
      %s4542 = int_to_ptr.vmem [resolvable:$true] %s4541
      %4544 = dma.vmem_to_hbm [thread:$0]  %s4542, 32, %s9, [#allocation3]
    $region41: #{vanilla_forward.1} parent=1 // pred_fallthru
      _
    // Predicated region
    $region42: #{vanilla_forward.1} parent=1 // pred_check
      _
    $region43: #{vanilla_forward.1} parent=1 // pred_check_branch
      %4546 = sbr.rel (0) target = $region45
    $region44: #{vanilla_forward.1} parent=1 // pred_region
      %4547 = dma.done [#allocation3], 32
    $region45: #{vanilla_forward.1} parent=1 // pred_fallthru
      _
    %4548 = vsyncpa [#allocation3], 1

</llo_original>
